<compile_context>
chip_gen: v6e
topology: v6e:2x2x1
jax: 0.10.0
libtpu: 0.0.40
codegen_flags: <defaults>
</compile_context>

<pallas_src>
import functools
import jax
import jax.numpy as jnp
from jax.experimental import pallas as pl
from jax.experimental.pallas import tpu as pltpu

LN_EPS = 1e-5          # nn.LayerNorm default
_SINCOS_ANCHOR = 4     # exact sin/cos every 4th scale; rest via double-angle


def _layernorm(v, gamma, beta):
    mu = jnp.mean(v, axis=-1, keepdims=True)
    var = jnp.mean((v - mu) ** 2, axis=-1, keepdims=True)
    return (v - mu) * jax.lax.rsqrt(var + LN_EPS) * gamma + beta


def _fourier_sin_cos(d, e):
    """sin(d/2^k), cos(d/2^k) for k = 0..e-1 with ~4x fewer transcendentals.

    Exact sin/cos only at anchor scales (finest first); intermediate scales come
    from the double-angle identities.  <=3 doublings from an exact anchor keeps
    the extra error ~1e-6, well inside the 1e-4 validation tolerance.
    """
    sin_l = [None] * e
    cos_l = [None] * e
    k = e - 1
    while k >= 0:
        xk = d * (0.5 ** k)                  # exact: multiply by power of two
        s, c = jnp.sin(xk), jnp.cos(xk)
        sin_l[k], cos_l[k] = s, c
        for _ in range(min(_SINCOS_ANCHOR - 1, k)):
            k -= 1
            s, c = 2.0 * s * c, 1.0 - 2.0 * s * s   # uses old (s, c): double angle
            sin_l[k], cos_l[k] = s, c
        k -= 1
    return sin_l, cos_l


# ---------------------------------------------------------------------------
# Pallas kernels
# ---------------------------------------------------------------------------
def _pair_features(cbr_ref, cba_ref, w_ref, e):
    """Lane-dense distance map + fourier encoding + fused Linear (bias folded
    into w) for one (TI, TJ) tile of the pair tensor.  Returns (TI, TJ, Z)."""
    cbr = cbr_ref[...]                                  # (TI, 3)
    cba = cba_ref[...]                                  # (3, TJ) transposed cols
    ti, tj = cbr.shape[0], cba.shape[1]

    # squared distance, accumulated lane-dense over the 3 coordinates (VPU only)
    d2 = jnp.zeros((ti, tj), jnp.float32)
    for k in range(3):                                  # unrolled at trace time
        diff = cbr[:, k:k + 1] - cba[k:k + 1, :]        # (TI,1)-(1,TJ) -> (TI,TJ)
        d2 = d2 + diff * diff
    d = jnp.sqrt(d2)

    sin_l, cos_l = _fourier_sin_cos(d, e)
    # torch feature order: [sin_0..sin_{e-1}, cos_0..cos_{e-1}, d] + ones (bias)
    planes = sin_l + cos_l + [d, jnp.ones_like(d)]
    f = len(planes)                                     # 2e + 2
    feats = jnp.stack(planes, axis=0)                   # (F, TI, TJ)
    # TODO(synk): stack+reshape may relayout (F,TI,TJ)->(F,TI*TJ) in VMEM; the
    # z HBM stream dominates, so accepted here.  Revisit with pl.lower_as_mlir.
    feats2d = feats.reshape(f, ti * tj)
    lin = jax.lax.dot_general(                          # one fused MXU matmul
        feats2d, w_ref[...],
        dimension_numbers=(((0,), (0,)), ((), ())),
        preferred_element_type=jnp.float32)             # (TI*TJ, Z)
    zdim = w_ref.shape[1]
    return lin.reshape(ti, tj, zdim)                    # layout-compatible reshape


def _pair_first_kernel(cbr_ref, cba_ref, w_ref, o_ref, *, e):
    o_ref[...] = _pair_features(cbr_ref, cba_ref, w_ref, e)


def _pair_recycle_kernel(cbr_ref, cba_ref, z_ref, w_ref, gz_ref, bz_ref,
                         o_ref, *, e):
    lin = _pair_features(cbr_ref, cba_ref, w_ref, e)
    zn = _layernorm(z_ref[...], gz_ref[...][None], bz_ref[...][None])
    o_ref[...] = zn + lin


def _m_norm_kernel(m_ref, gm_ref, bm_ref, o_ref):
    o_ref[...] = _layernorm(m_ref[...], gm_ref[...], bm_ref[...])


# ---------------------------------------------------------------------------
# Wrapper
# ---------------------------------------------------------------------------
def _vmem_capacity_bytes():
    try:
        return int(pltpu.get_tpu_info().vmem_capacity_bytes)
    except Exception:
        return 64 << 20            # conservative fallback: assume v7x (64 MiB/TC)


def recycling_embedder(m, z, x, first, params):
    """`first` must be a static Python bool (selects one of two pallas_calls)."""
    cb = x[:, -1].astype(jnp.float32)                  # (N, 3)
    n = cb.shape[0]
    e = int(params["dis_encoding_dim"])
    w = params["w"].astype(jnp.float32)                # (2e+1, Z)
    zdim = w.shape[1]
    b = params["b"].reshape(1, zdim).astype(jnp.float32)
    w_aug = jnp.concatenate([w, b], axis=0)            # bias folded: (2e+2, Z)
    f_in = 2 * e + 2

    # --- generation-aware tile selection & VMEM budget ----------------------
    vmem_cap = _vmem_capacity_bytes()
    big_vmem = vmem_cap >= (120 << 20)                 # v5e / v6e: 128 MiB VMEM
    budget = (100 << 20) if big_vmem else max(vmem_cap - (16 << 20), 24 << 20)
    ti_t = 256 if big_vmem else 128
    tj_t = 256 if big_vmem else 128

    ti = n if n <= ti_t else ti_t
    tj = n if n <= tj_t else tj_t                      # multiple of 128 when tiled

    def est(ti_, tj_):
        zblk = ti_ * tj_ * zdim * 4                    # one z tile (in or out)
        z_streams = 2 if first else 4                  # (in +) out, double-buffered
        feat = (f_in + 6) * ti_ * tj_ * 4              # feats slab + temps (1x)
        return z_streams * zblk + feat

    while est(ti, tj) > budget:
        if ti > 8:
            ti = max(8, ((ti // 2) + 7) // 8 * 8)      # keep multiple of 8
        elif tj > 128:
            tj = max(128, ((tj // 2) + 127) // 128 * 128)
        else:
            break
    vmem_limit = int(max(32 << 20,
                         min(vmem_cap - (8 << 20), est(ti, tj) + (24 << 20))))

    cb_cols = cb.T                                      # (3, N) transposed cols
    grid = (pl.cdiv(n, ti), pl.cdiv(n, tj))             # edge blocks masked by Pallas
    cbr_spec = pl.BlockSpec((ti, 3), lambda i, j: (i, 0))
    cba_spec = pl.BlockSpec((3, tj), lambda i, j: (0, j))
    w_spec = pl.BlockSpec((f_in, zdim), lambda i, j: (0, 0))
    vec_spec = pl.BlockSpec((1, zdim), lambda i, j: (0, 0))
    z_spec = pl.BlockSpec((ti, tj, zdim), lambda i, j: (i, j, 0))
    cparams = pltpu.CompilerParams(
        dimension_semantics=("parallel", "parallel"),
        vmem_limit_bytes=vmem_limit)

    if first:
        z_out = pl.pallas_call(
            functools.partial(_pair_first_kernel, e=e),
            out_shape=jax.ShapeDtypeStruct((n, n, zdim), jnp.float32),
            grid=grid,
            in_specs=[cbr_spec, cba_spec, w_spec],
            out_specs=z_spec,
            compiler_params=cparams,
        )(cb, cb_cols, w_aug)
        return 0, z_out

    gz = params["gz"].reshape(1, zdim).astype(jnp.float32)
    bz = params["bz"].reshape(1, zdim).astype(jnp.float32)
    z_in = z.astype(jnp.float32)
    z_out = pl.pallas_call(
        functools.partial(_pair_recycle_kernel, e=e),
        out_shape=jax.ShapeDtypeStruct((n, n, zdim), jnp.float32),
        grid=grid,
        in_specs=[cbr_spec, cba_spec, z_spec, w_spec, vec_spec, vec_spec],
        out_specs=z_spec,
        # z is dead after this op on the recycle path: reuse its HBM buffer for
        # the output (XLA inserts a copy only if the caller still needs z).
        input_output_aliases={2: 0},
        compiler_params=cparams,
    )(cb, cb_cols, z_in, w_aug, gz, bz)

    # --- m LayerNorm: a few large lane-dense row blocks, no pad/slice ---------
    rows, mdim = m.shape
    gm = params["gm"].reshape(1, mdim).astype(jnp.float32)
    bm = params["bm"].reshape(1, mdim).astype(jnp.float32)
    tm = rows if rows <= 512 else 512
    m_out = pl.pallas_call(
        _m_norm_kernel,
        out_shape=jax.ShapeDtypeStruct((rows, mdim), jnp.float32),
        grid=(pl.cdiv(rows, tm),),
        in_specs=[pl.BlockSpec((tm, mdim), lambda i: (i, 0)),
                  pl.BlockSpec((1, mdim), lambda i: (0, 0)),
                  pl.BlockSpec((1, mdim), lambda i: (0, 0))],
        out_specs=pl.BlockSpec((tm, mdim), lambda i: (i, 0)),
        compiler_params=pltpu.CompilerParams(dimension_semantics=("parallel",)),
    )(m.astype(jnp.float32), gm, bm)
    return m_out, z_out


# ---------------------------------------------------------------------------
# Pure-JAX reference (mirrors the PyTorch forward)
# ---------------------------------------------------------------------------
def ref_forward(m, z, x, first, params):
    e = params["dis_encoding_dim"]
    cb = x[:, -1]
    diff = cb[:, None, :] - cb[None, :, :]
    dismap = jnp.sqrt(jnp.sum(diff * diff, axis=-1))
    scales = 2.0 ** jnp.arange(e, dtype=jnp.float32)
    xx = dismap[..., None] / scales
    feats = jnp.concatenate([jnp.sin(xx), jnp.cos(xx), dismap[..., None]], axis=-1)
    lin = feats @ params["w"] + params["b"]
    if first:
        return 0, lin
    z_out = _layernorm(z, params["gz"], params["bz"]) + lin
    m_out = _layernorm(m, params["gm"], params["bm"])
    return m_out, z_out


if __name__ == "__main__":
    # Small, production-flavoured shapes (z_dim / m_dim = 128 keep every block
    # lane-dense; the kernel still works for narrower channels, just with
    # masked stores).
    N_RES, N_ATOM = 32, 4
    M_DIM, Z_DIM, DIS_ENC = 128, 128, 8
    F_RAW = 2 * DIS_ENC + 1

    key = jax.random.PRNGKey(0)
    km, kz, kx, kw, kb, kg1, kb1, kg2, kb2 = jax.random.split(key, 9)

    m = jax.random.normal(km, (N_RES, M_DIM), jnp.float32)
    z = jax.random.normal(kz, (N_RES, N_RES, Z_DIM), jnp.float32)
    x = 3.0 * jax.random.normal(kx, (N_RES, N_ATOM, 3), jnp.float32)

    params = {
        "dis_encoding_dim": DIS_ENC,
        "w": 0.1 * jax.random.normal(kw, (F_RAW, Z_DIM), jnp.float32),
        "b": 0.1 * jax.random.normal(kb, (Z_DIM,), jnp.float32),
        "gz": 1.0 + 0.1 * jax.random.normal(kg1, (Z_DIM,), jnp.float32),
        "bz": 0.1 * jax.random.normal(kb1, (Z_DIM,), jnp.float32),
        "gm": 1.0 + 0.1 * jax.random.normal(kg2, (M_DIM,), jnp.float32),
        "bm": 0.1 * jax.random.normal(kb2, (M_DIM,), jnp.float32),
    }

    # References first (the recycle kernel may reuse z's HBM buffer).
    m_ref, z_ref = ref_forward(m, z, x, False, params)
    _, z_first_ref = ref_forward(m, z, x, True, params)
    jax.block_until_ready((m_ref, z_ref, z_first_ref))

    # --- first == True branch ---
    m0, z_first = recycling_embedder(m, z, x, True, params)
    jax.block_until_ready(z_first)
    assert m0 == 0
    assert jnp.allclose(z_first, z_first_ref, atol=1e-4, rtol=1e-4)

    # --- first == False (recycling) branch ---
    m_out, z_out = recycling_embedder(m, z, x, False, params)
    jax.block_until_ready((m_out, z_out))
    assert jnp.allclose(m_out, m_ref, atol=1e-4, rtol=1e-4)
    assert jnp.allclose(z_out, z_ref, atol=1e-4, rtol=1e-4)

    print("KERNEL_OK")
</pallas_src>

<mosaic_0001>
module attributes {stable_mosaic.version = 11 : i64} {
  func.func @_pair_first_kernel(%arg0: i32, %arg1: i32, %arg2: memref<32x3xf32, #tpu.memory_space<vmem>>, %arg3: memref<3x32xf32, #tpu.memory_space<vmem>>, %arg4: memref<18x128xf32, #tpu.memory_space<vmem>>, %arg5: memref<32x32x128xf32, #tpu.memory_space<vmem>>) attributes {dimension_semantics = [#tpu.dimension_semantics<parallel>, #tpu.dimension_semantics<parallel>], iteration_bounds = array<i64: 1, 1>, scalar_prefetch = 0 : i64, scratch_operands = 0 : i64, tpu.core_type = #tpu.core_type<tc>, window_params = [{transform_indices = @transform_0, window_bounds = array<i64: 32, 3>}, {transform_indices = @transform_1, window_bounds = array<i64: 3, 32>}, {pipeline_mode = #tpu.pipeline_mode<synchronous>, transform_indices = @transform_2, window_bounds = array<i64: 18, 128>}, {transform_indices = @transform_3, window_bounds = array<i64: 32, 32, 128>}]} {
    %c0 = arith.constant 0 : index
    %c0_0 = arith.constant 0 : index
    %0 = vector.load %arg2[%c0, %c0_0] : memref<32x3xf32, #tpu.memory_space<vmem>>, vector<32x3xf32>
    %c0_1 = arith.constant 0 : index
    %c0_2 = arith.constant 0 : index
    %1 = vector.load %arg3[%c0_1, %c0_2] : memref<3x32xf32, #tpu.memory_space<vmem>>, vector<3x32xf32>
    %cst = arith.constant 0.000000e+00 : f32
    %2 = vector.broadcast %cst : f32 to vector<32x32xf32>
    %3 = vector.extract_strided_slice %0 {offsets = [0, 0], sizes = [32, 1], strides = [1, 1]} : vector<32x3xf32> to vector<32x1xf32>
    %4 = vector.extract_strided_slice %1 {offsets = [0, 0], sizes = [1, 32], strides = [1, 1]} : vector<3x32xf32> to vector<1x32xf32>
    %5 = vector.broadcast %3 : vector<32x1xf32> to vector<32x32xf32>
    %6 = vector.broadcast %4 : vector<1x32xf32> to vector<32x32xf32>
    %7 = arith.subf %5, %6 : vector<32x32xf32>
    %8 = arith.mulf %7, %7 : vector<32x32xf32>
    %9 = arith.addf %2, %8 : vector<32x32xf32>
    %10 = vector.extract_strided_slice %0 {offsets = [0, 1], sizes = [32, 1], strides = [1, 1]} : vector<32x3xf32> to vector<32x1xf32>
    %11 = vector.extract_strided_slice %1 {offsets = [1, 0], sizes = [1, 32], strides = [1, 1]} : vector<3x32xf32> to vector<1x32xf32>
    %12 = vector.broadcast %10 : vector<32x1xf32> to vector<32x32xf32>
    %13 = vector.broadcast %11 : vector<1x32xf32> to vector<32x32xf32>
    %14 = arith.subf %12, %13 : vector<32x32xf32>
    %15 = arith.mulf %14, %14 : vector<32x32xf32>
    %16 = arith.addf %9, %15 : vector<32x32xf32>
    %17 = vector.extract_strided_slice %0 {offsets = [0, 2], sizes = [32, 1], strides = [1, 1]} : vector<32x3xf32> to vector<32x1xf32>
    %18 = vector.extract_strided_slice %1 {offsets = [2, 0], sizes = [1, 32], strides = [1, 1]} : vector<3x32xf32> to vector<1x32xf32>
    %19 = vector.broadcast %17 : vector<32x1xf32> to vector<32x32xf32>
    %20 = vector.broadcast %18 : vector<1x32xf32> to vector<32x32xf32>
    %21 = arith.subf %19, %20 : vector<32x32xf32>
    %22 = arith.mulf %21, %21 : vector<32x32xf32>
    %23 = arith.addf %16, %22 : vector<32x32xf32>
    %24 = math.sqrt %23 : vector<32x32xf32>
    %cst_3 = arith.constant 7.812500e-03 : f32
    %25 = vector.broadcast %cst_3 : f32 to vector<32x32xf32>
    %26 = arith.mulf %24, %25 : vector<32x32xf32>
    %27 = math.sin %26 : vector<32x32xf32>
    %28 = math.cos %26 : vector<32x32xf32>
    %cst_4 = arith.constant 2.000000e+00 : f32
    %29 = vector.broadcast %cst_4 : f32 to vector<32x32xf32>
    %30 = arith.mulf %29, %27 : vector<32x32xf32>
    %31 = arith.mulf %30, %28 : vector<32x32xf32>
    %cst_5 = arith.constant 2.000000e+00 : f32
    %32 = vector.broadcast %cst_5 : f32 to vector<32x32xf32>
    %33 = arith.mulf %32, %27 : vector<32x32xf32>
    %34 = arith.mulf %33, %27 : vector<32x32xf32>
    %cst_6 = arith.constant 1.000000e+00 : f32
    %35 = vector.broadcast %cst_6 : f32 to vector<32x32xf32>
    %36 = arith.subf %35, %34 : vector<32x32xf32>
    %cst_7 = arith.constant 2.000000e+00 : f32
    %37 = vector.broadcast %cst_7 : f32 to vector<32x32xf32>
    %38 = arith.mulf %37, %31 : vector<32x32xf32>
    %39 = arith.mulf %38, %36 : vector<32x32xf32>
    %cst_8 = arith.constant 2.000000e+00 : f32
    %40 = vector.broadcast %cst_8 : f32 to vector<32x32xf32>
    %41 = arith.mulf %40, %31 : vector<32x32xf32>
    %42 = arith.mulf %41, %31 : vector<32x32xf32>
    %cst_9 = arith.constant 1.000000e+00 : f32
    %43 = vector.broadcast %cst_9 : f32 to vector<32x32xf32>
    %44 = arith.subf %43, %42 : vector<32x32xf32>
    %cst_10 = arith.constant 2.000000e+00 : f32
    %45 = vector.broadcast %cst_10 : f32 to vector<32x32xf32>
    %46 = arith.mulf %45, %39 : vector<32x32xf32>
    %47 = arith.mulf %46, %44 : vector<32x32xf32>
    %cst_11 = arith.constant 2.000000e+00 : f32
    %48 = vector.broadcast %cst_11 : f32 to vector<32x32xf32>
    %49 = arith.mulf %48, %39 : vector<32x32xf32>
    %50 = arith.mulf %49, %39 : vector<32x32xf32>
    %cst_12 = arith.constant 1.000000e+00 : f32
    %51 = vector.broadcast %cst_12 : f32 to vector<32x32xf32>
    %52 = arith.subf %51, %50 : vector<32x32xf32>
    %cst_13 = arith.constant 1.250000e-01 : f32
    %53 = vector.broadcast %cst_13 : f32 to vector<32x32xf32>
    %54 = arith.mulf %24, %53 : vector<32x32xf32>
    %55 = math.sin %54 : vector<32x32xf32>
    %56 = math.cos %54 : vector<32x32xf32>
    %cst_14 = arith.constant 2.000000e+00 : f32
    %57 = vector.broadcast %cst_14 : f32 to vector<32x32xf32>
    %58 = arith.mulf %57, %55 : vector<32x32xf32>
    %59 = arith.mulf %58, %56 : vector<32x32xf32>
    %cst_15 = arith.constant 2.000000e+00 : f32
    %60 = vector.broadcast %cst_15 : f32 to vector<32x32xf32>
    %61 = arith.mulf %60, %55 : vector<32x32xf32>
    %62 = arith.mulf %61, %55 : vector<32x32xf32>
    %cst_16 = arith.constant 1.000000e+00 : f32
    %63 = vector.broadcast %cst_16 : f32 to vector<32x32xf32>
    %64 = arith.subf %63, %62 : vector<32x32xf32>
    %cst_17 = arith.constant 2.000000e+00 : f32
    %65 = vector.broadcast %cst_17 : f32 to vector<32x32xf32>
    %66 = arith.mulf %65, %59 : vector<32x32xf32>
    %67 = arith.mulf %66, %64 : vector<32x32xf32>
    %cst_18 = arith.constant 2.000000e+00 : f32
    %68 = vector.broadcast %cst_18 : f32 to vector<32x32xf32>
    %69 = arith.mulf %68, %59 : vector<32x32xf32>
    %70 = arith.mulf %69, %59 : vector<32x32xf32>
    %cst_19 = arith.constant 1.000000e+00 : f32
    %71 = vector.broadcast %cst_19 : f32 to vector<32x32xf32>
    %72 = arith.subf %71, %70 : vector<32x32xf32>
    %cst_20 = arith.constant 2.000000e+00 : f32
    %73 = vector.broadcast %cst_20 : f32 to vector<32x32xf32>
    %74 = arith.mulf %73, %67 : vector<32x32xf32>
    %75 = arith.mulf %74, %72 : vector<32x32xf32>
    %cst_21 = arith.constant 2.000000e+00 : f32
    %76 = vector.broadcast %cst_21 : f32 to vector<32x32xf32>
    %77 = arith.mulf %76, %67 : vector<32x32xf32>
    %78 = arith.mulf %77, %67 : vector<32x32xf32>
    %cst_22 = arith.constant 1.000000e+00 : f32
    %79 = vector.broadcast %cst_22 : f32 to vector<32x32xf32>
    %80 = arith.subf %79, %78 : vector<32x32xf32>
    %cst_23 = arith.constant 1.000000e+00 : f32
    %81 = vector.broadcast %cst_23 : f32 to vector<32x32xf32>
    %82 = vector.shape_cast %75 : vector<32x32xf32> to vector<1x32x32xf32>
    %83 = vector.shape_cast %67 : vector<32x32xf32> to vector<1x32x32xf32>
    %84 = vector.shape_cast %59 : vector<32x32xf32> to vector<1x32x32xf32>
    %85 = vector.shape_cast %55 : vector<32x32xf32> to vector<1x32x32xf32>
    %86 = vector.shape_cast %47 : vector<32x32xf32> to vector<1x32x32xf32>
    %87 = vector.shape_cast %39 : vector<32x32xf32> to vector<1x32x32xf32>
    %88 = vector.shape_cast %31 : vector<32x32xf32> to vector<1x32x32xf32>
    %89 = vector.shape_cast %27 : vector<32x32xf32> to vector<1x32x32xf32>
    %90 = vector.shape_cast %80 : vector<32x32xf32> to vector<1x32x32xf32>
    %91 = vector.shape_cast %72 : vector<32x32xf32> to vector<1x32x32xf32>
    %92 = vector.shape_cast %64 : vector<32x32xf32> to vector<1x32x32xf32>
    %93 = vector.shape_cast %56 : vector<32x32xf32> to vector<1x32x32xf32>
    %94 = vector.shape_cast %52 : vector<32x32xf32> to vector<1x32x32xf32>
    %95 = vector.shape_cast %44 : vector<32x32xf32> to vector<1x32x32xf32>
    %96 = vector.shape_cast %36 : vector<32x32xf32> to vector<1x32x32xf32>
    %97 = vector.shape_cast %28 : vector<32x32xf32> to vector<1x32x32xf32>
    %98 = vector.shape_cast %24 : vector<32x32xf32> to vector<1x32x32xf32>
    %99 = vector.shape_cast %81 : vector<32x32xf32> to vector<1x32x32xf32>
    %100 = tpu.concatenate %82, %83, %84, %85, %86, %87, %88, %89, %90, %91, %92, %93, %94, %95, %96, %97 in 0 : vector<1x32x32xf32>, vector<1x32x32xf32>, vector<1x32x32xf32>, vector<1x32x32xf32>, vector<1x32x32xf32>, vector<1x32x32xf32>, vector<1x32x32xf32>, vector<1x32x32xf32>, vector<1x32x32xf32>, vector<1x32x32xf32>, vector<1x32x32xf32>, vector<1x32x32xf32>, vector<1x32x32xf32>, vector<1x32x32xf32>, vector<1x32x32xf32>, vector<1x32x32xf32> -> vector<16x32x32xf32>
    %101 = tpu.concatenate %98, %99 in 0 : vector<1x32x32xf32>, vector<1x32x32xf32> -> vector<2x32x32xf32>
    %102 = tpu.concatenate %100, %101 in 0 : vector<16x32x32xf32>, vector<2x32x32xf32> -> vector<18x32x32xf32>
    %103 = vector.shape_cast %102 : vector<18x32x32xf32> to vector<18x1024xf32>
    %c0_24 = arith.constant 0 : index
    %c0_25 = arith.constant 0 : index
    %104 = vector.load %arg4[%c0_24, %c0_25] : memref<18x128xf32, #tpu.memory_space<vmem>>, vector<18x128xf32>
    %cst_26 = arith.constant dense<0.000000e+00> : vector<1024x128xf32>
    %105 = tpu.matmul %103, %104, %cst_26 {dimension_numbers = #tpu.dot_dimension_numbers<[0], [0], [1], [1], [0, 1, 1, 1], [], []>} : vector<18x1024xf32>, vector<18x128xf32>, vector<1024x128xf32> -> vector<1024x128xf32>
    %106 = vector.shape_cast %105 : vector<1024x128xf32> to vector<32x32x128xf32>
    %c0_27 = arith.constant 0 : index
    %c0_28 = arith.constant 0 : index
    %c0_29 = arith.constant 0 : index
    %107 = vector.load %arg5[%c0_27, %c0_28, %c0_29] : memref<32x32x128xf32, #tpu.memory_space<vmem>>, vector<32x32x128xf32>
    tpu.vector_store %arg5[%c0_27, %c0_28, %c0_29], %106 {strides = array<i32>} : memref<32x32x128xf32, #tpu.memory_space<vmem>>, vector<32x32x128xf32>,
    return
  }
  func.func @transform_0(%arg0: i32, %arg1: i32) -> (i32, i32) {
    %c0_i32 = arith.constant 0 : i32
    %c0_i32_0 = arith.constant 0 : i32
    return %arg0, %c0_i32 : i32, i32
  }
  func.func @transform_1(%arg0: i32, %arg1: i32) -> (i32, i32) {
    %c0_i32 = arith.constant 0 : i32
    %c0_i32_0 = arith.constant 0 : i32
    return %c0_i32, %arg1 : i32, i32
  }
  func.func @transform_2(%arg0: i32, %arg1: i32) -> (i32, i32) {
    %c0_i32 = arith.constant 0 : i32
    %c0_i32_0 = arith.constant 0 : i32
    %c0_i32_1 = arith.constant 0 : i32
    return %c0_i32, %c0_i32_0 : i32, i32
  }
  func.func @transform_3(%arg0: i32, %arg1: i32) -> (i32, i32, i32) {
    %c0_i32 = arith.constant 0 : i32
    %c0_i32_0 = arith.constant 0 : i32
    return %arg0, %arg1, %c0_i32 : i32, i32, i32
  }
}

</mosaic_0001>

<llo_original>
// kernel: tpu_custom_call.1
$region0: #{tpu_custom_call.1}
  #allocation0 [shape = 'u32[]', space=smem, size = 0x4, offset = 0x4, fixed_abs, tag = 'smem constant byte address 0x4 - core index']
  #allocation1 [shape = 'u32[144,128]{1,0:T(1,128)}', space=vmem, size = 0x12000, scoped, tag = 'internal scratch']
  %s0 = inlined_call_operand.vmem [shape: f32[32,3], index: 0, kind: input, shape index: {}]
  %s1 = inlined_call_operand.vmem [shape: f32[3,32], index: 1, kind: input, shape index: {}]
  %s2 = inlined_call_operand.vmem [shape: f32[18,128], index: 2, kind: input, shape index: {}]
  %s3 = inlined_call_operand.hbm [shape: f32[32,32,128], index: 3, kind: output, shape index: {}]
  %s4 = sld [smem:[#allocation0]]
  $region22: #{tpu_custom_call.1} parent=0
    _
  %s6 = ssub.s32 1, %s4
  %s7 = scalar_select 0, %s6, %s4
  $region1: #{tpu_custom_call.1} parent=0
    #allocation2 [shape = 'u8[524288]{0}', space=vmem, size = 0x80000, scoped, tag = 'output window, operand 0, single buffered']
    #allocation3 [shape = 's32[1]{0}', space=sflag, size = 0x4, scoped, tag = 'scoped memory for tpu_custom_call.1']
    %8 = vsyncpa [#allocation3], 0
    // Predicated region
    $region2: #{tpu_custom_call.1} parent=1 // pred_check
      _
    $region3: #{tpu_custom_call.1} parent=1 // pred_check_branch
      %10 = sbr.rel (0) target = $region5
    $region4: #{tpu_custom_call.1} parent=1 // pred_region
      _
    $region5: #{tpu_custom_call.1} parent=1 // pred_fallthru
      _
    // Predicated region
    $region6: #{tpu_custom_call.1} parent=1 // pred_check
      _
    $region7: #{tpu_custom_call.1} parent=1 // pred_check_branch
      %12 = sbr.rel (0) target = $region9
    $region8: #{tpu_custom_call.1} parent=1 // pred_region
      _
    $region9: #{tpu_custom_call.1} parent=1 // pred_fallthru
      _
    // Predicated region
    $region10: #{tpu_custom_call.1} parent=1 // pred_check
      _
    $region11: #{tpu_custom_call.1} parent=1 // pred_check_branch
      %14 = sbr.rel (0) target = $region13
    $region12: #{tpu_custom_call.1} parent=1 // pred_region
      _
    $region13: #{tpu_custom_call.1} parent=1 // pred_fallthru
      _
    %v15 = vld [vmem:[%s0] sm:$0xff]
    %v16 = vld [vmem:[%s0 + $0x8] sm:$0xff]
    %v17 = vld [vmem:[%s0 + $0x10] sm:$0xff]
    %v18 = vld [vmem:[%s0 + $0x18] sm:$0xff]
    %v19 = vld [vmem:[%s1] sm:$0x7]
    %21 = vset.pattern.permute.xlu0 0
    %22 = vperm.xlu0 %21, %v15
    %v23 = vpop.permute.xlu0 %22
    %26 = vset.pattern.permute.xlu0 0
    %27 = vperm.xlu0 %26, %v16
    %v28 = vpop.permute.xlu0 %27
    %31 = vset.pattern.permute.xlu0 0
    %32 = vperm.xlu0 %31, %v17
    %v33 = vpop.permute.xlu0 %32
    %36 = vset.pattern.permute.xlu0 0
    %37 = vperm.xlu0 %36, %v18
    %v38 = vpop.permute.xlu0 %37
    %v40 = vlaneseq
    %v41 = vshrl.u32 %v40, 7
    %v42 = vsub.s32 0, %v41
    %v43 = vrot.slane %v19, %v42
    %v44 = vsub.f32 %v23, %v43
    %v45 = vsub.f32 %v28, %v43
    %v46 = vsub.f32 %v33, %v43
    %v47 = vsub.f32 %v38, %v43
    %v48 = vmul.f32 %v44, %v44
    %v49 = vmul.f32 %v45, %v45
    %v50 = vmul.f32 %v46, %v46
    %v51 = vmul.f32 %v47, %v47
    %v52 = vadd.f32 %v48, 0.0
    %v53 = vadd.f32 %v49, 0.0
    %v54 = vadd.f32 %v50, 0.0
    %v55 = vadd.f32 %v51, 0.0
    %56 = vset.pattern.permute.xlu0 1
    %57 = vperm.xlu0 %56, %v15
    %v58 = vpop.permute.xlu0 %57
    %60 = vset.pattern.permute.xlu0 1
    %61 = vperm.xlu0 %60, %v16
    %v62 = vpop.permute.xlu0 %61
    %64 = vset.pattern.permute.xlu0 1
    %65 = vperm.xlu0 %64, %v17
    %v66 = vpop.permute.xlu0 %65
    %68 = vset.pattern.permute.xlu0 1
    %69 = vperm.xlu0 %68, %v18
    %v70 = vpop.permute.xlu0 %69
    %v72 = vlaneseq
    %v73 = vshrl.u32 %v72, 7
    %v74 = vsub.s32 1, %v73
    %v75 = vrot.slane %v19, %v74
    %v76 = vsub.f32 %v58, %v75
    %v77 = vsub.f32 %v62, %v75
    %v78 = vsub.f32 %v66, %v75
    %v79 = vsub.f32 %v70, %v75
    %v80 = vmul.f32 %v76, %v76
    %v81 = vmul.f32 %v77, %v77
    %v82 = vmul.f32 %v78, %v78
    %v83 = vmul.f32 %v79, %v79
    %v84 = vadd.f32 %v52, %v80
    %v85 = vadd.f32 %v53, %v81
    %v86 = vadd.f32 %v54, %v82
    %v87 = vadd.f32 %v55, %v83
    %88 = vset.pattern.permute.xlu0 2
    %89 = vperm.xlu0 %88, %v15
    %v90 = vpop.permute.xlu0 %89
    %92 = vset.pattern.permute.xlu0 2
    %93 = vperm.xlu0 %92, %v16
    %v94 = vpop.permute.xlu0 %93
    %96 = vset.pattern.permute.xlu0 2
    %97 = vperm.xlu0 %96, %v17
    %v98 = vpop.permute.xlu0 %97
    %100 = vset.pattern.permute.xlu0 2
    %101 = vperm.xlu0 %100, %v18
    %v102 = vpop.permute.xlu0 %101
    %v104 = vlaneseq
    %v105 = vshrl.u32 %v104, 7
    %v106 = vsub.s32 2, %v105
    %v107 = vrot.slane %v19, %v106
    %v108 = vsub.f32 %v90, %v107
    %v109 = vsub.f32 %v94, %v107
    %v110 = vsub.f32 %v98, %v107
    %v111 = vsub.f32 %v102, %v107
    %v112 = vmul.f32 %v108, %v108
    %v113 = vmul.f32 %v109, %v109
    %v114 = vmul.f32 %v110, %v110
    %v115 = vmul.f32 %v111, %v111
    %v116 = vadd.f32 %v84, %v112
    %v117 = vadd.f32 %v85, %v113
    %v118 = vadd.f32 %v86, %v114
    %v119 = vadd.f32 %v87, %v115
    %v120 = vrsqrt.pop %v116
    %v121 = vmul.f32 %v116, %v120
    %vm122 = vcmp.eq.f32.partialorder %v116, inf
    %v123 = vsel %vm122, %v116, %v121
    %vm124 = vcmp.eq.f32.partialorder %v116, 0.0
    %v125 = vand.u32 %v116, 2147483648
    %v126 = vsel %vm124, %v125, %v123
    %v127 = vrsqrt.pop %v117
    %v128 = vmul.f32 %v117, %v127
    %vm129 = vcmp.eq.f32.partialorder %v117, inf
    %v130 = vsel %vm129, %v117, %v128
    %vm131 = vcmp.eq.f32.partialorder %v117, 0.0
    %v132 = vand.u32 %v117, 2147483648
    %v133 = vsel %vm131, %v132, %v130
    %v134 = vrsqrt.pop %v118
    %v135 = vmul.f32 %v118, %v134
    %vm136 = vcmp.eq.f32.partialorder %v118, inf
    %v137 = vsel %vm136, %v118, %v135
    %vm138 = vcmp.eq.f32.partialorder %v118, 0.0
    %v139 = vand.u32 %v118, 2147483648
    %v140 = vsel %vm138, %v139, %v137
    %v141 = vrsqrt.pop %v119
    %v142 = vmul.f32 %v119, %v141
    %vm143 = vcmp.eq.f32.partialorder %v119, inf
    %v144 = vsel %vm143, %v119, %v142
    %vm145 = vcmp.eq.f32.partialorder %v119, 0.0
    %v146 = vand.u32 %v119, 2147483648
    %v147 = vsel %vm145, %v146, %v144
    %v148 = vmul.f32 %v126, 0.0078125
    %v149 = vmul.f32 %v133, 0.0078125
    %v150 = vmul.f32 %v140, 0.0078125
    %v151 = vmul.f32 %v147, 0.0078125
    %v152 = vand.u32 2147483647, %v148
    %vm153 = vcmp.le.f32.partialorder %v152, 0.7853982
    %vm154 = vcmp.lt.s32.totalorder %v148, 0
    %v155 = vand.u32 %v148, 2139095040
    %v156 = vshrl.u32 %v155, 23
    %v157 = vsub.s32 %v156, 127
    %v158 = vand.u32 2147483647, %v148
    %v159 = vand.u32 %v158, 8388607
    %v160 = vor.u32 %v159, 8388608
    %v161 = vsub.s32 0, %v160
    %v162 = vadd.s32 %v157, 1
    %vm163 = vcmp.gt.s32.totalorder %v162, 0
    %v164 = vsel %vm163, %v162, 0
    %v165 = vshrl.u32 %v164, 5
    %v166 = vand.u32 %v164, 31
    %v167 = vsub.s32 32, %v166
    %v168 = vshrl.u32 683565275, %v167
    %v169 = vshll.u32 683565275, %v166
    %v170 = vshrl.u32 2475754826, %v167
    %v171 = vor.u32 %v169, %v170
    %v172 = vshll.u32 2475754826, %v166
    %v173 = vshrl.u32 2131351028, %v167
    %v174 = vor.u32 %v172, %v173
    %v175 = vshll.u32 2131351028, %v166
    %v176 = vshrl.u32 2102212464, %v167
    %v177 = vor.u32 %v175, %v176
    %v178 = vshll.u32 2102212464, %v166
    %v179 = vshrl.u32 920167782, %v167
    %v180 = vor.u32 %v178, %v179
    %v181 = vshll.u32 920167782, %v166
    %v182 = vshrl.u32 1326507024, %v167
    %v183 = vor.u32 %v181, %v182
    %vm184 = vcmp.lt.s32.totalorder %v165, 1
    %vm185 = vcmp.lt.s32.totalorder %v165, 2
    %vm186 = vcmp.lt.s32.totalorder %v165, 3
    %vm187 = vcmp.lt.s32.totalorder %v165, 4
    %v188 = vsel %vm184, %v168, %v171
    %v189 = vsel %vm187, %v177, 2102212464
    %v190 = vsel %vm186, %v174, %v189
    %v191 = vsel %vm185, %v188, %v190
    %v192 = vsel %vm184, %v171, %v174
    %v193 = vsel %vm187, %v180, 920167782
    %v194 = vsel %vm186, %v177, %v193
    %v195 = vsel %vm185, %v192, %v194
    %v196 = vsel %vm184, %v174, %v177
    %v197 = vsel %vm187, %v183, 1326507024
    %v198 = vsel %vm186, %v180, %v197
    %v199 = vsel %vm185, %v196, %v198
    %v200 = vshll.u32 %v160, 8
    %v201 = vmul.u32.u64.compose %v200, %v199
    %v202 = vextract.low.u32 %v201
    %v203 = vextract.high.u32 %v201
    %v204 = vmul.u32.u64.compose %v200, %v195
    %v205 = vextract.low.u32 %v204
    %v206 = vextract.high.u32 %v204
    %v207 = vmul.u32 %v200, %v191
    %v208 = vadd.s32 %v203, %v205
    %vm209 = vc.u32 %v203, %v205
    %v210 = vadd.s32 %v206, 1
    %v211 = vsel %vm209, %v210, %v206
    %v212 = vadd.s32 %v207, %v211
    %v213 = vadd.s32 %v212, 536870912
    %v214 = vshrl.u32 %v213, 30
    %v215 = vshll.u32 %v214, 30
    %v216 = vsub.s32 %v212, %v215
    %vm217 = vcmp.lt.s32.totalorder %v216, 0
    %v218 = vsub.s32 0, %v216
    %v219 = vsel %vm217, %v218, %v216
    %v220 = vclz %v219
    %v221 = vsub.s32 %v220, 2
    %vm222 = vcmp.gt.s32.totalorder 0, %v221
    %v223 = vsel %vm222, 0, %v221
    %v224 = vsub.s32 32, %v223
    %v225 = vshll.u32 %v216, %v223
    %v226 = vshrl.u32 %v208, %v224
    %v227 = vor.u32 %v225, %v226
    %v228 = vsub.s32 4294967266, %v223
    %v229 = vadd.s32 %v228, 127
    %v230 = vshll.u32 %v229, 23
    %v231 = vor.u32 4788187, %v230
    %v232 = vand.u32 2147483647, %v231
    %v234 = vcvt.s32.f32 %v227
    %v235 = vmul.f32 %v234, %v232
    %v236 = vxor.u32 %v235, 2147483648
    %v237 = vsel %vm154, %v236, %v235
    %v238 = vsub.s32 4, %v214
    %v239 = vsel %vm154, %v238, %v214
    %v240 = vsel %vm153, %v148, %v237
    %v241 = vsel %vm153, 0, %v239
    %v242 = vcosq.f32.pop %v240
    %v243 = vsinq.f32.pop %v240
    %vm244 = vweird.f32 %v148
    %v245 = vadd.s32 %v241, 3
    %v246 = vand.u32 %v245, 3
    %vm247 = vcmp.lt.s32.totalorder %v246, 2
    %vm248 = vcmp.eq.s32.totalorder %v246, 0
    %v249 = vxor.u32 %v243, 2147483648
    %v250 = vsel %vm248, %v242, %v249
    %vm251 = vcmp.eq.s32.totalorder %v246, 2
    %v252 = vxor.u32 %v242, 2147483648
    %v253 = vsel %vm251, %v252, %v243
    %v254 = vsel %vm247, %v250, %v253
    %v255 = vsel %vm244, nan, %v254
    %v256 = vand.u32 2147483647, %v149
    %vm257 = vcmp.le.f32.partialorder %v256, 0.7853982
    %vm258 = vcmp.lt.s32.totalorder %v149, 0
    %v259 = vand.u32 %v149, 2139095040
    %v260 = vshrl.u32 %v259, 23
    %v261 = vsub.s32 %v260, 127
    %v262 = vand.u32 2147483647, %v149
    %v263 = vand.u32 %v262, 8388607
    %v264 = vor.u32 %v263, 8388608
    %v265 = vsub.s32 0, %v264
    %v266 = vadd.s32 %v261, 1
    %vm267 = vcmp.gt.s32.totalorder %v266, 0
    %v268 = vsel %vm267, %v266, 0
    %v269 = vshrl.u32 %v268, 5
    %v270 = vand.u32 %v268, 31
    %v271 = vsub.s32 32, %v270
    %v272 = vshrl.u32 683565275, %v271
    %v273 = vshll.u32 683565275, %v270
    %v274 = vshrl.u32 2475754826, %v271
    %v275 = vor.u32 %v273, %v274
    %v276 = vshll.u32 2475754826, %v270
    %v277 = vshrl.u32 2131351028, %v271
    %v278 = vor.u32 %v276, %v277
    %v279 = vshll.u32 2131351028, %v270
    %v280 = vshrl.u32 2102212464, %v271
    %v281 = vor.u32 %v279, %v280
    %v282 = vshll.u32 2102212464, %v270
    %v283 = vshrl.u32 920167782, %v271
    %v284 = vor.u32 %v282, %v283
    %v285 = vshll.u32 920167782, %v270
    %v286 = vshrl.u32 1326507024, %v271
    %v287 = vor.u32 %v285, %v286
    %vm288 = vcmp.lt.s32.totalorder %v269, 1
    %vm289 = vcmp.lt.s32.totalorder %v269, 2
    %vm290 = vcmp.lt.s32.totalorder %v269, 3
    %vm291 = vcmp.lt.s32.totalorder %v269, 4
    %v292 = vsel %vm288, %v272, %v275
    %v293 = vsel %vm291, %v281, 2102212464
    %v294 = vsel %vm290, %v278, %v293
    %v295 = vsel %vm289, %v292, %v294
    %v296 = vsel %vm288, %v275, %v278
    %v297 = vsel %vm291, %v284, 920167782
    %v298 = vsel %vm290, %v281, %v297
    %v299 = vsel %vm289, %v296, %v298
    %v300 = vsel %vm288, %v278, %v281
    %v301 = vsel %vm291, %v287, 1326507024
    %v302 = vsel %vm290, %v284, %v301
    %v303 = vsel %vm289, %v300, %v302
    %v304 = vshll.u32 %v264, 8
    %v305 = vmul.u32.u64.compose %v304, %v303
    %v306 = vextract.low.u32 %v305
    %v307 = vextract.high.u32 %v305
    %v308 = vmul.u32.u64.compose %v304, %v299
    %v309 = vextract.low.u32 %v308
    %v310 = vextract.high.u32 %v308
    %v311 = vmul.u32 %v304, %v295
    %v312 = vadd.s32 %v307, %v309
    %vm313 = vc.u32 %v307, %v309
    %v314 = vadd.s32 %v310, 1
    %v315 = vsel %vm313, %v314, %v310
    %v316 = vadd.s32 %v311, %v315
    %v317 = vadd.s32 %v316, 536870912
    %v318 = vshrl.u32 %v317, 30
    %v319 = vshll.u32 %v318, 30
    %v320 = vsub.s32 %v316, %v319
    %vm321 = vcmp.lt.s32.totalorder %v320, 0
    %v322 = vsub.s32 0, %v320
    %v323 = vsel %vm321, %v322, %v320
    %v324 = vclz %v323
    %v325 = vsub.s32 %v324, 2
    %vm326 = vcmp.gt.s32.totalorder 0, %v325
    %v327 = vsel %vm326, 0, %v325
    %v328 = vsub.s32 32, %v327
    %v329 = vshll.u32 %v320, %v327
    %v330 = vshrl.u32 %v312, %v328
    %v331 = vor.u32 %v329, %v330
    %v332 = vsub.s32 4294967266, %v327
    %v333 = vadd.s32 %v332, 127
    %v334 = vshll.u32 %v333, 23
    %v335 = vor.u32 4788187, %v334
    %v336 = vand.u32 2147483647, %v335
    %v338 = vcvt.s32.f32 %v331
    %v339 = vmul.f32 %v338, %v336
    %v340 = vxor.u32 %v339, 2147483648
    %v341 = vsel %vm258, %v340, %v339
    %v342 = vsub.s32 4, %v318
    %v343 = vsel %vm258, %v342, %v318
    %v344 = vsel %vm257, %v149, %v341
    %v345 = vsel %vm257, 0, %v343
    %v346 = vcosq.f32.pop %v344
    %v347 = vsinq.f32.pop %v344
    %vm348 = vweird.f32 %v149
    %v349 = vadd.s32 %v345, 3
    %v350 = vand.u32 %v349, 3
    %vm351 = vcmp.lt.s32.totalorder %v350, 2
    %vm352 = vcmp.eq.s32.totalorder %v350, 0
    %v353 = vxor.u32 %v347, 2147483648
    %v354 = vsel %vm352, %v346, %v353
    %vm355 = vcmp.eq.s32.totalorder %v350, 2
    %v356 = vxor.u32 %v346, 2147483648
    %v357 = vsel %vm355, %v356, %v347
    %v358 = vsel %vm351, %v354, %v357
    %v359 = vsel %vm348, nan, %v358
    %v360 = vand.u32 2147483647, %v150
    %vm361 = vcmp.le.f32.partialorder %v360, 0.7853982
    %vm362 = vcmp.lt.s32.totalorder %v150, 0
    %v363 = vand.u32 %v150, 2139095040
    %v364 = vshrl.u32 %v363, 23
    %v365 = vsub.s32 %v364, 127
    %v366 = vand.u32 2147483647, %v150
    %v367 = vand.u32 %v366, 8388607
    %v368 = vor.u32 %v367, 8388608
    %v369 = vsub.s32 0, %v368
    %v370 = vadd.s32 %v365, 1
    %vm371 = vcmp.gt.s32.totalorder %v370, 0
    %v372 = vsel %vm371, %v370, 0
    %v373 = vshrl.u32 %v372, 5
    %v374 = vand.u32 %v372, 31
    %v375 = vsub.s32 32, %v374
    %v376 = vshrl.u32 683565275, %v375
    %v377 = vshll.u32 683565275, %v374
    %v378 = vshrl.u32 2475754826, %v375
    %v379 = vor.u32 %v377, %v378
    %v380 = vshll.u32 2475754826, %v374
    %v381 = vshrl.u32 2131351028, %v375
    %v382 = vor.u32 %v380, %v381
    %v383 = vshll.u32 2131351028, %v374
    %v384 = vshrl.u32 2102212464, %v375
    %v385 = vor.u32 %v383, %v384
    %v386 = vshll.u32 2102212464, %v374
    %v387 = vshrl.u32 920167782, %v375
    %v388 = vor.u32 %v386, %v387
    %v389 = vshll.u32 920167782, %v374
    %v390 = vshrl.u32 1326507024, %v375
    %v391 = vor.u32 %v389, %v390
    %vm392 = vcmp.lt.s32.totalorder %v373, 1
    %vm393 = vcmp.lt.s32.totalorder %v373, 2
    %vm394 = vcmp.lt.s32.totalorder %v373, 3
    %vm395 = vcmp.lt.s32.totalorder %v373, 4
    %v396 = vsel %vm392, %v376, %v379
    %v397 = vsel %vm395, %v385, 2102212464
    %v398 = vsel %vm394, %v382, %v397
    %v399 = vsel %vm393, %v396, %v398
    %v400 = vsel %vm392, %v379, %v382
    %v401 = vsel %vm395, %v388, 920167782
    %v402 = vsel %vm394, %v385, %v401
    %v403 = vsel %vm393, %v400, %v402
    %v404 = vsel %vm392, %v382, %v385
    %v405 = vsel %vm395, %v391, 1326507024
    %v406 = vsel %vm394, %v388, %v405
    %v407 = vsel %vm393, %v404, %v406
    %v408 = vshll.u32 %v368, 8
    %v409 = vmul.u32.u64.compose %v408, %v407
    %v410 = vextract.low.u32 %v409
    %v411 = vextract.high.u32 %v409
    %v412 = vmul.u32.u64.compose %v408, %v403
    %v413 = vextract.low.u32 %v412
    %v414 = vextract.high.u32 %v412
    %v415 = vmul.u32 %v408, %v399
    %v416 = vadd.s32 %v411, %v413
    %vm417 = vc.u32 %v411, %v413
    %v418 = vadd.s32 %v414, 1
    %v419 = vsel %vm417, %v418, %v414
    %v420 = vadd.s32 %v415, %v419
    %v421 = vadd.s32 %v420, 536870912
    %v422 = vshrl.u32 %v421, 30
    %v423 = vshll.u32 %v422, 30
    %v424 = vsub.s32 %v420, %v423
    %vm425 = vcmp.lt.s32.totalorder %v424, 0
    %v426 = vsub.s32 0, %v424
    %v427 = vsel %vm425, %v426, %v424
    %v428 = vclz %v427
    %v429 = vsub.s32 %v428, 2
    %vm430 = vcmp.gt.s32.totalorder 0, %v429
    %v431 = vsel %vm430, 0, %v429
    %v432 = vsub.s32 32, %v431
    %v433 = vshll.u32 %v424, %v431
    %v434 = vshrl.u32 %v416, %v432
    %v435 = vor.u32 %v433, %v434
    %v436 = vsub.s32 4294967266, %v431
    %v437 = vadd.s32 %v436, 127
    %v438 = vshll.u32 %v437, 23
    %v439 = vor.u32 4788187, %v438
    %v440 = vand.u32 2147483647, %v439
    %v442 = vcvt.s32.f32 %v435
    %v443 = vmul.f32 %v442, %v440
    %v444 = vxor.u32 %v443, 2147483648
    %v445 = vsel %vm362, %v444, %v443
    %v446 = vsub.s32 4, %v422
    %v447 = vsel %vm362, %v446, %v422
    %v448 = vsel %vm361, %v150, %v445
    %v449 = vsel %vm361, 0, %v447
    %v450 = vcosq.f32.pop %v448
    %v451 = vsinq.f32.pop %v448
    %vm452 = vweird.f32 %v150
    %v453 = vadd.s32 %v449, 3
    %v454 = vand.u32 %v453, 3
    %vm455 = vcmp.lt.s32.totalorder %v454, 2
    %vm456 = vcmp.eq.s32.totalorder %v454, 0
    %v457 = vxor.u32 %v451, 2147483648
    %v458 = vsel %vm456, %v450, %v457
    %vm459 = vcmp.eq.s32.totalorder %v454, 2
    %v460 = vxor.u32 %v450, 2147483648
    %v461 = vsel %vm459, %v460, %v451
    %v462 = vsel %vm455, %v458, %v461
    %v463 = vsel %vm452, nan, %v462
    %v464 = vand.u32 2147483647, %v151
    %vm465 = vcmp.le.f32.partialorder %v464, 0.7853982
    %vm466 = vcmp.lt.s32.totalorder %v151, 0
    %v467 = vand.u32 %v151, 2139095040
    %v468 = vshrl.u32 %v467, 23
    %v469 = vsub.s32 %v468, 127
    %v470 = vand.u32 2147483647, %v151
    %v471 = vand.u32 %v470, 8388607
    %v472 = vor.u32 %v471, 8388608
    %v473 = vsub.s32 0, %v472
    %v474 = vadd.s32 %v469, 1
    %vm475 = vcmp.gt.s32.totalorder %v474, 0
    %v476 = vsel %vm475, %v474, 0
    %v477 = vshrl.u32 %v476, 5
    %v478 = vand.u32 %v476, 31
    %v479 = vsub.s32 32, %v478
    %v480 = vshrl.u32 683565275, %v479
    %v481 = vshll.u32 683565275, %v478
    %v482 = vshrl.u32 2475754826, %v479
    %v483 = vor.u32 %v481, %v482
    %v484 = vshll.u32 2475754826, %v478
    %v485 = vshrl.u32 2131351028, %v479
    %v486 = vor.u32 %v484, %v485
    %v487 = vshll.u32 2131351028, %v478
    %v488 = vshrl.u32 2102212464, %v479
    %v489 = vor.u32 %v487, %v488
    %v490 = vshll.u32 2102212464, %v478
    %v491 = vshrl.u32 920167782, %v479
    %v492 = vor.u32 %v490, %v491
    %v493 = vshll.u32 920167782, %v478
    %v494 = vshrl.u32 1326507024, %v479
    %v495 = vor.u32 %v493, %v494
    %vm496 = vcmp.lt.s32.totalorder %v477, 1
    %vm497 = vcmp.lt.s32.totalorder %v477, 2
    %vm498 = vcmp.lt.s32.totalorder %v477, 3
    %vm499 = vcmp.lt.s32.totalorder %v477, 4
    %v500 = vsel %vm496, %v480, %v483
    %v501 = vsel %vm499, %v489, 2102212464
    %v502 = vsel %vm498, %v486, %v501
    %v503 = vsel %vm497, %v500, %v502
    %v504 = vsel %vm496, %v483, %v486
    %v505 = vsel %vm499, %v492, 920167782
    %v506 = vsel %vm498, %v489, %v505
    %v507 = vsel %vm497, %v504, %v506
    %v508 = vsel %vm496, %v486, %v489
    %v509 = vsel %vm499, %v495, 1326507024
    %v510 = vsel %vm498, %v492, %v509
    %v511 = vsel %vm497, %v508, %v510
    %v512 = vshll.u32 %v472, 8
    %v513 = vmul.u32.u64.compose %v512, %v511
    %v514 = vextract.low.u32 %v513
    %v515 = vextract.high.u32 %v513
    %v516 = vmul.u32.u64.compose %v512, %v507
    %v517 = vextract.low.u32 %v516
    %v518 = vextract.high.u32 %v516
    %v519 = vmul.u32 %v512, %v503
    %v520 = vadd.s32 %v515, %v517
    %vm521 = vc.u32 %v515, %v517
    %v522 = vadd.s32 %v518, 1
    %v523 = vsel %vm521, %v522, %v518
    %v524 = vadd.s32 %v519, %v523
    %v525 = vadd.s32 %v524, 536870912
    %v526 = vshrl.u32 %v525, 30
    %v527 = vshll.u32 %v526, 30
    %v528 = vsub.s32 %v524, %v527
    %vm529 = vcmp.lt.s32.totalorder %v528, 0
    %v530 = vsub.s32 0, %v528
    %v531 = vsel %vm529, %v530, %v528
    %v532 = vclz %v531
    %v533 = vsub.s32 %v532, 2
    %vm534 = vcmp.gt.s32.totalorder 0, %v533
    %v535 = vsel %vm534, 0, %v533
    %v536 = vsub.s32 32, %v535
    %v537 = vshll.u32 %v528, %v535
    %v538 = vshrl.u32 %v520, %v536
    %v539 = vor.u32 %v537, %v538
    %v540 = vsub.s32 4294967266, %v535
    %v541 = vadd.s32 %v540, 127
    %v542 = vshll.u32 %v541, 23
    %v543 = vor.u32 4788187, %v542
    %v544 = vand.u32 2147483647, %v543
    %v546 = vcvt.s32.f32 %v539
    %v547 = vmul.f32 %v546, %v544
    %v548 = vxor.u32 %v547, 2147483648
    %v549 = vsel %vm466, %v548, %v547
    %v550 = vsub.s32 4, %v526
    %v551 = vsel %vm466, %v550, %v526
    %v552 = vsel %vm465, %v151, %v549
    %v553 = vsel %vm465, 0, %v551
    %v554 = vcosq.f32.pop %v552
    %v555 = vsinq.f32.pop %v552
    %vm556 = vweird.f32 %v151
    %v557 = vadd.s32 %v553, 3
    %v558 = vand.u32 %v557, 3
    %vm559 = vcmp.lt.s32.totalorder %v558, 2
    %vm560 = vcmp.eq.s32.totalorder %v558, 0
    %v561 = vxor.u32 %v555, 2147483648
    %v562 = vsel %vm560, %v554, %v561
    %vm563 = vcmp.eq.s32.totalorder %v558, 2
    %v564 = vxor.u32 %v554, 2147483648
    %v565 = vsel %vm563, %v564, %v555
    %v566 = vsel %vm559, %v562, %v565
    %v567 = vsel %vm556, nan, %v566
    %v568 = vand.u32 2147483647, %v148
    %vm569 = vcmp.le.f32.partialorder %v568, 0.7853982
    %vm570 = vcmp.lt.s32.totalorder %v148, 0
    %v571 = vand.u32 %v148, 2139095040
    %v572 = vshrl.u32 %v571, 23
    %v573 = vsub.s32 %v572, 127
    %v574 = vand.u32 2147483647, %v148
    %v575 = vand.u32 %v574, 8388607
    %v576 = vor.u32 %v575, 8388608
    %v577 = vsub.s32 0, %v576
    %v578 = vadd.s32 %v573, 1
    %vm579 = vcmp.gt.s32.totalorder %v578, 0
    %v580 = vsel %vm579, %v578, 0
    %v581 = vshrl.u32 %v580, 5
    %v582 = vand.u32 %v580, 31
    %v583 = vsub.s32 32, %v582
    %v584 = vshrl.u32 683565275, %v583
    %v585 = vshll.u32 683565275, %v582
    %v586 = vshrl.u32 2475754826, %v583
    %v587 = vor.u32 %v585, %v586
    %v588 = vshll.u32 2475754826, %v582
    %v589 = vshrl.u32 2131351028, %v583
    %v590 = vor.u32 %v588, %v589
    %v591 = vshll.u32 2131351028, %v582
    %v592 = vshrl.u32 2102212464, %v583
    %v593 = vor.u32 %v591, %v592
    %v594 = vshll.u32 2102212464, %v582
    %v595 = vshrl.u32 920167782, %v583
    %v596 = vor.u32 %v594, %v595
    %v597 = vshll.u32 920167782, %v582
    %v598 = vshrl.u32 1326507024, %v583
    %v599 = vor.u32 %v597, %v598
    %vm600 = vcmp.lt.s32.totalorder %v581, 1
    %vm601 = vcmp.lt.s32.totalorder %v581, 2
    %vm602 = vcmp.lt.s32.totalorder %v581, 3
    %vm603 = vcmp.lt.s32.totalorder %v581, 4
    %v604 = vsel %vm600, %v584, %v587
    %v605 = vsel %vm603, %v593, 2102212464
    %v606 = vsel %vm602, %v590, %v605
    %v607 = vsel %vm601, %v604, %v606
    %v608 = vsel %vm600, %v587, %v590
    %v609 = vsel %vm603, %v596, 920167782
    %v610 = vsel %vm602, %v593, %v609
    %v611 = vsel %vm601, %v608, %v610
    %v612 = vsel %vm600, %v590, %v593
    %v613 = vsel %vm603, %v599, 1326507024
    %v614 = vsel %vm602, %v596, %v613
    %v615 = vsel %vm601, %v612, %v614
    %v616 = vshll.u32 %v576, 8
    %v617 = vmul.u32.u64.compose %v616, %v615
    %v618 = vextract.low.u32 %v617
    %v619 = vextract.high.u32 %v617
    %v620 = vmul.u32.u64.compose %v616, %v611
    %v621 = vextract.low.u32 %v620
    %v622 = vextract.high.u32 %v620
    %v623 = vmul.u32 %v616, %v607
    %v624 = vadd.s32 %v619, %v621
    %vm625 = vc.u32 %v619, %v621
    %v626 = vadd.s32 %v622, 1
    %v627 = vsel %vm625, %v626, %v622
    %v628 = vadd.s32 %v623, %v627
    %v629 = vadd.s32 %v628, 536870912
    %v630 = vshrl.u32 %v629, 30
    %v631 = vshll.u32 %v630, 30
    %v632 = vsub.s32 %v628, %v631
    %vm633 = vcmp.lt.s32.totalorder %v632, 0
    %v634 = vsub.s32 0, %v632
    %v635 = vsel %vm633, %v634, %v632
    %v636 = vclz %v635
    %v637 = vsub.s32 %v636, 2
    %vm638 = vcmp.gt.s32.totalorder 0, %v637
    %v639 = vsel %vm638, 0, %v637
    %v640 = vsub.s32 32, %v639
    %v641 = vshll.u32 %v632, %v639
    %v642 = vshrl.u32 %v624, %v640
    %v643 = vor.u32 %v641, %v642
    %v644 = vsub.s32 4294967266, %v639
    %v645 = vadd.s32 %v644, 127
    %v646 = vshll.u32 %v645, 23
    %v647 = vor.u32 4788187, %v646
    %v648 = vand.u32 2147483647, %v647
    %v650 = vcvt.s32.f32 %v643
    %v651 = vmul.f32 %v650, %v648
    %v652 = vxor.u32 %v651, 2147483648
    %v653 = vsel %vm570, %v652, %v651
    %v654 = vsub.s32 4, %v630
    %v655 = vsel %vm570, %v654, %v630
    %v656 = vsel %vm569, %v148, %v653
    %v657 = vsel %vm569, 0, %v655
    %v658 = vcosq.f32.pop %v656
    %v659 = vsinq.f32.pop %v656
    %vm660 = vweird.f32 %v148
    %v661 = vand.u32 %v657, 3
    %vm662 = vcmp.lt.s32.totalorder %v661, 2
    %vm663 = vcmp.eq.s32.totalorder %v661, 0
    %v664 = vxor.u32 %v659, 2147483648
    %v665 = vsel %vm663, %v658, %v664
    %vm666 = vcmp.eq.s32.totalorder %v661, 2
    %v667 = vxor.u32 %v658, 2147483648
    %v668 = vsel %vm666, %v667, %v659
    %v669 = vsel %vm662, %v665, %v668
    %v670 = vsel %vm660, nan, %v669
    %v671 = vand.u32 2147483647, %v149
    %vm672 = vcmp.le.f32.partialorder %v671, 0.7853982
    %vm673 = vcmp.lt.s32.totalorder %v149, 0
    %v674 = vand.u32 %v149, 2139095040
    %v675 = vshrl.u32 %v674, 23
    %v676 = vsub.s32 %v675, 127
    %v677 = vand.u32 2147483647, %v149
    %v678 = vand.u32 %v677, 8388607
    %v679 = vor.u32 %v678, 8388608
    %v680 = vsub.s32 0, %v679
    %v681 = vadd.s32 %v676, 1
    %vm682 = vcmp.gt.s32.totalorder %v681, 0
    %v683 = vsel %vm682, %v681, 0
    %v684 = vshrl.u32 %v683, 5
    %v685 = vand.u32 %v683, 31
    %v686 = vsub.s32 32, %v685
    %v687 = vshrl.u32 683565275, %v686
    %v688 = vshll.u32 683565275, %v685
    %v689 = vshrl.u32 2475754826, %v686
    %v690 = vor.u32 %v688, %v689
    %v691 = vshll.u32 2475754826, %v685
    %v692 = vshrl.u32 2131351028, %v686
    %v693 = vor.u32 %v691, %v692
    %v694 = vshll.u32 2131351028, %v685
    %v695 = vshrl.u32 2102212464, %v686
    %v696 = vor.u32 %v694, %v695
    %v697 = vshll.u32 2102212464, %v685
    %v698 = vshrl.u32 920167782, %v686
    %v699 = vor.u32 %v697, %v698
    %v700 = vshll.u32 920167782, %v685
    %v701 = vshrl.u32 1326507024, %v686
    %v702 = vor.u32 %v700, %v701
    %vm703 = vcmp.lt.s32.totalorder %v684, 1
    %vm704 = vcmp.lt.s32.totalorder %v684, 2
    %vm705 = vcmp.lt.s32.totalorder %v684, 3
    %vm706 = vcmp.lt.s32.totalorder %v684, 4
    %v707 = vsel %vm703, %v687, %v690
    %v708 = vsel %vm706, %v696, 2102212464
    %v709 = vsel %vm705, %v693, %v708
    %v710 = vsel %vm704, %v707, %v709
    %v711 = vsel %vm703, %v690, %v693
    %v712 = vsel %vm706, %v699, 920167782
    %v713 = vsel %vm705, %v696, %v712
    %v714 = vsel %vm704, %v711, %v713
    %v715 = vsel %vm703, %v693, %v696
    %v716 = vsel %vm706, %v702, 1326507024
    %v717 = vsel %vm705, %v699, %v716
    %v718 = vsel %vm704, %v715, %v717
    %v719 = vshll.u32 %v679, 8
    %v720 = vmul.u32.u64.compose %v719, %v718
    %v721 = vextract.low.u32 %v720
    %v722 = vextract.high.u32 %v720
    %v723 = vmul.u32.u64.compose %v719, %v714
    %v724 = vextract.low.u32 %v723
    %v725 = vextract.high.u32 %v723
    %v726 = vmul.u32 %v719, %v710
    %v727 = vadd.s32 %v722, %v724
    %vm728 = vc.u32 %v722, %v724
    %v729 = vadd.s32 %v725, 1
    %v730 = vsel %vm728, %v729, %v725
    %v731 = vadd.s32 %v726, %v730
    %v732 = vadd.s32 %v731, 536870912
    %v733 = vshrl.u32 %v732, 30
    %v734 = vshll.u32 %v733, 30
    %v735 = vsub.s32 %v731, %v734
    %vm736 = vcmp.lt.s32.totalorder %v735, 0
    %v737 = vsub.s32 0, %v735
    %v738 = vsel %vm736, %v737, %v735
    %v739 = vclz %v738
    %v740 = vsub.s32 %v739, 2
    %vm741 = vcmp.gt.s32.totalorder 0, %v740
    %v742 = vsel %vm741, 0, %v740
    %v743 = vsub.s32 32, %v742
    %v744 = vshll.u32 %v735, %v742
    %v745 = vshrl.u32 %v727, %v743
    %v746 = vor.u32 %v744, %v745
    %v747 = vsub.s32 4294967266, %v742
    %v748 = vadd.s32 %v747, 127
    %v749 = vshll.u32 %v748, 23
    %v750 = vor.u32 4788187, %v749
    %v751 = vand.u32 2147483647, %v750
    %v753 = vcvt.s32.f32 %v746
    %v754 = vmul.f32 %v753, %v751
    %v755 = vxor.u32 %v754, 2147483648
    %v756 = vsel %vm673, %v755, %v754
    %v757 = vsub.s32 4, %v733
    %v758 = vsel %vm673, %v757, %v733
    %v759 = vsel %vm672, %v149, %v756
    %v760 = vsel %vm672, 0, %v758
    %v761 = vcosq.f32.pop %v759
    %v762 = vsinq.f32.pop %v759
    %vm763 = vweird.f32 %v149
    %v764 = vand.u32 %v760, 3
    %vm765 = vcmp.lt.s32.totalorder %v764, 2
    %vm766 = vcmp.eq.s32.totalorder %v764, 0
    %v767 = vxor.u32 %v762, 2147483648
    %v768 = vsel %vm766, %v761, %v767
    %vm769 = vcmp.eq.s32.totalorder %v764, 2
    %v770 = vxor.u32 %v761, 2147483648
    %v771 = vsel %vm769, %v770, %v762
    %v772 = vsel %vm765, %v768, %v771
    %v773 = vsel %vm763, nan, %v772
    %v774 = vand.u32 2147483647, %v150
    %vm775 = vcmp.le.f32.partialorder %v774, 0.7853982
    %vm776 = vcmp.lt.s32.totalorder %v150, 0
    %v777 = vand.u32 %v150, 2139095040
    %v778 = vshrl.u32 %v777, 23
    %v779 = vsub.s32 %v778, 127
    %v780 = vand.u32 2147483647, %v150
    %v781 = vand.u32 %v780, 8388607
    %v782 = vor.u32 %v781, 8388608
    %v783 = vsub.s32 0, %v782
    %v784 = vadd.s32 %v779, 1
    %vm785 = vcmp.gt.s32.totalorder %v784, 0
    %v786 = vsel %vm785, %v784, 0
    %v787 = vshrl.u32 %v786, 5
    %v788 = vand.u32 %v786, 31
    %v789 = vsub.s32 32, %v788
    %v790 = vshrl.u32 683565275, %v789
    %v791 = vshll.u32 683565275, %v788
    %v792 = vshrl.u32 2475754826, %v789
    %v793 = vor.u32 %v791, %v792
    %v794 = vshll.u32 2475754826, %v788
    %v795 = vshrl.u32 2131351028, %v789
    %v796 = vor.u32 %v794, %v795
    %v797 = vshll.u32 2131351028, %v788
    %v798 = vshrl.u32 2102212464, %v789
    %v799 = vor.u32 %v797, %v798
    %v800 = vshll.u32 2102212464, %v788
    %v801 = vshrl.u32 920167782, %v789
    %v802 = vor.u32 %v800, %v801
    %v803 = vshll.u32 920167782, %v788
    %v804 = vshrl.u32 1326507024, %v789
    %v805 = vor.u32 %v803, %v804
    %vm806 = vcmp.lt.s32.totalorder %v787, 1
    %vm807 = vcmp.lt.s32.totalorder %v787, 2
    %vm808 = vcmp.lt.s32.totalorder %v787, 3
    %vm809 = vcmp.lt.s32.totalorder %v787, 4
    %v810 = vsel %vm806, %v790, %v793
    %v811 = vsel %vm809, %v799, 2102212464
    %v812 = vsel %vm808, %v796, %v811
    %v813 = vsel %vm807, %v810, %v812
    %v814 = vsel %vm806, %v793, %v796
    %v815 = vsel %vm809, %v802, 920167782
    %v816 = vsel %vm808, %v799, %v815
    %v817 = vsel %vm807, %v814, %v816
    %v818 = vsel %vm806, %v796, %v799
    %v819 = vsel %vm809, %v805, 1326507024
    %v820 = vsel %vm808, %v802, %v819
    %v821 = vsel %vm807, %v818, %v820
    %v822 = vshll.u32 %v782, 8
    %v823 = vmul.u32.u64.compose %v822, %v821
    %v824 = vextract.low.u32 %v823
    %v825 = vextract.high.u32 %v823
    %v826 = vmul.u32.u64.compose %v822, %v817
    %v827 = vextract.low.u32 %v826
    %v828 = vextract.high.u32 %v826
    %v829 = vmul.u32 %v822, %v813
    %v830 = vadd.s32 %v825, %v827
    %vm831 = vc.u32 %v825, %v827
    %v832 = vadd.s32 %v828, 1
    %v833 = vsel %vm831, %v832, %v828
    %v834 = vadd.s32 %v829, %v833
    %v835 = vadd.s32 %v834, 536870912
    %v836 = vshrl.u32 %v835, 30
    %v837 = vshll.u32 %v836, 30
    %v838 = vsub.s32 %v834, %v837
    %vm839 = vcmp.lt.s32.totalorder %v838, 0
    %v840 = vsub.s32 0, %v838
    %v841 = vsel %vm839, %v840, %v838
    %v842 = vclz %v841
    %v843 = vsub.s32 %v842, 2
    %vm844 = vcmp.gt.s32.totalorder 0, %v843
    %v845 = vsel %vm844, 0, %v843
    %v846 = vsub.s32 32, %v845
    %v847 = vshll.u32 %v838, %v845
    %v848 = vshrl.u32 %v830, %v846
    %v849 = vor.u32 %v847, %v848
    %v850 = vsub.s32 4294967266, %v845
    %v851 = vadd.s32 %v850, 127
    %v852 = vshll.u32 %v851, 23
    %v853 = vor.u32 4788187, %v852
    %v854 = vand.u32 2147483647, %v853
    %v856 = vcvt.s32.f32 %v849
    %v857 = vmul.f32 %v856, %v854
    %v858 = vxor.u32 %v857, 2147483648
    %v859 = vsel %vm776, %v858, %v857
    %v860 = vsub.s32 4, %v836
    %v861 = vsel %vm776, %v860, %v836
    %v862 = vsel %vm775, %v150, %v859
    %v863 = vsel %vm775, 0, %v861
    %v864 = vcosq.f32.pop %v862
    %v865 = vsinq.f32.pop %v862
    %vm866 = vweird.f32 %v150
    %v867 = vand.u32 %v863, 3
    %vm868 = vcmp.lt.s32.totalorder %v867, 2
    %vm869 = vcmp.eq.s32.totalorder %v867, 0
    %v870 = vxor.u32 %v865, 2147483648
    %v871 = vsel %vm869, %v864, %v870
    %vm872 = vcmp.eq.s32.totalorder %v867, 2
    %v873 = vxor.u32 %v864, 2147483648
    %v874 = vsel %vm872, %v873, %v865
    %v875 = vsel %vm868, %v871, %v874
    %v876 = vsel %vm866, nan, %v875
    %v877 = vand.u32 2147483647, %v151
    %vm878 = vcmp.le.f32.partialorder %v877, 0.7853982
    %vm879 = vcmp.lt.s32.totalorder %v151, 0
    %v880 = vand.u32 %v151, 2139095040
    %v881 = vshrl.u32 %v880, 23
    %v882 = vsub.s32 %v881, 127
    %v883 = vand.u32 2147483647, %v151
    %v884 = vand.u32 %v883, 8388607
    %v885 = vor.u32 %v884, 8388608
    %v886 = vsub.s32 0, %v885
    %v887 = vadd.s32 %v882, 1
    %vm888 = vcmp.gt.s32.totalorder %v887, 0
    %v889 = vsel %vm888, %v887, 0
    %v890 = vshrl.u32 %v889, 5
    %v891 = vand.u32 %v889, 31
    %v892 = vsub.s32 32, %v891
    %v893 = vshrl.u32 683565275, %v892
    %v894 = vshll.u32 683565275, %v891
    %v895 = vshrl.u32 2475754826, %v892
    %v896 = vor.u32 %v894, %v895
    %v897 = vshll.u32 2475754826, %v891
    %v898 = vshrl.u32 2131351028, %v892
    %v899 = vor.u32 %v897, %v898
    %v900 = vshll.u32 2131351028, %v891
    %v901 = vshrl.u32 2102212464, %v892
    %v902 = vor.u32 %v900, %v901
    %v903 = vshll.u32 2102212464, %v891
    %v904 = vshrl.u32 920167782, %v892
    %v905 = vor.u32 %v903, %v904
    %v906 = vshll.u32 920167782, %v891
    %v907 = vshrl.u32 1326507024, %v892
    %v908 = vor.u32 %v906, %v907
    %vm909 = vcmp.lt.s32.totalorder %v890, 1
    %vm910 = vcmp.lt.s32.totalorder %v890, 2
    %vm911 = vcmp.lt.s32.totalorder %v890, 3
    %vm912 = vcmp.lt.s32.totalorder %v890, 4
    %v913 = vsel %vm909, %v893, %v896
    %v914 = vsel %vm912, %v902, 2102212464
    %v915 = vsel %vm911, %v899, %v914
    %v916 = vsel %vm910, %v913, %v915
    %v917 = vsel %vm909, %v896, %v899
    %v918 = vsel %vm912, %v905, 920167782
    %v919 = vsel %vm911, %v902, %v918
    %v920 = vsel %vm910, %v917, %v919
    %v921 = vsel %vm909, %v899, %v902
    %v922 = vsel %vm912, %v908, 1326507024
    %v923 = vsel %vm911, %v905, %v922
    %v924 = vsel %vm910, %v921, %v923
    %v925 = vshll.u32 %v885, 8
    %v926 = vmul.u32.u64.compose %v925, %v924
    %v927 = vextract.low.u32 %v926
    %v928 = vextract.high.u32 %v926
    %v929 = vmul.u32.u64.compose %v925, %v920
    %v930 = vextract.low.u32 %v929
    %v931 = vextract.high.u32 %v929
    %v932 = vmul.u32 %v925, %v916
    %v933 = vadd.s32 %v928, %v930
    %vm934 = vc.u32 %v928, %v930
    %v935 = vadd.s32 %v931, 1
    %v936 = vsel %vm934, %v935, %v931
    %v937 = vadd.s32 %v932, %v936
    %v938 = vadd.s32 %v937, 536870912
    %v939 = vshrl.u32 %v938, 30
    %v940 = vshll.u32 %v939, 30
    %v941 = vsub.s32 %v937, %v940
    %vm942 = vcmp.lt.s32.totalorder %v941, 0
    %v943 = vsub.s32 0, %v941
    %v944 = vsel %vm942, %v943, %v941
    %v945 = vclz %v944
    %v946 = vsub.s32 %v945, 2
    %vm947 = vcmp.gt.s32.totalorder 0, %v946
    %v948 = vsel %vm947, 0, %v946
    %v949 = vsub.s32 32, %v948
    %v950 = vshll.u32 %v941, %v948
    %v951 = vshrl.u32 %v933, %v949
    %v952 = vor.u32 %v950, %v951
    %v953 = vsub.s32 4294967266, %v948
    %v954 = vadd.s32 %v953, 127
    %v955 = vshll.u32 %v954, 23
    %v956 = vor.u32 4788187, %v955
    %v957 = vand.u32 2147483647, %v956
    %v959 = vcvt.s32.f32 %v952
    %v960 = vmul.f32 %v959, %v957
    %v961 = vxor.u32 %v960, 2147483648
    %v962 = vsel %vm879, %v961, %v960
    %v963 = vsub.s32 4, %v939
    %v964 = vsel %vm879, %v963, %v939
    %v965 = vsel %vm878, %v151, %v962
    %v966 = vsel %vm878, 0, %v964
    %v967 = vcosq.f32.pop %v965
    %v968 = vsinq.f32.pop %v965
    %vm969 = vweird.f32 %v151
    %v970 = vand.u32 %v966, 3
    %vm971 = vcmp.lt.s32.totalorder %v970, 2
    %vm972 = vcmp.eq.s32.totalorder %v970, 0
    %v973 = vxor.u32 %v968, 2147483648
    %v974 = vsel %vm972, %v967, %v973
    %vm975 = vcmp.eq.s32.totalorder %v970, 2
    %v976 = vxor.u32 %v967, 2147483648
    %v977 = vsel %vm975, %v976, %v968
    %v978 = vsel %vm971, %v974, %v977
    %v979 = vsel %vm969, nan, %v978
    %v980 = vmul.f32 %v255, 2.0
    %v981 = vmul.f32 %v359, 2.0
    %v982 = vmul.f32 %v463, 2.0
    %v983 = vmul.f32 %v567, 2.0
    %v984 = vmul.f32 %v980, %v670
    %v985 = vmul.f32 %v981, %v773
    %v986 = vmul.f32 %v982, %v876
    %v987 = vmul.f32 %v983, %v979
    %v988 = vmul.f32 %v980, %v255
    %v989 = vmul.f32 %v981, %v359
    %v990 = vmul.f32 %v982, %v463
    %v991 = vmul.f32 %v983, %v567
    %v992 = vsub.f32 1.0, %v988
    %v993 = vsub.f32 1.0, %v989
    %v994 = vsub.f32 1.0, %v990
    %v995 = vsub.f32 1.0, %v991
    %v996 = vmul.f32 %v984, 2.0
    %v997 = vmul.f32 %v985, 2.0
    %v998 = vmul.f32 %v986, 2.0
    %v999 = vmul.f32 %v987, 2.0
    %v1000 = vmul.f32 %v996, %v992
    %v1001 = vmul.f32 %v997, %v993
    %v1002 = vmul.f32 %v998, %v994
    %v1003 = vmul.f32 %v999, %v995
    %v1004 = vmul.f32 %v996, %v984
    %v1005 = vmul.f32 %v997, %v985
    %v1006 = vmul.f32 %v998, %v986
    %v1007 = vmul.f32 %v999, %v987
    %v1008 = vsub.f32 1.0, %v1004
    %v1009 = vsub.f32 1.0, %v1005
    %v1010 = vsub.f32 1.0, %v1006
    %v1011 = vsub.f32 1.0, %v1007
    %v1012 = vmul.f32 %v1000, 2.0
    %v1013 = vmul.f32 %v1001, 2.0
    %v1014 = vmul.f32 %v1002, 2.0
    %v1015 = vmul.f32 %v1003, 2.0
    %v1016 = vmul.f32 %v1012, %v1008
    %v1017 = vmul.f32 %v1013, %v1009
    %v1018 = vmul.f32 %v1014, %v1010
    %v1019 = vmul.f32 %v1015, %v1011
    %v1020 = vmul.f32 %v1012, %v1000
    %v1021 = vmul.f32 %v1013, %v1001
    %v1022 = vmul.f32 %v1014, %v1002
    %v1023 = vmul.f32 %v1015, %v1003
    %v1024 = vsub.f32 1.0, %v1020
    %v1025 = vsub.f32 1.0, %v1021
    %v1026 = vsub.f32 1.0, %v1022
    %v1027 = vsub.f32 1.0, %v1023
    %v1028 = vmul.f32 %v126, 0.125
    %v1029 = vmul.f32 %v133, 0.125
    %v1030 = vmul.f32 %v140, 0.125
    %v1031 = vmul.f32 %v147, 0.125
    %v1032 = vand.u32 2147483647, %v1028
    %vm1033 = vcmp.le.f32.partialorder %v1032, 0.7853982
    %vm1034 = vcmp.lt.s32.totalorder %v1028, 0
    %v1035 = vand.u32 %v1028, 2139095040
    %v1036 = vshrl.u32 %v1035, 23
    %v1037 = vsub.s32 %v1036, 127
    %v1038 = vand.u32 2147483647, %v1028
    %v1039 = vand.u32 %v1038, 8388607
    %v1040 = vor.u32 %v1039, 8388608
    %v1041 = vsub.s32 0, %v1040
    %v1042 = vadd.s32 %v1037, 1
    %vm1043 = vcmp.gt.s32.totalorder %v1042, 0
    %v1044 = vsel %vm1043, %v1042, 0
    %v1045 = vshrl.u32 %v1044, 5
    %v1046 = vand.u32 %v1044, 31
    %v1047 = vsub.s32 32, %v1046
    %v1048 = vshrl.u32 683565275, %v1047
    %v1049 = vshll.u32 683565275, %v1046
    %v1050 = vshrl.u32 2475754826, %v1047
    %v1051 = vor.u32 %v1049, %v1050
    %v1052 = vshll.u32 2475754826, %v1046
    %v1053 = vshrl.u32 2131351028, %v1047
    %v1054 = vor.u32 %v1052, %v1053
    %v1055 = vshll.u32 2131351028, %v1046
    %v1056 = vshrl.u32 2102212464, %v1047
    %v1057 = vor.u32 %v1055, %v1056
    %v1058 = vshll.u32 2102212464, %v1046
    %v1059 = vshrl.u32 920167782, %v1047
    %v1060 = vor.u32 %v1058, %v1059
    %v1061 = vshll.u32 920167782, %v1046
    %v1062 = vshrl.u32 1326507024, %v1047
    %v1063 = vor.u32 %v1061, %v1062
    %vm1064 = vcmp.lt.s32.totalorder %v1045, 1
    %vm1065 = vcmp.lt.s32.totalorder %v1045, 2
    %vm1066 = vcmp.lt.s32.totalorder %v1045, 3
    %vm1067 = vcmp.lt.s32.totalorder %v1045, 4
    %v1068 = vsel %vm1064, %v1048, %v1051
    %v1069 = vsel %vm1067, %v1057, 2102212464
    %v1070 = vsel %vm1066, %v1054, %v1069
    %v1071 = vsel %vm1065, %v1068, %v1070
    %v1072 = vsel %vm1064, %v1051, %v1054
    %v1073 = vsel %vm1067, %v1060, 920167782
    %v1074 = vsel %vm1066, %v1057, %v1073
    %v1075 = vsel %vm1065, %v1072, %v1074
    %v1076 = vsel %vm1064, %v1054, %v1057
    %v1077 = vsel %vm1067, %v1063, 1326507024
    %v1078 = vsel %vm1066, %v1060, %v1077
    %v1079 = vsel %vm1065, %v1076, %v1078
    %v1080 = vshll.u32 %v1040, 8
    %v1081 = vmul.u32.u64.compose %v1080, %v1079
    %v1082 = vextract.low.u32 %v1081
    %v1083 = vextract.high.u32 %v1081
    %v1084 = vmul.u32.u64.compose %v1080, %v1075
    %v1085 = vextract.low.u32 %v1084
    %v1086 = vextract.high.u32 %v1084
    %v1087 = vmul.u32 %v1080, %v1071
    %v1088 = vadd.s32 %v1083, %v1085
    %vm1089 = vc.u32 %v1083, %v1085
    %v1090 = vadd.s32 %v1086, 1
    %v1091 = vsel %vm1089, %v1090, %v1086
    %v1092 = vadd.s32 %v1087, %v1091
    %v1093 = vadd.s32 %v1092, 536870912
    %v1094 = vshrl.u32 %v1093, 30
    %v1095 = vshll.u32 %v1094, 30
    %v1096 = vsub.s32 %v1092, %v1095
    %vm1097 = vcmp.lt.s32.totalorder %v1096, 0
    %v1098 = vsub.s32 0, %v1096
    %v1099 = vsel %vm1097, %v1098, %v1096
    %v1100 = vclz %v1099
    %v1101 = vsub.s32 %v1100, 2
    %vm1102 = vcmp.gt.s32.totalorder 0, %v1101
    %v1103 = vsel %vm1102, 0, %v1101
    %v1104 = vsub.s32 32, %v1103
    %v1105 = vshll.u32 %v1096, %v1103
    %v1106 = vshrl.u32 %v1088, %v1104
    %v1107 = vor.u32 %v1105, %v1106
    %v1108 = vsub.s32 4294967266, %v1103
    %v1109 = vadd.s32 %v1108, 127
    %v1110 = vshll.u32 %v1109, 23
    %v1111 = vor.u32 4788187, %v1110
    %v1112 = vand.u32 2147483647, %v1111
    %v1114 = vcvt.s32.f32 %v1107
    %v1115 = vmul.f32 %v1114, %v1112
    %v1116 = vxor.u32 %v1115, 2147483648
    %v1117 = vsel %vm1034, %v1116, %v1115
    %v1118 = vsub.s32 4, %v1094
    %v1119 = vsel %vm1034, %v1118, %v1094
    %v1120 = vsel %vm1033, %v1028, %v1117
    %v1121 = vsel %vm1033, 0, %v1119
    %v1122 = vcosq.f32.pop %v1120
    %v1123 = vsinq.f32.pop %v1120
    %vm1124 = vweird.f32 %v1028
    %v1125 = vadd.s32 %v1121, 3
    %v1126 = vand.u32 %v1125, 3
    %vm1127 = vcmp.lt.s32.totalorder %v1126, 2
    %vm1128 = vcmp.eq.s32.totalorder %v1126, 0
    %v1129 = vxor.u32 %v1123, 2147483648
    %v1130 = vsel %vm1128, %v1122, %v1129
    %vm1131 = vcmp.eq.s32.totalorder %v1126, 2
    %v1132 = vxor.u32 %v1122, 2147483648
    %v1133 = vsel %vm1131, %v1132, %v1123
    %v1134 = vsel %vm1127, %v1130, %v1133
    %v1135 = vsel %vm1124, nan, %v1134
    %v1136 = vand.u32 2147483647, %v1029
    %vm1137 = vcmp.le.f32.partialorder %v1136, 0.7853982
    %vm1138 = vcmp.lt.s32.totalorder %v1029, 0
    %v1139 = vand.u32 %v1029, 2139095040
    %v1140 = vshrl.u32 %v1139, 23
    %v1141 = vsub.s32 %v1140, 127
    %v1142 = vand.u32 2147483647, %v1029
    %v1143 = vand.u32 %v1142, 8388607
    %v1144 = vor.u32 %v1143, 8388608
    %v1145 = vsub.s32 0, %v1144
    %v1146 = vadd.s32 %v1141, 1
    %vm1147 = vcmp.gt.s32.totalorder %v1146, 0
    %v1148 = vsel %vm1147, %v1146, 0
    %v1149 = vshrl.u32 %v1148, 5
    %v1150 = vand.u32 %v1148, 31
    %v1151 = vsub.s32 32, %v1150
    %v1152 = vshrl.u32 683565275, %v1151
    %v1153 = vshll.u32 683565275, %v1150
    %v1154 = vshrl.u32 2475754826, %v1151
    %v1155 = vor.u32 %v1153, %v1154
    %v1156 = vshll.u32 2475754826, %v1150
    %v1157 = vshrl.u32 2131351028, %v1151
    %v1158 = vor.u32 %v1156, %v1157
    %v1159 = vshll.u32 2131351028, %v1150
    %v1160 = vshrl.u32 2102212464, %v1151
    %v1161 = vor.u32 %v1159, %v1160
    %v1162 = vshll.u32 2102212464, %v1150
    %v1163 = vshrl.u32 920167782, %v1151
    %v1164 = vor.u32 %v1162, %v1163
    %v1165 = vshll.u32 920167782, %v1150
    %v1166 = vshrl.u32 1326507024, %v1151
    %v1167 = vor.u32 %v1165, %v1166
    %vm1168 = vcmp.lt.s32.totalorder %v1149, 1
    %vm1169 = vcmp.lt.s32.totalorder %v1149, 2
    %vm1170 = vcmp.lt.s32.totalorder %v1149, 3
    %vm1171 = vcmp.lt.s32.totalorder %v1149, 4
    %v1172 = vsel %vm1168, %v1152, %v1155
    %v1173 = vsel %vm1171, %v1161, 2102212464
    %v1174 = vsel %vm1170, %v1158, %v1173
    %v1175 = vsel %vm1169, %v1172, %v1174
    %v1176 = vsel %vm1168, %v1155, %v1158
    %v1177 = vsel %vm1171, %v1164, 920167782
    %v1178 = vsel %vm1170, %v1161, %v1177
    %v1179 = vsel %vm1169, %v1176, %v1178
    %v1180 = vsel %vm1168, %v1158, %v1161
    %v1181 = vsel %vm1171, %v1167, 1326507024
    %v1182 = vsel %vm1170, %v1164, %v1181
    %v1183 = vsel %vm1169, %v1180, %v1182
    %v1184 = vshll.u32 %v1144, 8
    %v1185 = vmul.u32.u64.compose %v1184, %v1183
    %v1186 = vextract.low.u32 %v1185
    %v1187 = vextract.high.u32 %v1185
    %v1188 = vmul.u32.u64.compose %v1184, %v1179
    %v1189 = vextract.low.u32 %v1188
    %v1190 = vextract.high.u32 %v1188
    %v1191 = vmul.u32 %v1184, %v1175
    %v1192 = vadd.s32 %v1187, %v1189
    %vm1193 = vc.u32 %v1187, %v1189
    %v1194 = vadd.s32 %v1190, 1
    %v1195 = vsel %vm1193, %v1194, %v1190
    %v1196 = vadd.s32 %v1191, %v1195
    %v1197 = vadd.s32 %v1196, 536870912
    %v1198 = vshrl.u32 %v1197, 30
    %v1199 = vshll.u32 %v1198, 30
    %v1200 = vsub.s32 %v1196, %v1199
    %vm1201 = vcmp.lt.s32.totalorder %v1200, 0
    %v1202 = vsub.s32 0, %v1200
    %v1203 = vsel %vm1201, %v1202, %v1200
    %v1204 = vclz %v1203
    %v1205 = vsub.s32 %v1204, 2
    %vm1206 = vcmp.gt.s32.totalorder 0, %v1205
    %v1207 = vsel %vm1206, 0, %v1205
    %v1208 = vsub.s32 32, %v1207
    %v1209 = vshll.u32 %v1200, %v1207
    %v1210 = vshrl.u32 %v1192, %v1208
    %v1211 = vor.u32 %v1209, %v1210
    %v1212 = vsub.s32 4294967266, %v1207
    %v1213 = vadd.s32 %v1212, 127
    %v1214 = vshll.u32 %v1213, 23
    %v1215 = vor.u32 4788187, %v1214
    %v1216 = vand.u32 2147483647, %v1215
    %v1218 = vcvt.s32.f32 %v1211
    %v1219 = vmul.f32 %v1218, %v1216
    %v1220 = vxor.u32 %v1219, 2147483648
    %v1221 = vsel %vm1138, %v1220, %v1219
    %v1222 = vsub.s32 4, %v1198
    %v1223 = vsel %vm1138, %v1222, %v1198
    %v1224 = vsel %vm1137, %v1029, %v1221
    %v1225 = vsel %vm1137, 0, %v1223
    %v1226 = vcosq.f32.pop %v1224
    %v1227 = vsinq.f32.pop %v1224
    %vm1228 = vweird.f32 %v1029
    %v1229 = vadd.s32 %v1225, 3
    %v1230 = vand.u32 %v1229, 3
    %vm1231 = vcmp.lt.s32.totalorder %v1230, 2
    %vm1232 = vcmp.eq.s32.totalorder %v1230, 0
    %v1233 = vxor.u32 %v1227, 2147483648
    %v1234 = vsel %vm1232, %v1226, %v1233
    %vm1235 = vcmp.eq.s32.totalorder %v1230, 2
    %v1236 = vxor.u32 %v1226, 2147483648
    %v1237 = vsel %vm1235, %v1236, %v1227
    %v1238 = vsel %vm1231, %v1234, %v1237
    %v1239 = vsel %vm1228, nan, %v1238
    %v1240 = vand.u32 2147483647, %v1030
    %vm1241 = vcmp.le.f32.partialorder %v1240, 0.7853982
    %vm1242 = vcmp.lt.s32.totalorder %v1030, 0
    %v1243 = vand.u32 %v1030, 2139095040
    %v1244 = vshrl.u32 %v1243, 23
    %v1245 = vsub.s32 %v1244, 127
    %v1246 = vand.u32 2147483647, %v1030
    %v1247 = vand.u32 %v1246, 8388607
    %v1248 = vor.u32 %v1247, 8388608
    %v1249 = vsub.s32 0, %v1248
    %v1250 = vadd.s32 %v1245, 1
    %vm1251 = vcmp.gt.s32.totalorder %v1250, 0
    %v1252 = vsel %vm1251, %v1250, 0
    %v1253 = vshrl.u32 %v1252, 5
    %v1254 = vand.u32 %v1252, 31
    %v1255 = vsub.s32 32, %v1254
    %v1256 = vshrl.u32 683565275, %v1255
    %v1257 = vshll.u32 683565275, %v1254
    %v1258 = vshrl.u32 2475754826, %v1255
    %v1259 = vor.u32 %v1257, %v1258
    %v1260 = vshll.u32 2475754826, %v1254
    %v1261 = vshrl.u32 2131351028, %v1255
    %v1262 = vor.u32 %v1260, %v1261
    %v1263 = vshll.u32 2131351028, %v1254
    %v1264 = vshrl.u32 2102212464, %v1255
    %v1265 = vor.u32 %v1263, %v1264
    %v1266 = vshll.u32 2102212464, %v1254
    %v1267 = vshrl.u32 920167782, %v1255
    %v1268 = vor.u32 %v1266, %v1267
    %v1269 = vshll.u32 920167782, %v1254
    %v1270 = vshrl.u32 1326507024, %v1255
    %v1271 = vor.u32 %v1269, %v1270
    %vm1272 = vcmp.lt.s32.totalorder %v1253, 1
    %vm1273 = vcmp.lt.s32.totalorder %v1253, 2
    %vm1274 = vcmp.lt.s32.totalorder %v1253, 3
    %vm1275 = vcmp.lt.s32.totalorder %v1253, 4
    %v1276 = vsel %vm1272, %v1256, %v1259
    %v1277 = vsel %vm1275, %v1265, 2102212464
    %v1278 = vsel %vm1274, %v1262, %v1277
    %v1279 = vsel %vm1273, %v1276, %v1278
    %v1280 = vsel %vm1272, %v1259, %v1262
    %v1281 = vsel %vm1275, %v1268, 920167782
    %v1282 = vsel %vm1274, %v1265, %v1281
    %v1283 = vsel %vm1273, %v1280, %v1282
    %v1284 = vsel %vm1272, %v1262, %v1265
    %v1285 = vsel %vm1275, %v1271, 1326507024
    %v1286 = vsel %vm1274, %v1268, %v1285
    %v1287 = vsel %vm1273, %v1284, %v1286
    %v1288 = vshll.u32 %v1248, 8
    %v1289 = vmul.u32.u64.compose %v1288, %v1287
    %v1290 = vextract.low.u32 %v1289
    %v1291 = vextract.high.u32 %v1289
    %v1292 = vmul.u32.u64.compose %v1288, %v1283
    %v1293 = vextract.low.u32 %v1292
    %v1294 = vextract.high.u32 %v1292
    %v1295 = vmul.u32 %v1288, %v1279
    %v1296 = vadd.s32 %v1291, %v1293
    %vm1297 = vc.u32 %v1291, %v1293
    %v1298 = vadd.s32 %v1294, 1
    %v1299 = vsel %vm1297, %v1298, %v1294
    %v1300 = vadd.s32 %v1295, %v1299
    %v1301 = vadd.s32 %v1300, 536870912
    %v1302 = vshrl.u32 %v1301, 30
    %v1303 = vshll.u32 %v1302, 30
    %v1304 = vsub.s32 %v1300, %v1303
    %vm1305 = vcmp.lt.s32.totalorder %v1304, 0
    %v1306 = vsub.s32 0, %v1304
    %v1307 = vsel %vm1305, %v1306, %v1304
    %v1308 = vclz %v1307
    %v1309 = vsub.s32 %v1308, 2
    %vm1310 = vcmp.gt.s32.totalorder 0, %v1309
    %v1311 = vsel %vm1310, 0, %v1309
    %v1312 = vsub.s32 32, %v1311
    %v1313 = vshll.u32 %v1304, %v1311
    %v1314 = vshrl.u32 %v1296, %v1312
    %v1315 = vor.u32 %v1313, %v1314
    %v1316 = vsub.s32 4294967266, %v1311
    %v1317 = vadd.s32 %v1316, 127
    %v1318 = vshll.u32 %v1317, 23
    %v1319 = vor.u32 4788187, %v1318
    %v1320 = vand.u32 2147483647, %v1319
    %v1322 = vcvt.s32.f32 %v1315
    %v1323 = vmul.f32 %v1322, %v1320
    %v1324 = vxor.u32 %v1323, 2147483648
    %v1325 = vsel %vm1242, %v1324, %v1323
    %v1326 = vsub.s32 4, %v1302
    %v1327 = vsel %vm1242, %v1326, %v1302
    %v1328 = vsel %vm1241, %v1030, %v1325
    %v1329 = vsel %vm1241, 0, %v1327
    %v1330 = vcosq.f32.pop %v1328
    %v1331 = vsinq.f32.pop %v1328
    %vm1332 = vweird.f32 %v1030
    %v1333 = vadd.s32 %v1329, 3
    %v1334 = vand.u32 %v1333, 3
    %vm1335 = vcmp.lt.s32.totalorder %v1334, 2
    %vm1336 = vcmp.eq.s32.totalorder %v1334, 0
    %v1337 = vxor.u32 %v1331, 2147483648
    %v1338 = vsel %vm1336, %v1330, %v1337
    %vm1339 = vcmp.eq.s32.totalorder %v1334, 2
    %v1340 = vxor.u32 %v1330, 2147483648
    %v1341 = vsel %vm1339, %v1340, %v1331
    %v1342 = vsel %vm1335, %v1338, %v1341
    %v1343 = vsel %vm1332, nan, %v1342
    %v1344 = vand.u32 2147483647, %v1031
    %vm1345 = vcmp.le.f32.partialorder %v1344, 0.7853982
    %vm1346 = vcmp.lt.s32.totalorder %v1031, 0
    %v1347 = vand.u32 %v1031, 2139095040
    %v1348 = vshrl.u32 %v1347, 23
    %v1349 = vsub.s32 %v1348, 127
    %v1350 = vand.u32 2147483647, %v1031
    %v1351 = vand.u32 %v1350, 8388607
    %v1352 = vor.u32 %v1351, 8388608
    %v1353 = vsub.s32 0, %v1352
    %v1354 = vadd.s32 %v1349, 1
    %vm1355 = vcmp.gt.s32.totalorder %v1354, 0
    %v1356 = vsel %vm1355, %v1354, 0
    %v1357 = vshrl.u32 %v1356, 5
    %v1358 = vand.u32 %v1356, 31
    %v1359 = vsub.s32 32, %v1358
    %v1360 = vshrl.u32 683565275, %v1359
    %v1361 = vshll.u32 683565275, %v1358
    %v1362 = vshrl.u32 2475754826, %v1359
    %v1363 = vor.u32 %v1361, %v1362
    %v1364 = vshll.u32 2475754826, %v1358
    %v1365 = vshrl.u32 2131351028, %v1359
    %v1366 = vor.u32 %v1364, %v1365
    %v1367 = vshll.u32 2131351028, %v1358
    %v1368 = vshrl.u32 2102212464, %v1359
    %v1369 = vor.u32 %v1367, %v1368
    %v1370 = vshll.u32 2102212464, %v1358
    %v1371 = vshrl.u32 920167782, %v1359
    %v1372 = vor.u32 %v1370, %v1371
    %v1373 = vshll.u32 920167782, %v1358
    %v1374 = vshrl.u32 1326507024, %v1359
    %v1375 = vor.u32 %v1373, %v1374
    %vm1376 = vcmp.lt.s32.totalorder %v1357, 1
    %vm1377 = vcmp.lt.s32.totalorder %v1357, 2
    %vm1378 = vcmp.lt.s32.totalorder %v1357, 3
    %vm1379 = vcmp.lt.s32.totalorder %v1357, 4
    %v1380 = vsel %vm1376, %v1360, %v1363
    %v1381 = vsel %vm1379, %v1369, 2102212464
    %v1382 = vsel %vm1378, %v1366, %v1381
    %v1383 = vsel %vm1377, %v1380, %v1382
    %v1384 = vsel %vm1376, %v1363, %v1366
    %v1385 = vsel %vm1379, %v1372, 920167782
    %v1386 = vsel %vm1378, %v1369, %v1385
    %v1387 = vsel %vm1377, %v1384, %v1386
    %v1388 = vsel %vm1376, %v1366, %v1369
    %v1389 = vsel %vm1379, %v1375, 1326507024
    %v1390 = vsel %vm1378, %v1372, %v1389
    %v1391 = vsel %vm1377, %v1388, %v1390
    %v1392 = vshll.u32 %v1352, 8
    %v1393 = vmul.u32.u64.compose %v1392, %v1391
    %v1394 = vextract.low.u32 %v1393
    %v1395 = vextract.high.u32 %v1393
    %v1396 = vmul.u32.u64.compose %v1392, %v1387
    %v1397 = vextract.low.u32 %v1396
    %v1398 = vextract.high.u32 %v1396
    %v1399 = vmul.u32 %v1392, %v1383
    %v1400 = vadd.s32 %v1395, %v1397
    %vm1401 = vc.u32 %v1395, %v1397
    %v1402 = vadd.s32 %v1398, 1
    %v1403 = vsel %vm1401, %v1402, %v1398
    %v1404 = vadd.s32 %v1399, %v1403
    %v1405 = vadd.s32 %v1404, 536870912
    %v1406 = vshrl.u32 %v1405, 30
    %v1407 = vshll.u32 %v1406, 30
    %v1408 = vsub.s32 %v1404, %v1407
    %vm1409 = vcmp.lt.s32.totalorder %v1408, 0
    %v1410 = vsub.s32 0, %v1408
    %v1411 = vsel %vm1409, %v1410, %v1408
    %v1412 = vclz %v1411
    %v1413 = vsub.s32 %v1412, 2
    %vm1414 = vcmp.gt.s32.totalorder 0, %v1413
    %v1415 = vsel %vm1414, 0, %v1413
    %v1416 = vsub.s32 32, %v1415
    %v1417 = vshll.u32 %v1408, %v1415
    %v1418 = vshrl.u32 %v1400, %v1416
    %v1419 = vor.u32 %v1417, %v1418
    %v1420 = vsub.s32 4294967266, %v1415
    %v1421 = vadd.s32 %v1420, 127
    %v1422 = vshll.u32 %v1421, 23
    %v1423 = vor.u32 4788187, %v1422
    %v1424 = vand.u32 2147483647, %v1423
    %v1426 = vcvt.s32.f32 %v1419
    %v1427 = vmul.f32 %v1426, %v1424
    %v1428 = vxor.u32 %v1427, 2147483648
    %v1429 = vsel %vm1346, %v1428, %v1427
    %v1430 = vsub.s32 4, %v1406
    %v1431 = vsel %vm1346, %v1430, %v1406
    %v1432 = vsel %vm1345, %v1031, %v1429
    %v1433 = vsel %vm1345, 0, %v1431
    %v1434 = vcosq.f32.pop %v1432
    %v1435 = vsinq.f32.pop %v1432
    %vm1436 = vweird.f32 %v1031
    %v1437 = vadd.s32 %v1433, 3
    %v1438 = vand.u32 %v1437, 3
    %vm1439 = vcmp.lt.s32.totalorder %v1438, 2
    %vm1440 = vcmp.eq.s32.totalorder %v1438, 0
    %v1441 = vxor.u32 %v1435, 2147483648
    %v1442 = vsel %vm1440, %v1434, %v1441
    %vm1443 = vcmp.eq.s32.totalorder %v1438, 2
    %v1444 = vxor.u32 %v1434, 2147483648
    %v1445 = vsel %vm1443, %v1444, %v1435
    %v1446 = vsel %vm1439, %v1442, %v1445
    %v1447 = vsel %vm1436, nan, %v1446
    %v1448 = vand.u32 2147483647, %v1028
    %vm1449 = vcmp.le.f32.partialorder %v1448, 0.7853982
    %vm1450 = vcmp.lt.s32.totalorder %v1028, 0
    %v1451 = vand.u32 %v1028, 2139095040
    %v1452 = vshrl.u32 %v1451, 23
    %v1453 = vsub.s32 %v1452, 127
    %v1454 = vand.u32 2147483647, %v1028
    %v1455 = vand.u32 %v1454, 8388607
    %v1456 = vor.u32 %v1455, 8388608
    %v1457 = vsub.s32 0, %v1456
    %v1458 = vadd.s32 %v1453, 1
    %vm1459 = vcmp.gt.s32.totalorder %v1458, 0
    %v1460 = vsel %vm1459, %v1458, 0
    %v1461 = vshrl.u32 %v1460, 5
    %v1462 = vand.u32 %v1460, 31
    %v1463 = vsub.s32 32, %v1462
    %v1464 = vshrl.u32 683565275, %v1463
    %v1465 = vshll.u32 683565275, %v1462
    %v1466 = vshrl.u32 2475754826, %v1463
    %v1467 = vor.u32 %v1465, %v1466
    %v1468 = vshll.u32 2475754826, %v1462
    %v1469 = vshrl.u32 2131351028, %v1463
    %v1470 = vor.u32 %v1468, %v1469
    %v1471 = vshll.u32 2131351028, %v1462
    %v1472 = vshrl.u32 2102212464, %v1463
    %v1473 = vor.u32 %v1471, %v1472
    %v1474 = vshll.u32 2102212464, %v1462
    %v1475 = vshrl.u32 920167782, %v1463
    %v1476 = vor.u32 %v1474, %v1475
    %v1477 = vshll.u32 920167782, %v1462
    %v1478 = vshrl.u32 1326507024, %v1463
    %v1479 = vor.u32 %v1477, %v1478
    %vm1480 = vcmp.lt.s32.totalorder %v1461, 1
    %vm1481 = vcmp.lt.s32.totalorder %v1461, 2
    %vm1482 = vcmp.lt.s32.totalorder %v1461, 3
    %vm1483 = vcmp.lt.s32.totalorder %v1461, 4
    %v1484 = vsel %vm1480, %v1464, %v1467
    %v1485 = vsel %vm1483, %v1473, 2102212464
    %v1486 = vsel %vm1482, %v1470, %v1485
    %v1487 = vsel %vm1481, %v1484, %v1486
    %v1488 = vsel %vm1480, %v1467, %v1470
    %v1489 = vsel %vm1483, %v1476, 920167782
    %v1490 = vsel %vm1482, %v1473, %v1489
    %v1491 = vsel %vm1481, %v1488, %v1490
    %v1492 = vsel %vm1480, %v1470, %v1473
    %v1493 = vsel %vm1483, %v1479, 1326507024
    %v1494 = vsel %vm1482, %v1476, %v1493
    %v1495 = vsel %vm1481, %v1492, %v1494
    %v1496 = vshll.u32 %v1456, 8
    %v1497 = vmul.u32.u64.compose %v1496, %v1495
    %v1498 = vextract.low.u32 %v1497
    %v1499 = vextract.high.u32 %v1497
    %v1500 = vmul.u32.u64.compose %v1496, %v1491
    %v1501 = vextract.low.u32 %v1500
    %v1502 = vextract.high.u32 %v1500
    %v1503 = vmul.u32 %v1496, %v1487
    %v1504 = vadd.s32 %v1499, %v1501
    %vm1505 = vc.u32 %v1499, %v1501
    %v1506 = vadd.s32 %v1502, 1
    %v1507 = vsel %vm1505, %v1506, %v1502
    %v1508 = vadd.s32 %v1503, %v1507
    %v1509 = vadd.s32 %v1508, 536870912
    %v1510 = vshrl.u32 %v1509, 30
    %v1511 = vshll.u32 %v1510, 30
    %v1512 = vsub.s32 %v1508, %v1511
    %vm1513 = vcmp.lt.s32.totalorder %v1512, 0
    %v1514 = vsub.s32 0, %v1512
    %v1515 = vsel %vm1513, %v1514, %v1512
    %v1516 = vclz %v1515
    %v1517 = vsub.s32 %v1516, 2
    %vm1518 = vcmp.gt.s32.totalorder 0, %v1517
    %v1519 = vsel %vm1518, 0, %v1517
    %v1520 = vsub.s32 32, %v1519
    %v1521 = vshll.u32 %v1512, %v1519
    %v1522 = vshrl.u32 %v1504, %v1520
    %v1523 = vor.u32 %v1521, %v1522
    %v1524 = vsub.s32 4294967266, %v1519
    %v1525 = vadd.s32 %v1524, 127
    %v1526 = vshll.u32 %v1525, 23
    %v1527 = vor.u32 4788187, %v1526
    %v1528 = vand.u32 2147483647, %v1527
    %v1530 = vcvt.s32.f32 %v1523
    %v1531 = vmul.f32 %v1530, %v1528
    %v1532 = vxor.u32 %v1531, 2147483648
    %v1533 = vsel %vm1450, %v1532, %v1531
    %v1534 = vsub.s32 4, %v1510
    %v1535 = vsel %vm1450, %v1534, %v1510
    %v1536 = vsel %vm1449, %v1028, %v1533
    %v1537 = vsel %vm1449, 0, %v1535
    %v1538 = vcosq.f32.pop %v1536
    %v1539 = vsinq.f32.pop %v1536
    %vm1540 = vweird.f32 %v1028
    %v1541 = vand.u32 %v1537, 3
    %vm1542 = vcmp.lt.s32.totalorder %v1541, 2
    %vm1543 = vcmp.eq.s32.totalorder %v1541, 0
    %v1544 = vxor.u32 %v1539, 2147483648
    %v1545 = vsel %vm1543, %v1538, %v1544
    %vm1546 = vcmp.eq.s32.totalorder %v1541, 2
    %v1547 = vxor.u32 %v1538, 2147483648
    %v1548 = vsel %vm1546, %v1547, %v1539
    %v1549 = vsel %vm1542, %v1545, %v1548
    %v1550 = vsel %vm1540, nan, %v1549
    %v1551 = vand.u32 2147483647, %v1029
    %vm1552 = vcmp.le.f32.partialorder %v1551, 0.7853982
    %vm1553 = vcmp.lt.s32.totalorder %v1029, 0
    %v1554 = vand.u32 %v1029, 2139095040
    %v1555 = vshrl.u32 %v1554, 23
    %v1556 = vsub.s32 %v1555, 127
    %v1557 = vand.u32 2147483647, %v1029
    %v1558 = vand.u32 %v1557, 8388607
    %v1559 = vor.u32 %v1558, 8388608
    %v1560 = vsub.s32 0, %v1559
    %v1561 = vadd.s32 %v1556, 1
    %vm1562 = vcmp.gt.s32.totalorder %v1561, 0
    %v1563 = vsel %vm1562, %v1561, 0
    %v1564 = vshrl.u32 %v1563, 5
    %v1565 = vand.u32 %v1563, 31
    %v1566 = vsub.s32 32, %v1565
    %v1567 = vshrl.u32 683565275, %v1566
    %v1568 = vshll.u32 683565275, %v1565
    %v1569 = vshrl.u32 2475754826, %v1566
    %v1570 = vor.u32 %v1568, %v1569
    %v1571 = vshll.u32 2475754826, %v1565
    %v1572 = vshrl.u32 2131351028, %v1566
    %v1573 = vor.u32 %v1571, %v1572
    %v1574 = vshll.u32 2131351028, %v1565
    %v1575 = vshrl.u32 2102212464, %v1566
    %v1576 = vor.u32 %v1574, %v1575
    %v1577 = vshll.u32 2102212464, %v1565
    %v1578 = vshrl.u32 920167782, %v1566
    %v1579 = vor.u32 %v1577, %v1578
    %v1580 = vshll.u32 920167782, %v1565
    %v1581 = vshrl.u32 1326507024, %v1566
    %v1582 = vor.u32 %v1580, %v1581
    %vm1583 = vcmp.lt.s32.totalorder %v1564, 1
    %vm1584 = vcmp.lt.s32.totalorder %v1564, 2
    %vm1585 = vcmp.lt.s32.totalorder %v1564, 3
    %vm1586 = vcmp.lt.s32.totalorder %v1564, 4
    %v1587 = vsel %vm1583, %v1567, %v1570
    %v1588 = vsel %vm1586, %v1576, 2102212464
    %v1589 = vsel %vm1585, %v1573, %v1588
    %v1590 = vsel %vm1584, %v1587, %v1589
    %v1591 = vsel %vm1583, %v1570, %v1573
    %v1592 = vsel %vm1586, %v1579, 920167782
    %v1593 = vsel %vm1585, %v1576, %v1592
    %v1594 = vsel %vm1584, %v1591, %v1593
    %v1595 = vsel %vm1583, %v1573, %v1576
    %v1596 = vsel %vm1586, %v1582, 1326507024
    %v1597 = vsel %vm1585, %v1579, %v1596
    %v1598 = vsel %vm1584, %v1595, %v1597
    %v1599 = vshll.u32 %v1559, 8
    %v1600 = vmul.u32.u64.compose %v1599, %v1598
    %v1601 = vextract.low.u32 %v1600
    %v1602 = vextract.high.u32 %v1600
    %v1603 = vmul.u32.u64.compose %v1599, %v1594
    %v1604 = vextract.low.u32 %v1603
    %v1605 = vextract.high.u32 %v1603
    %v1606 = vmul.u32 %v1599, %v1590
    %v1607 = vadd.s32 %v1602, %v1604
    %vm1608 = vc.u32 %v1602, %v1604
    %v1609 = vadd.s32 %v1605, 1
    %v1610 = vsel %vm1608, %v1609, %v1605
    %v1611 = vadd.s32 %v1606, %v1610
    %v1612 = vadd.s32 %v1611, 536870912
    %v1613 = vshrl.u32 %v1612, 30
    %v1614 = vshll.u32 %v1613, 30
    %v1615 = vsub.s32 %v1611, %v1614
    %vm1616 = vcmp.lt.s32.totalorder %v1615, 0
    %v1617 = vsub.s32 0, %v1615
    %v1618 = vsel %vm1616, %v1617, %v1615
    %v1619 = vclz %v1618
    %v1620 = vsub.s32 %v1619, 2
    %vm1621 = vcmp.gt.s32.totalorder 0, %v1620
    %v1622 = vsel %vm1621, 0, %v1620
    %v1623 = vsub.s32 32, %v1622
    %v1624 = vshll.u32 %v1615, %v1622
    %v1625 = vshrl.u32 %v1607, %v1623
    %v1626 = vor.u32 %v1624, %v1625
    %v1627 = vsub.s32 4294967266, %v1622
    %v1628 = vadd.s32 %v1627, 127
    %v1629 = vshll.u32 %v1628, 23
    %v1630 = vor.u32 4788187, %v1629
    %v1631 = vand.u32 2147483647, %v1630
    %v1633 = vcvt.s32.f32 %v1626
    %v1634 = vmul.f32 %v1633, %v1631
    %v1635 = vxor.u32 %v1634, 2147483648
    %v1636 = vsel %vm1553, %v1635, %v1634
    %v1637 = vsub.s32 4, %v1613
    %v1638 = vsel %vm1553, %v1637, %v1613
    %v1639 = vsel %vm1552, %v1029, %v1636
    %v1640 = vsel %vm1552, 0, %v1638
    %v1641 = vcosq.f32.pop %v1639
    %v1642 = vsinq.f32.pop %v1639
    %vm1643 = vweird.f32 %v1029
    %v1644 = vand.u32 %v1640, 3
    %vm1645 = vcmp.lt.s32.totalorder %v1644, 2
    %vm1646 = vcmp.eq.s32.totalorder %v1644, 0
    %v1647 = vxor.u32 %v1642, 2147483648
    %v1648 = vsel %vm1646, %v1641, %v1647
    %vm1649 = vcmp.eq.s32.totalorder %v1644, 2
    %v1650 = vxor.u32 %v1641, 2147483648
    %v1651 = vsel %vm1649, %v1650, %v1642
    %v1652 = vsel %vm1645, %v1648, %v1651
    %v1653 = vsel %vm1643, nan, %v1652
    %v1654 = vand.u32 2147483647, %v1030
    %vm1655 = vcmp.le.f32.partialorder %v1654, 0.7853982
    %vm1656 = vcmp.lt.s32.totalorder %v1030, 0
    %v1657 = vand.u32 %v1030, 2139095040
    %v1658 = vshrl.u32 %v1657, 23
    %v1659 = vsub.s32 %v1658, 127
    %v1660 = vand.u32 2147483647, %v1030
    %v1661 = vand.u32 %v1660, 8388607
    %v1662 = vor.u32 %v1661, 8388608
    %v1663 = vsub.s32 0, %v1662
    %v1664 = vadd.s32 %v1659, 1
    %vm1665 = vcmp.gt.s32.totalorder %v1664, 0
    %v1666 = vsel %vm1665, %v1664, 0
    %v1667 = vshrl.u32 %v1666, 5
    %v1668 = vand.u32 %v1666, 31
    %v1669 = vsub.s32 32, %v1668
    %v1670 = vshrl.u32 683565275, %v1669
    %v1671 = vshll.u32 683565275, %v1668
    %v1672 = vshrl.u32 2475754826, %v1669
    %v1673 = vor.u32 %v1671, %v1672
    %v1674 = vshll.u32 2475754826, %v1668
    %v1675 = vshrl.u32 2131351028, %v1669
    %v1676 = vor.u32 %v1674, %v1675
    %v1677 = vshll.u32 2131351028, %v1668
    %v1678 = vshrl.u32 2102212464, %v1669
    %v1679 = vor.u32 %v1677, %v1678
    %v1680 = vshll.u32 2102212464, %v1668
    %v1681 = vshrl.u32 920167782, %v1669
    %v1682 = vor.u32 %v1680, %v1681
    %v1683 = vshll.u32 920167782, %v1668
    %v1684 = vshrl.u32 1326507024, %v1669
    %v1685 = vor.u32 %v1683, %v1684
    %vm1686 = vcmp.lt.s32.totalorder %v1667, 1
    %vm1687 = vcmp.lt.s32.totalorder %v1667, 2
    %vm1688 = vcmp.lt.s32.totalorder %v1667, 3
    %vm1689 = vcmp.lt.s32.totalorder %v1667, 4
    %v1690 = vsel %vm1686, %v1670, %v1673
    %v1691 = vsel %vm1689, %v1679, 2102212464
    %v1692 = vsel %vm1688, %v1676, %v1691
    %v1693 = vsel %vm1687, %v1690, %v1692
    %v1694 = vsel %vm1686, %v1673, %v1676
    %v1695 = vsel %vm1689, %v1682, 920167782
    %v1696 = vsel %vm1688, %v1679, %v1695
    %v1697 = vsel %vm1687, %v1694, %v1696
    %v1698 = vsel %vm1686, %v1676, %v1679
    %v1699 = vsel %vm1689, %v1685, 1326507024
    %v1700 = vsel %vm1688, %v1682, %v1699
    %v1701 = vsel %vm1687, %v1698, %v1700
    %v1702 = vshll.u32 %v1662, 8
    %v1703 = vmul.u32.u64.compose %v1702, %v1701
    %v1704 = vextract.low.u32 %v1703
    %v1705 = vextract.high.u32 %v1703
    %v1706 = vmul.u32.u64.compose %v1702, %v1697
    %v1707 = vextract.low.u32 %v1706
    %v1708 = vextract.high.u32 %v1706
    %v1709 = vmul.u32 %v1702, %v1693
    %v1710 = vadd.s32 %v1705, %v1707
    %vm1711 = vc.u32 %v1705, %v1707
    %v1712 = vadd.s32 %v1708, 1
    %v1713 = vsel %vm1711, %v1712, %v1708
    %v1714 = vadd.s32 %v1709, %v1713
    %v1715 = vadd.s32 %v1714, 536870912
    %v1716 = vshrl.u32 %v1715, 30
    %v1717 = vshll.u32 %v1716, 30
    %v1718 = vsub.s32 %v1714, %v1717
    %vm1719 = vcmp.lt.s32.totalorder %v1718, 0
    %v1720 = vsub.s32 0, %v1718
    %v1721 = vsel %vm1719, %v1720, %v1718
    %v1722 = vclz %v1721
    %v1723 = vsub.s32 %v1722, 2
    %vm1724 = vcmp.gt.s32.totalorder 0, %v1723
    %v1725 = vsel %vm1724, 0, %v1723
    %v1726 = vsub.s32 32, %v1725
    %v1727 = vshll.u32 %v1718, %v1725
    %v1728 = vshrl.u32 %v1710, %v1726
    %v1729 = vor.u32 %v1727, %v1728
    %v1730 = vsub.s32 4294967266, %v1725
    %v1731 = vadd.s32 %v1730, 127
    %v1732 = vshll.u32 %v1731, 23
    %v1733 = vor.u32 4788187, %v1732
    %v1734 = vand.u32 2147483647, %v1733
    %v1736 = vcvt.s32.f32 %v1729
    %v1737 = vmul.f32 %v1736, %v1734
    %v1738 = vxor.u32 %v1737, 2147483648
    %v1739 = vsel %vm1656, %v1738, %v1737
    %v1740 = vsub.s32 4, %v1716
    %v1741 = vsel %vm1656, %v1740, %v1716
    %v1742 = vsel %vm1655, %v1030, %v1739
    %v1743 = vsel %vm1655, 0, %v1741
    %v1744 = vcosq.f32.pop %v1742
    %v1745 = vsinq.f32.pop %v1742
    %vm1746 = vweird.f32 %v1030
    %v1747 = vand.u32 %v1743, 3
    %vm1748 = vcmp.lt.s32.totalorder %v1747, 2
    %vm1749 = vcmp.eq.s32.totalorder %v1747, 0
    %v1750 = vxor.u32 %v1745, 2147483648
    %v1751 = vsel %vm1749, %v1744, %v1750
    %vm1752 = vcmp.eq.s32.totalorder %v1747, 2
    %v1753 = vxor.u32 %v1744, 2147483648
    %v1754 = vsel %vm1752, %v1753, %v1745
    %v1755 = vsel %vm1748, %v1751, %v1754
    %v1756 = vsel %vm1746, nan, %v1755
    %v1757 = vand.u32 2147483647, %v1031
    %vm1758 = vcmp.le.f32.partialorder %v1757, 0.7853982
    %vm1759 = vcmp.lt.s32.totalorder %v1031, 0
    %v1760 = vand.u32 %v1031, 2139095040
    %v1761 = vshrl.u32 %v1760, 23
    %v1762 = vsub.s32 %v1761, 127
    %v1763 = vand.u32 2147483647, %v1031
    %v1764 = vand.u32 %v1763, 8388607
    %v1765 = vor.u32 %v1764, 8388608
    %v1766 = vsub.s32 0, %v1765
    %v1767 = vadd.s32 %v1762, 1
    %vm1768 = vcmp.gt.s32.totalorder %v1767, 0
    %v1769 = vsel %vm1768, %v1767, 0
    %v1770 = vshrl.u32 %v1769, 5
    %v1771 = vand.u32 %v1769, 31
    %v1772 = vsub.s32 32, %v1771
    %v1773 = vshrl.u32 683565275, %v1772
    %v1774 = vshll.u32 683565275, %v1771
    %v1775 = vshrl.u32 2475754826, %v1772
    %v1776 = vor.u32 %v1774, %v1775
    %v1777 = vshll.u32 2475754826, %v1771
    %v1778 = vshrl.u32 2131351028, %v1772
    %v1779 = vor.u32 %v1777, %v1778
    %v1780 = vshll.u32 2131351028, %v1771
    %v1781 = vshrl.u32 2102212464, %v1772
    %v1782 = vor.u32 %v1780, %v1781
    %v1783 = vshll.u32 2102212464, %v1771
    %v1784 = vshrl.u32 920167782, %v1772
    %v1785 = vor.u32 %v1783, %v1784
    %v1786 = vshll.u32 920167782, %v1771
    %v1787 = vshrl.u32 1326507024, %v1772
    %v1788 = vor.u32 %v1786, %v1787
    %vm1789 = vcmp.lt.s32.totalorder %v1770, 1
    %vm1790 = vcmp.lt.s32.totalorder %v1770, 2
    %vm1791 = vcmp.lt.s32.totalorder %v1770, 3
    %vm1792 = vcmp.lt.s32.totalorder %v1770, 4
    %v1793 = vsel %vm1789, %v1773, %v1776
    %v1794 = vsel %vm1792, %v1782, 2102212464
    %v1795 = vsel %vm1791, %v1779, %v1794
    %v1796 = vsel %vm1790, %v1793, %v1795
    %v1797 = vsel %vm1789, %v1776, %v1779
    %v1798 = vsel %vm1792, %v1785, 920167782
    %v1799 = vsel %vm1791, %v1782, %v1798
    %v1800 = vsel %vm1790, %v1797, %v1799
    %v1801 = vsel %vm1789, %v1779, %v1782
    %v1802 = vsel %vm1792, %v1788, 1326507024
    %v1803 = vsel %vm1791, %v1785, %v1802
    %v1804 = vsel %vm1790, %v1801, %v1803
    %v1805 = vshll.u32 %v1765, 8
    %v1806 = vmul.u32.u64.compose %v1805, %v1804
    %v1807 = vextract.low.u32 %v1806
    %v1808 = vextract.high.u32 %v1806
    %v1809 = vmul.u32.u64.compose %v1805, %v1800
    %v1810 = vextract.low.u32 %v1809
    %v1811 = vextract.high.u32 %v1809
    %v1812 = vmul.u32 %v1805, %v1796
    %v1813 = vadd.s32 %v1808, %v1810
    %vm1814 = vc.u32 %v1808, %v1810
    %v1815 = vadd.s32 %v1811, 1
    %v1816 = vsel %vm1814, %v1815, %v1811
    %v1817 = vadd.s32 %v1812, %v1816
    %v1818 = vadd.s32 %v1817, 536870912
    %v1819 = vshrl.u32 %v1818, 30
    %v1820 = vshll.u32 %v1819, 30
    %v1821 = vsub.s32 %v1817, %v1820
    %vm1822 = vcmp.lt.s32.totalorder %v1821, 0
    %v1823 = vsub.s32 0, %v1821
    %v1824 = vsel %vm1822, %v1823, %v1821
    %v1825 = vclz %v1824
    %v1826 = vsub.s32 %v1825, 2
    %vm1827 = vcmp.gt.s32.totalorder 0, %v1826
    %v1828 = vsel %vm1827, 0, %v1826
    %v1829 = vsub.s32 32, %v1828
    %v1830 = vshll.u32 %v1821, %v1828
    %v1831 = vshrl.u32 %v1813, %v1829
    %v1832 = vor.u32 %v1830, %v1831
    %v1833 = vsub.s32 4294967266, %v1828
    %v1834 = vadd.s32 %v1833, 127
    %v1835 = vshll.u32 %v1834, 23
    %v1836 = vor.u32 4788187, %v1835
    %v1837 = vand.u32 2147483647, %v1836
    %v1839 = vcvt.s32.f32 %v1832
    %v1840 = vmul.f32 %v1839, %v1837
    %v1841 = vxor.u32 %v1840, 2147483648
    %v1842 = vsel %vm1759, %v1841, %v1840
    %v1843 = vsub.s32 4, %v1819
    %v1844 = vsel %vm1759, %v1843, %v1819
    %v1845 = vsel %vm1758, %v1031, %v1842
    %v1846 = vsel %vm1758, 0, %v1844
    %v1847 = vcosq.f32.pop %v1845
    %v1848 = vsinq.f32.pop %v1845
    %vm1849 = vweird.f32 %v1031
    %v1850 = vand.u32 %v1846, 3
    %vm1851 = vcmp.lt.s32.totalorder %v1850, 2
    %vm1852 = vcmp.eq.s32.totalorder %v1850, 0
    %v1853 = vxor.u32 %v1848, 2147483648
    %v1854 = vsel %vm1852, %v1847, %v1853
    %vm1855 = vcmp.eq.s32.totalorder %v1850, 2
    %v1856 = vxor.u32 %v1847, 2147483648
    %v1857 = vsel %vm1855, %v1856, %v1848
    %v1858 = vsel %vm1851, %v1854, %v1857
    %v1859 = vsel %vm1849, nan, %v1858
    %v1860 = vmul.f32 %v1135, 2.0
    %v1861 = vmul.f32 %v1239, 2.0
    %v1862 = vmul.f32 %v1343, 2.0
    %v1863 = vmul.f32 %v1447, 2.0
    %v1864 = vmul.f32 %v1860, %v1550
    %v1865 = vmul.f32 %v1861, %v1653
    %v1866 = vmul.f32 %v1862, %v1756
    %v1867 = vmul.f32 %v1863, %v1859
    %v1868 = vmul.f32 %v1860, %v1135
    %v1869 = vmul.f32 %v1861, %v1239
    %v1870 = vmul.f32 %v1862, %v1343
    %v1871 = vmul.f32 %v1863, %v1447
    %v1872 = vsub.f32 1.0, %v1868
    %v1873 = vsub.f32 1.0, %v1869
    %v1874 = vsub.f32 1.0, %v1870
    %v1875 = vsub.f32 1.0, %v1871
    %v1876 = vmul.f32 %v1864, 2.0
    %v1877 = vmul.f32 %v1865, 2.0
    %v1878 = vmul.f32 %v1866, 2.0
    %v1879 = vmul.f32 %v1867, 2.0
    %v1880 = vmul.f32 %v1876, %v1872
    %v1881 = vmul.f32 %v1877, %v1873
    %v1882 = vmul.f32 %v1878, %v1874
    %v1883 = vmul.f32 %v1879, %v1875
    %v1884 = vmul.f32 %v1876, %v1864
    %v1885 = vmul.f32 %v1877, %v1865
    %v1886 = vmul.f32 %v1878, %v1866
    %v1887 = vmul.f32 %v1879, %v1867
    %v1888 = vsub.f32 1.0, %v1884
    %v1889 = vsub.f32 1.0, %v1885
    %v1890 = vsub.f32 1.0, %v1886
    %v1891 = vsub.f32 1.0, %v1887
    %v1892 = vmul.f32 %v1880, 2.0
    %v1893 = vmul.f32 %v1881, 2.0
    %v1894 = vmul.f32 %v1882, 2.0
    %v1895 = vmul.f32 %v1883, 2.0
    %v1896 = vmul.f32 %v1892, %v1888
    %v1897 = vmul.f32 %v1893, %v1889
    %v1898 = vmul.f32 %v1894, %v1890
    %v1899 = vmul.f32 %v1895, %v1891
    %v1900 = vmul.f32 %v1892, %v1880
    %v1901 = vmul.f32 %v1893, %v1881
    %v1902 = vmul.f32 %v1894, %v1882
    %v1903 = vmul.f32 %v1895, %v1883
    %v1904 = vsub.f32 1.0, %v1900
    %v1905 = vsub.f32 1.0, %v1901
    %v1906 = vsub.f32 1.0, %v1902
    %v1907 = vsub.f32 1.0, %v1903
    %v1908 = vcombine.low %v1896, %v1864
    %v1909 = vcombine.high %v1896, %v1864
    %v1911 = vunpack.c.l.s4 1983009808
    %v1912 = vunpack.c.0.s8 %v1911
    %v1913 = vlaneseq
    %v1914 = vshrl.u32 %v1913, 7
    %v1915 = vsub.s32 %v1912, %v1914
    %v1916 = vrot.slane %v1908, %v1915
    %v1918 = vunpack.c.l.s4 1983009808
    %v1919 = vunpack.c.0.s8 %v1918
    %v1920 = vlaneseq
    %v1921 = vshrl.u32 %v1920, 7
    %v1922 = vsub.s32 %v1919, %v1921
    %v1923 = vrot.slane %v1909, %v1922
    %v1924 = vcombine.low %v1880, %v1135
    %v1925 = vcombine.high %v1880, %v1135
    %v1927 = vunpack.c.l.s4 1983009808
    %v1928 = vunpack.c.0.s8 %v1927
    %v1929 = vlaneseq
    %v1930 = vshrl.u32 %v1929, 7
    %v1931 = vsub.s32 %v1928, %v1930
    %v1932 = vrot.slane %v1924, %v1931
    %v1934 = vunpack.c.l.s4 1983009808
    %v1935 = vunpack.c.0.s8 %v1934
    %v1936 = vlaneseq
    %v1937 = vshrl.u32 %v1936, 7
    %v1938 = vsub.s32 %v1935, %v1937
    %v1939 = vrot.slane %v1925, %v1938
    %v1940 = vcombine.low %v1016, %v984
    %v1941 = vcombine.high %v1016, %v984
    %v1943 = vunpack.c.l.s4 1983009808
    %v1944 = vunpack.c.0.s8 %v1943
    %v1945 = vlaneseq
    %v1946 = vshrl.u32 %v1945, 7
    %v1947 = vsub.s32 %v1944, %v1946
    %v1948 = vrot.slane %v1940, %v1947
    %v1950 = vunpack.c.l.s4 1983009808
    %v1951 = vunpack.c.0.s8 %v1950
    %v1952 = vlaneseq
    %v1953 = vshrl.u32 %v1952, 7
    %v1954 = vsub.s32 %v1951, %v1953
    %v1955 = vrot.slane %v1941, %v1954
    %v1956 = vcombine.low %v1000, %v255
    %v1957 = vcombine.high %v1000, %v255
    %v1959 = vunpack.c.l.s4 1983009808
    %v1960 = vunpack.c.0.s8 %v1959
    %v1961 = vlaneseq
    %v1962 = vshrl.u32 %v1961, 7
    %v1963 = vsub.s32 %v1960, %v1962
    %v1964 = vrot.slane %v1956, %v1963
    %v1966 = vunpack.c.l.s4 1983009808
    %v1967 = vunpack.c.0.s8 %v1966
    %v1968 = vlaneseq
    %v1969 = vshrl.u32 %v1968, 7
    %v1970 = vsub.s32 %v1967, %v1969
    %v1971 = vrot.slane %v1957, %v1970
    %v1972 = vcombine.low %v1916, %v1932
    %v1973 = vcombine.high %v1916, %v1932
    %v1975 = vunpack.c.l.s4 1934713408
    %v1976 = vunpack.c.0.s8 %v1975
    %v1977 = vlaneseq
    %v1978 = vshrl.u32 %v1977, 7
    %v1979 = vsub.s32 %v1976, %v1978
    %v1980 = vrot.slane %v1972, %v1979
    %v1982 = vunpack.c.l.s4 1934713408
    %v1983 = vunpack.c.0.s8 %v1982
    %v1984 = vlaneseq
    %v1985 = vshrl.u32 %v1984, 7
    %v1986 = vsub.s32 %v1983, %v1985
    %v1987 = vrot.slane %v1973, %v1986
    %v1988 = vcombine.low %v1923, %v1939
    %v1989 = vcombine.high %v1923, %v1939
    %v1991 = vunpack.c.l.s4 1934713408
    %v1992 = vunpack.c.0.s8 %v1991
    %v1993 = vlaneseq
    %v1994 = vshrl.u32 %v1993, 7
    %v1995 = vsub.s32 %v1992, %v1994
    %v1996 = vrot.slane %v1988, %v1995
    %v1998 = vunpack.c.l.s4 1934713408
    %v1999 = vunpack.c.0.s8 %v1998
    %v2000 = vlaneseq
    %v2001 = vshrl.u32 %v2000, 7
    %v2002 = vsub.s32 %v1999, %v2001
    %v2003 = vrot.slane %v1989, %v2002
    %v2004 = vcombine.low %v1948, %v1964
    %v2005 = vcombine.high %v1948, %v1964
    %v2007 = vunpack.c.l.s4 1934713408
    %v2008 = vunpack.c.0.s8 %v2007
    %v2009 = vlaneseq
    %v2010 = vshrl.u32 %v2009, 7
    %v2011 = vsub.s32 %v2008, %v2010
    %v2012 = vrot.slane %v2004, %v2011
    %v2014 = vunpack.c.l.s4 1934713408
    %v2015 = vunpack.c.0.s8 %v2014
    %v2016 = vlaneseq
    %v2017 = vshrl.u32 %v2016, 7
    %v2018 = vsub.s32 %v2015, %v2017
    %v2019 = vrot.slane %v2005, %v2018
    %v2020 = vcombine.low %v1955, %v1971
    %v2021 = vcombine.high %v1955, %v1971
    %v2023 = vunpack.c.l.s4 1934713408
    %v2024 = vunpack.c.0.s8 %v2023
    %v2025 = vlaneseq
    %v2026 = vshrl.u32 %v2025, 7
    %v2027 = vsub.s32 %v2024, %v2026
    %v2028 = vrot.slane %v2020, %v2027
    %v2030 = vunpack.c.l.s4 1934713408
    %v2031 = vunpack.c.0.s8 %v2030
    %v2032 = vlaneseq
    %v2033 = vshrl.u32 %v2032, 7
    %v2034 = vsub.s32 %v2031, %v2033
    %v2035 = vrot.slane %v2021, %v2034
    %v2036 = vcombine.low %v1980, %v2012
    %v2037 = vcombine.high %v1980, %v2012
    %v2038 = vcombine.low %v1987, %v2019
    %v2039 = vcombine.high %v1987, %v2019
    %v2040 = vcombine.low %v1996, %v2028
    %v2041 = vcombine.high %v1996, %v2028
    %v2042 = vcombine.low %v2003, %v2035
    %v2043 = vcombine.high %v2003, %v2035
    %v2044 = vcombine.low %v1904, %v1872
    %v2045 = vcombine.high %v1904, %v1872
    %v2047 = vunpack.c.l.s4 1983009808
    %v2048 = vunpack.c.0.s8 %v2047
    %v2049 = vlaneseq
    %v2050 = vshrl.u32 %v2049, 7
    %v2051 = vsub.s32 %v2048, %v2050
    %v2052 = vrot.slane %v2044, %v2051
    %v2054 = vunpack.c.l.s4 1983009808
    %v2055 = vunpack.c.0.s8 %v2054
    %v2056 = vlaneseq
    %v2057 = vshrl.u32 %v2056, 7
    %v2058 = vsub.s32 %v2055, %v2057
    %v2059 = vrot.slane %v2045, %v2058
    %v2060 = vcombine.low %v1888, %v1550
    %v2061 = vcombine.high %v1888, %v1550
    %v2063 = vunpack.c.l.s4 1983009808
    %v2064 = vunpack.c.0.s8 %v2063
    %v2065 = vlaneseq
    %v2066 = vshrl.u32 %v2065, 7
    %v2067 = vsub.s32 %v2064, %v2066
    %v2068 = vrot.slane %v2060, %v2067
    %v2070 = vunpack.c.l.s4 1983009808
    %v2071 = vunpack.c.0.s8 %v2070
    %v2072 = vlaneseq
    %v2073 = vshrl.u32 %v2072, 7
    %v2074 = vsub.s32 %v2071, %v2073
    %v2075 = vrot.slane %v2061, %v2074
    %v2076 = vcombine.low %v1024, %v992
    %v2077 = vcombine.high %v1024, %v992
    %v2079 = vunpack.c.l.s4 1983009808
    %v2080 = vunpack.c.0.s8 %v2079
    %v2081 = vlaneseq
    %v2082 = vshrl.u32 %v2081, 7
    %v2083 = vsub.s32 %v2080, %v2082
    %v2084 = vrot.slane %v2076, %v2083
    %v2086 = vunpack.c.l.s4 1983009808
    %v2087 = vunpack.c.0.s8 %v2086
    %v2088 = vlaneseq
    %v2089 = vshrl.u32 %v2088, 7
    %v2090 = vsub.s32 %v2087, %v2089
    %v2091 = vrot.slane %v2077, %v2090
    %v2092 = vcombine.low %v1008, %v670
    %v2093 = vcombine.high %v1008, %v670
    %v2095 = vunpack.c.l.s4 1983009808
    %v2096 = vunpack.c.0.s8 %v2095
    %v2097 = vlaneseq
    %v2098 = vshrl.u32 %v2097, 7
    %v2099 = vsub.s32 %v2096, %v2098
    %v2100 = vrot.slane %v2092, %v2099
    %v2102 = vunpack.c.l.s4 1983009808
    %v2103 = vunpack.c.0.s8 %v2102
    %v2104 = vlaneseq
    %v2105 = vshrl.u32 %v2104, 7
    %v2106 = vsub.s32 %v2103, %v2105
    %v2107 = vrot.slane %v2093, %v2106
    %v2108 = vcombine.low %v2052, %v2068
    %v2109 = vcombine.high %v2052, %v2068
    %v2111 = vunpack.c.l.s4 1934713408
    %v2112 = vunpack.c.0.s8 %v2111
    %v2113 = vlaneseq
    %v2114 = vshrl.u32 %v2113, 7
    %v2115 = vsub.s32 %v2112, %v2114
    %v2116 = vrot.slane %v2108, %v2115
    %v2118 = vunpack.c.l.s4 1934713408
    %v2119 = vunpack.c.0.s8 %v2118
    %v2120 = vlaneseq
    %v2121 = vshrl.u32 %v2120, 7
    %v2122 = vsub.s32 %v2119, %v2121
    %v2123 = vrot.slane %v2109, %v2122
    %v2124 = vcombine.low %v2059, %v2075
    %v2125 = vcombine.high %v2059, %v2075
    %v2127 = vunpack.c.l.s4 1934713408
    %v2128 = vunpack.c.0.s8 %v2127
    %v2129 = vlaneseq
    %v2130 = vshrl.u32 %v2129, 7
    %v2131 = vsub.s32 %v2128, %v2130
    %v2132 = vrot.slane %v2124, %v2131
    %v2134 = vunpack.c.l.s4 1934713408
    %v2135 = vunpack.c.0.s8 %v2134
    %v2136 = vlaneseq
    %v2137 = vshrl.u32 %v2136, 7
    %v2138 = vsub.s32 %v2135, %v2137
    %v2139 = vrot.slane %v2125, %v2138
    %v2140 = vcombine.low %v2084, %v2100
    %v2141 = vcombine.high %v2084, %v2100
    %v2143 = vunpack.c.l.s4 1934713408
    %v2144 = vunpack.c.0.s8 %v2143
    %v2145 = vlaneseq
    %v2146 = vshrl.u32 %v2145, 7
    %v2147 = vsub.s32 %v2144, %v2146
    %v2148 = vrot.slane %v2140, %v2147
    %v2150 = vunpack.c.l.s4 1934713408
    %v2151 = vunpack.c.0.s8 %v2150
    %v2152 = vlaneseq
    %v2153 = vshrl.u32 %v2152, 7
    %v2154 = vsub.s32 %v2151, %v2153
    %v2155 = vrot.slane %v2141, %v2154
    %v2156 = vcombine.low %v2091, %v2107
    %v2157 = vcombine.high %v2091, %v2107
    %v2159 = vunpack.c.l.s4 1934713408
    %v2160 = vunpack.c.0.s8 %v2159
    %v2161 = vlaneseq
    %v2162 = vshrl.u32 %v2161, 7
    %v2163 = vsub.s32 %v2160, %v2162
    %v2164 = vrot.slane %v2156, %v2163
    %v2166 = vunpack.c.l.s4 1934713408
    %v2167 = vunpack.c.0.s8 %v2166
    %v2168 = vlaneseq
    %v2169 = vshrl.u32 %v2168, 7
    %v2170 = vsub.s32 %v2167, %v2169
    %v2171 = vrot.slane %v2157, %v2170
    %v2172 = vcombine.low %v2116, %v2148
    %v2173 = vcombine.high %v2116, %v2148
    %v2174 = vcombine.low %v2123, %v2155
    %v2175 = vcombine.high %v2123, %v2155
    %v2176 = vcombine.low %v2132, %v2164
    %v2177 = vcombine.high %v2132, %v2164
    %v2178 = vcombine.low %v2139, %v2171
    %v2179 = vcombine.high %v2139, %v2171
    %v2180 = vcombine.high %v126, 0.0
    %v2182 = vunpack.c.l.s4 1983009808
    %v2183 = vunpack.c.0.s8 %v2182
    %v2184 = vlaneseq
    %v2185 = vshrl.u32 %v2184, 7
    %v2186 = vsub.s32 %v2183, %v2185
    %v2187 = vrot.slane %v126, %v2186
    %v2189 = vunpack.c.l.s4 1983009808
    %v2190 = vunpack.c.0.s8 %v2189
    %v2191 = vlaneseq
    %v2192 = vshrl.u32 %v2191, 7
    %v2193 = vsub.s32 %v2190, %v2192
    %v2194 = vrot.slane %v2180, %v2193
    %v2195 = vcombine.high 1.0, 0.0
    %v2197 = vunpack.c.l.s4 1983009808
    %v2198 = vunpack.c.0.s8 %v2197
    %v2199 = vlaneseq
    %v2200 = vshrl.u32 %v2199, 7
    %v2201 = vsub.s32 %v2198, %v2200
    %v2203 = vunpack.c.l.s4 1983009808
    %v2204 = vunpack.c.0.s8 %v2203
    %v2205 = vlaneseq
    %v2206 = vshrl.u32 %v2205, 7
    %v2207 = vsub.s32 %v2204, %v2206
    %v2208 = vrot.slane %v2195, %v2207
    %v2209 = vcombine.low %v2187, 1.0
    %v2210 = vcombine.high %v2187, 1.0
    %v2212 = vunpack.c.l.s4 1934713408
    %v2213 = vunpack.c.0.s8 %v2212
    %v2214 = vlaneseq
    %v2215 = vshrl.u32 %v2214, 7
    %v2216 = vsub.s32 %v2213, %v2215
    %v2217 = vrot.slane %v2209, %v2216
    %v2219 = vunpack.c.l.s4 1934713408
    %v2220 = vunpack.c.0.s8 %v2219
    %v2221 = vlaneseq
    %v2222 = vshrl.u32 %v2221, 7
    %v2223 = vsub.s32 %v2220, %v2222
    %v2224 = vrot.slane %v2210, %v2223
    %v2225 = vcombine.low %v2194, %v2208
    %v2226 = vcombine.high %v2194, %v2208
    %v2228 = vunpack.c.l.s4 1934713408
    %v2229 = vunpack.c.0.s8 %v2228
    %v2230 = vlaneseq
    %v2231 = vshrl.u32 %v2230, 7
    %v2232 = vsub.s32 %v2229, %v2231
    %v2233 = vrot.slane %v2225, %v2232
    %v2235 = vunpack.c.l.s4 1934713408
    %v2236 = vunpack.c.0.s8 %v2235
    %v2237 = vlaneseq
    %v2238 = vshrl.u32 %v2237, 7
    %v2239 = vsub.s32 %v2236, %v2238
    %v2240 = vrot.slane %v2226, %v2239
    %v2241 = vcombine.high %v2217, 0.0
    %v2242 = vcombine.high %v2224, 0.0
    %v2243 = vcombine.high %v2233, 0.0
    %v2244 = vcombine.high %v2240, 0.0
    %v2245 = vcombine.low %v1897, %v1865
    %v2246 = vcombine.high %v1897, %v1865
    %v2248 = vunpack.c.l.s4 1983009808
    %v2249 = vunpack.c.0.s8 %v2248
    %v2250 = vlaneseq
    %v2251 = vshrl.u32 %v2250, 7
    %v2252 = vsub.s32 %v2249, %v2251
    %v2253 = vrot.slane %v2245, %v2252
    %v2255 = vunpack.c.l.s4 1983009808
    %v2256 = vunpack.c.0.s8 %v2255
    %v2257 = vlaneseq
    %v2258 = vshrl.u32 %v2257, 7
    %v2259 = vsub.s32 %v2256, %v2258
    %v2260 = vrot.slane %v2246, %v2259
    %v2261 = vcombine.low %v1881, %v1239
    %v2262 = vcombine.high %v1881, %v1239
    %v2264 = vunpack.c.l.s4 1983009808
    %v2265 = vunpack.c.0.s8 %v2264
    %v2266 = vlaneseq
    %v2267 = vshrl.u32 %v2266, 7
    %v2268 = vsub.s32 %v2265, %v2267
    %v2269 = vrot.slane %v2261, %v2268
    %v2271 = vunpack.c.l.s4 1983009808
    %v2272 = vunpack.c.0.s8 %v2271
    %v2273 = vlaneseq
    %v2274 = vshrl.u32 %v2273, 7
    %v2275 = vsub.s32 %v2272, %v2274
    %v2276 = vrot.slane %v2262, %v2275
    %v2277 = vcombine.low %v1017, %v985
    %v2278 = vcombine.high %v1017, %v985
    %v2280 = vunpack.c.l.s4 1983009808
    %v2281 = vunpack.c.0.s8 %v2280
    %v2282 = vlaneseq
    %v2283 = vshrl.u32 %v2282, 7
    %v2284 = vsub.s32 %v2281, %v2283
    %v2285 = vrot.slane %v2277, %v2284
    %v2287 = vunpack.c.l.s4 1983009808
    %v2288 = vunpack.c.0.s8 %v2287
    %v2289 = vlaneseq
    %v2290 = vshrl.u32 %v2289, 7
    %v2291 = vsub.s32 %v2288, %v2290
    %v2292 = vrot.slane %v2278, %v2291
    %v2293 = vcombine.low %v1001, %v359
    %v2294 = vcombine.high %v1001, %v359
    %v2296 = vunpack.c.l.s4 1983009808
    %v2297 = vunpack.c.0.s8 %v2296
    %v2298 = vlaneseq
    %v2299 = vshrl.u32 %v2298, 7
    %v2300 = vsub.s32 %v2297, %v2299
    %v2301 = vrot.slane %v2293, %v2300
    %v2303 = vunpack.c.l.s4 1983009808
    %v2304 = vunpack.c.0.s8 %v2303
    %v2305 = vlaneseq
    %v2306 = vshrl.u32 %v2305, 7
    %v2307 = vsub.s32 %v2304, %v2306
    %v2308 = vrot.slane %v2294, %v2307
    %v2309 = vcombine.low %v2253, %v2269
    %v2310 = vcombine.high %v2253, %v2269
    %v2312 = vunpack.c.l.s4 1934713408
    %v2313 = vunpack.c.0.s8 %v2312
    %v2314 = vlaneseq
    %v2315 = vshrl.u32 %v2314, 7
    %v2316 = vsub.s32 %v2313, %v2315
    %v2317 = vrot.slane %v2309, %v2316
    %v2319 = vunpack.c.l.s4 1934713408
    %v2320 = vunpack.c.0.s8 %v2319
    %v2321 = vlaneseq
    %v2322 = vshrl.u32 %v2321, 7
    %v2323 = vsub.s32 %v2320, %v2322
    %v2324 = vrot.slane %v2310, %v2323
    %v2325 = vcombine.low %v2260, %v2276
    %v2326 = vcombine.high %v2260, %v2276
    %v2328 = vunpack.c.l.s4 1934713408
    %v2329 = vunpack.c.0.s8 %v2328
    %v2330 = vlaneseq
    %v2331 = vshrl.u32 %v2330, 7
    %v2332 = vsub.s32 %v2329, %v2331
    %v2333 = vrot.slane %v2325, %v2332
    %v2335 = vunpack.c.l.s4 1934713408
    %v2336 = vunpack.c.0.s8 %v2335
    %v2337 = vlaneseq
    %v2338 = vshrl.u32 %v2337, 7
    %v2339 = vsub.s32 %v2336, %v2338
    %v2340 = vrot.slane %v2326, %v2339
    %v2341 = vcombine.low %v2285, %v2301
    %v2342 = vcombine.high %v2285, %v2301
    %v2344 = vunpack.c.l.s4 1934713408
    %v2345 = vunpack.c.0.s8 %v2344
    %v2346 = vlaneseq
    %v2347 = vshrl.u32 %v2346, 7
    %v2348 = vsub.s32 %v2345, %v2347
    %v2349 = vrot.slane %v2341, %v2348
    %v2351 = vunpack.c.l.s4 1934713408
    %v2352 = vunpack.c.0.s8 %v2351
    %v2353 = vlaneseq
    %v2354 = vshrl.u32 %v2353, 7
    %v2355 = vsub.s32 %v2352, %v2354
    %v2356 = vrot.slane %v2342, %v2355
    %v2357 = vcombine.low %v2292, %v2308
    %v2358 = vcombine.high %v2292, %v2308
    %v2360 = vunpack.c.l.s4 1934713408
    %v2361 = vunpack.c.0.s8 %v2360
    %v2362 = vlaneseq
    %v2363 = vshrl.u32 %v2362, 7
    %v2364 = vsub.s32 %v2361, %v2363
    %v2365 = vrot.slane %v2357, %v2364
    %v2367 = vunpack.c.l.s4 1934713408
    %v2368 = vunpack.c.0.s8 %v2367
    %v2369 = vlaneseq
    %v2370 = vshrl.u32 %v2369, 7
    %v2371 = vsub.s32 %v2368, %v2370
    %v2372 = vrot.slane %v2358, %v2371
    %v2373 = vcombine.low %v2317, %v2349
    %v2374 = vcombine.high %v2317, %v2349
    %v2375 = vcombine.low %v2324, %v2356
    %v2376 = vcombine.high %v2324, %v2356
    %v2377 = vcombine.low %v2333, %v2365
    %v2378 = vcombine.high %v2333, %v2365
    %v2379 = vcombine.low %v2340, %v2372
    %v2380 = vcombine.high %v2340, %v2372
    %v2381 = vcombine.low %v1905, %v1873
    %v2382 = vcombine.high %v1905, %v1873
    %v2384 = vunpack.c.l.s4 1983009808
    %v2385 = vunpack.c.0.s8 %v2384
    %v2386 = vlaneseq
    %v2387 = vshrl.u32 %v2386, 7
    %v2388 = vsub.s32 %v2385, %v2387
    %v2389 = vrot.slane %v2381, %v2388
    %v2391 = vunpack.c.l.s4 1983009808
    %v2392 = vunpack.c.0.s8 %v2391
    %v2393 = vlaneseq
    %v2394 = vshrl.u32 %v2393, 7
    %v2395 = vsub.s32 %v2392, %v2394
    %v2396 = vrot.slane %v2382, %v2395
    %v2397 = vcombine.low %v1889, %v1653
    %v2398 = vcombine.high %v1889, %v1653
    %v2400 = vunpack.c.l.s4 1983009808
    %v2401 = vunpack.c.0.s8 %v2400
    %v2402 = vlaneseq
    %v2403 = vshrl.u32 %v2402, 7
    %v2404 = vsub.s32 %v2401, %v2403
    %v2405 = vrot.slane %v2397, %v2404
    %v2407 = vunpack.c.l.s4 1983009808
    %v2408 = vunpack.c.0.s8 %v2407
    %v2409 = vlaneseq
    %v2410 = vshrl.u32 %v2409, 7
    %v2411 = vsub.s32 %v2408, %v2410
    %v2412 = vrot.slane %v2398, %v2411
    %v2413 = vcombine.low %v1025, %v993
    %v2414 = vcombine.high %v1025, %v993
    %v2416 = vunpack.c.l.s4 1983009808
    %v2417 = vunpack.c.0.s8 %v2416
    %v2418 = vlaneseq
    %v2419 = vshrl.u32 %v2418, 7
    %v2420 = vsub.s32 %v2417, %v2419
    %v2421 = vrot.slane %v2413, %v2420
    %v2423 = vunpack.c.l.s4 1983009808
    %v2424 = vunpack.c.0.s8 %v2423
    %v2425 = vlaneseq
    %v2426 = vshrl.u32 %v2425, 7
    %v2427 = vsub.s32 %v2424, %v2426
    %v2428 = vrot.slane %v2414, %v2427
    %v2429 = vcombine.low %v1009, %v773
    %v2430 = vcombine.high %v1009, %v773
    %v2432 = vunpack.c.l.s4 1983009808
    %v2433 = vunpack.c.0.s8 %v2432
    %v2434 = vlaneseq
    %v2435 = vshrl.u32 %v2434, 7
    %v2436 = vsub.s32 %v2433, %v2435
    %v2437 = vrot.slane %v2429, %v2436
    %v2439 = vunpack.c.l.s4 1983009808
    %v2440 = vunpack.c.0.s8 %v2439
    %v2441 = vlaneseq
    %v2442 = vshrl.u32 %v2441, 7
    %v2443 = vsub.s32 %v2440, %v2442
    %v2444 = vrot.slane %v2430, %v2443
    %v2445 = vcombine.low %v2389, %v2405
    %v2446 = vcombine.high %v2389, %v2405
    %v2448 = vunpack.c.l.s4 1934713408
    %v2449 = vunpack.c.0.s8 %v2448
    %v2450 = vlaneseq
    %v2451 = vshrl.u32 %v2450, 7
    %v2452 = vsub.s32 %v2449, %v2451
    %v2453 = vrot.slane %v2445, %v2452
    %v2455 = vunpack.c.l.s4 1934713408
    %v2456 = vunpack.c.0.s8 %v2455
    %v2457 = vlaneseq
    %v2458 = vshrl.u32 %v2457, 7
    %v2459 = vsub.s32 %v2456, %v2458
    %v2460 = vrot.slane %v2446, %v2459
    %v2461 = vcombine.low %v2396, %v2412
    %v2462 = vcombine.high %v2396, %v2412
    %v2464 = vunpack.c.l.s4 1934713408
    %v2465 = vunpack.c.0.s8 %v2464
    %v2466 = vlaneseq
    %v2467 = vshrl.u32 %v2466, 7
    %v2468 = vsub.s32 %v2465, %v2467
    %v2469 = vrot.slane %v2461, %v2468
    %v2471 = vunpack.c.l.s4 1934713408
    %v2472 = vunpack.c.0.s8 %v2471
    %v2473 = vlaneseq
    %v2474 = vshrl.u32 %v2473, 7
    %v2475 = vsub.s32 %v2472, %v2474
    %v2476 = vrot.slane %v2462, %v2475
    %v2477 = vcombine.low %v2421, %v2437
    %v2478 = vcombine.high %v2421, %v2437
    %v2480 = vunpack.c.l.s4 1934713408
    %v2481 = vunpack.c.0.s8 %v2480
    %v2482 = vlaneseq
    %v2483 = vshrl.u32 %v2482, 7
    %v2484 = vsub.s32 %v2481, %v2483
    %v2485 = vrot.slane %v2477, %v2484
    %v2487 = vunpack.c.l.s4 1934713408
    %v2488 = vunpack.c.0.s8 %v2487
    %v2489 = vlaneseq
    %v2490 = vshrl.u32 %v2489, 7
    %v2491 = vsub.s32 %v2488, %v2490
    %v2492 = vrot.slane %v2478, %v2491
    %v2493 = vcombine.low %v2428, %v2444
    %v2494 = vcombine.high %v2428, %v2444
    %v2496 = vunpack.c.l.s4 1934713408
    %v2497 = vunpack.c.0.s8 %v2496
    %v2498 = vlaneseq
    %v2499 = vshrl.u32 %v2498, 7
    %v2500 = vsub.s32 %v2497, %v2499
    %v2501 = vrot.slane %v2493, %v2500
    %v2503 = vunpack.c.l.s4 1934713408
    %v2504 = vunpack.c.0.s8 %v2503
    %v2505 = vlaneseq
    %v2506 = vshrl.u32 %v2505, 7
    %v2507 = vsub.s32 %v2504, %v2506
    %v2508 = vrot.slane %v2494, %v2507
    %v2509 = vcombine.low %v2453, %v2485
    %v2510 = vcombine.high %v2453, %v2485
    %v2511 = vcombine.low %v2460, %v2492
    %v2512 = vcombine.high %v2460, %v2492
    %v2513 = vcombine.low %v2469, %v2501
    %v2514 = vcombine.high %v2469, %v2501
    %v2515 = vcombine.low %v2476, %v2508
    %v2516 = vcombine.high %v2476, %v2508
    %v2517 = vcombine.high %v133, 0.0
    %v2519 = vunpack.c.l.s4 1983009808
    %v2520 = vunpack.c.0.s8 %v2519
    %v2521 = vlaneseq
    %v2522 = vshrl.u32 %v2521, 7
    %v2523 = vsub.s32 %v2520, %v2522
    %v2524 = vrot.slane %v133, %v2523
    %v2526 = vunpack.c.l.s4 1983009808
    %v2527 = vunpack.c.0.s8 %v2526
    %v2528 = vlaneseq
    %v2529 = vshrl.u32 %v2528, 7
    %v2530 = vsub.s32 %v2527, %v2529
    %v2531 = vrot.slane %v2517, %v2530
    %v2532 = vcombine.low %v2524, 1.0
    %v2533 = vcombine.high %v2524, 1.0
    %v2535 = vunpack.c.l.s4 1934713408
    %v2536 = vunpack.c.0.s8 %v2535
    %v2537 = vlaneseq
    %v2538 = vshrl.u32 %v2537, 7
    %v2539 = vsub.s32 %v2536, %v2538
    %v2540 = vrot.slane %v2532, %v2539
    %v2542 = vunpack.c.l.s4 1934713408
    %v2543 = vunpack.c.0.s8 %v2542
    %v2544 = vlaneseq
    %v2545 = vshrl.u32 %v2544, 7
    %v2546 = vsub.s32 %v2543, %v2545
    %v2547 = vrot.slane %v2533, %v2546
    %v2548 = vcombine.low %v2531, %v2208
    %v2549 = vcombine.high %v2531, %v2208
    %v2551 = vunpack.c.l.s4 1934713408
    %v2552 = vunpack.c.0.s8 %v2551
    %v2553 = vlaneseq
    %v2554 = vshrl.u32 %v2553, 7
    %v2555 = vsub.s32 %v2552, %v2554
    %v2556 = vrot.slane %v2548, %v2555
    %v2558 = vunpack.c.l.s4 1934713408
    %v2559 = vunpack.c.0.s8 %v2558
    %v2560 = vlaneseq
    %v2561 = vshrl.u32 %v2560, 7
    %v2562 = vsub.s32 %v2559, %v2561
    %v2563 = vrot.slane %v2549, %v2562
    %v2564 = vcombine.high %v2540, 0.0
    %v2565 = vcombine.high %v2547, 0.0
    %v2566 = vcombine.high %v2556, 0.0
    %v2567 = vcombine.high %v2563, 0.0
    %v2568 = vcombine.low %v1898, %v1866
    %v2569 = vcombine.high %v1898, %v1866
    %v2571 = vunpack.c.l.s4 1983009808
    %v2572 = vunpack.c.0.s8 %v2571
    %v2573 = vlaneseq
    %v2574 = vshrl.u32 %v2573, 7
    %v2575 = vsub.s32 %v2572, %v2574
    %v2576 = vrot.slane %v2568, %v2575
    %v2578 = vunpack.c.l.s4 1983009808
    %v2579 = vunpack.c.0.s8 %v2578
    %v2580 = vlaneseq
    %v2581 = vshrl.u32 %v2580, 7
    %v2582 = vsub.s32 %v2579, %v2581
    %v2583 = vrot.slane %v2569, %v2582
    %v2584 = vcombine.low %v1882, %v1343
    %v2585 = vcombine.high %v1882, %v1343
    %v2587 = vunpack.c.l.s4 1983009808
    %v2588 = vunpack.c.0.s8 %v2587
    %v2589 = vlaneseq
    %v2590 = vshrl.u32 %v2589, 7
    %v2591 = vsub.s32 %v2588, %v2590
    %v2592 = vrot.slane %v2584, %v2591
    %v2594 = vunpack.c.l.s4 1983009808
    %v2595 = vunpack.c.0.s8 %v2594
    %v2596 = vlaneseq
    %v2597 = vshrl.u32 %v2596, 7
    %v2598 = vsub.s32 %v2595, %v2597
    %v2599 = vrot.slane %v2585, %v2598
    %v2600 = vcombine.low %v1018, %v986
    %v2601 = vcombine.high %v1018, %v986
    %v2603 = vunpack.c.l.s4 1983009808
    %v2604 = vunpack.c.0.s8 %v2603
    %v2605 = vlaneseq
    %v2606 = vshrl.u32 %v2605, 7
    %v2607 = vsub.s32 %v2604, %v2606
    %v2608 = vrot.slane %v2600, %v2607
    %v2610 = vunpack.c.l.s4 1983009808
    %v2611 = vunpack.c.0.s8 %v2610
    %v2612 = vlaneseq
    %v2613 = vshrl.u32 %v2612, 7
    %v2614 = vsub.s32 %v2611, %v2613
    %v2615 = vrot.slane %v2601, %v2614
    %v2616 = vcombine.low %v1002, %v463
    %v2617 = vcombine.high %v1002, %v463
    %v2619 = vunpack.c.l.s4 1983009808
    %v2620 = vunpack.c.0.s8 %v2619
    %v2621 = vlaneseq
    %v2622 = vshrl.u32 %v2621, 7
    %v2623 = vsub.s32 %v2620, %v2622
    %v2624 = vrot.slane %v2616, %v2623
    %v2626 = vunpack.c.l.s4 1983009808
    %v2627 = vunpack.c.0.s8 %v2626
    %v2628 = vlaneseq
    %v2629 = vshrl.u32 %v2628, 7
    %v2630 = vsub.s32 %v2627, %v2629
    %v2631 = vrot.slane %v2617, %v2630
    %v2632 = vcombine.low %v2576, %v2592
    %v2633 = vcombine.high %v2576, %v2592
    %v2635 = vunpack.c.l.s4 1934713408
    %v2636 = vunpack.c.0.s8 %v2635
    %v2637 = vlaneseq
    %v2638 = vshrl.u32 %v2637, 7
    %v2639 = vsub.s32 %v2636, %v2638
    %v2640 = vrot.slane %v2632, %v2639
    %v2642 = vunpack.c.l.s4 1934713408
    %v2643 = vunpack.c.0.s8 %v2642
    %v2644 = vlaneseq
    %v2645 = vshrl.u32 %v2644, 7
    %v2646 = vsub.s32 %v2643, %v2645
    %v2647 = vrot.slane %v2633, %v2646
    %v2648 = vcombine.low %v2583, %v2599
    %v2649 = vcombine.high %v2583, %v2599
    %v2651 = vunpack.c.l.s4 1934713408
    %v2652 = vunpack.c.0.s8 %v2651
    %v2653 = vlaneseq
    %v2654 = vshrl.u32 %v2653, 7
    %v2655 = vsub.s32 %v2652, %v2654
    %v2656 = vrot.slane %v2648, %v2655
    %v2658 = vunpack.c.l.s4 1934713408
    %v2659 = vunpack.c.0.s8 %v2658
    %v2660 = vlaneseq
    %v2661 = vshrl.u32 %v2660, 7
    %v2662 = vsub.s32 %v2659, %v2661
    %v2663 = vrot.slane %v2649, %v2662
    %v2664 = vcombine.low %v2608, %v2624
    %v2665 = vcombine.high %v2608, %v2624
    %v2667 = vunpack.c.l.s4 1934713408
    %v2668 = vunpack.c.0.s8 %v2667
    %v2669 = vlaneseq
    %v2670 = vshrl.u32 %v2669, 7
    %v2671 = vsub.s32 %v2668, %v2670
    %v2672 = vrot.slane %v2664, %v2671
    %v2674 = vunpack.c.l.s4 1934713408
    %v2675 = vunpack.c.0.s8 %v2674
    %v2676 = vlaneseq
    %v2677 = vshrl.u32 %v2676, 7
    %v2678 = vsub.s32 %v2675, %v2677
    %v2679 = vrot.slane %v2665, %v2678
    %v2680 = vcombine.low %v2615, %v2631
    %v2681 = vcombine.high %v2615, %v2631
    %v2683 = vunpack.c.l.s4 1934713408
    %v2684 = vunpack.c.0.s8 %v2683
    %v2685 = vlaneseq
    %v2686 = vshrl.u32 %v2685, 7
    %v2687 = vsub.s32 %v2684, %v2686
    %v2688 = vrot.slane %v2680, %v2687
    %v2690 = vunpack.c.l.s4 1934713408
    %v2691 = vunpack.c.0.s8 %v2690
    %v2692 = vlaneseq
    %v2693 = vshrl.u32 %v2692, 7
    %v2694 = vsub.s32 %v2691, %v2693
    %v2695 = vrot.slane %v2681, %v2694
    %v2696 = vcombine.low %v2640, %v2672
    %v2697 = vcombine.high %v2640, %v2672
    %v2698 = vcombine.low %v2647, %v2679
    %v2699 = vcombine.high %v2647, %v2679
    %v2700 = vcombine.low %v2656, %v2688
    %v2701 = vcombine.high %v2656, %v2688
    %v2702 = vcombine.low %v2663, %v2695
    %v2703 = vcombine.high %v2663, %v2695
    %v2704 = vcombine.low %v1906, %v1874
    %v2705 = vcombine.high %v1906, %v1874
    %v2707 = vunpack.c.l.s4 1983009808
    %v2708 = vunpack.c.0.s8 %v2707
    %v2709 = vlaneseq
    %v2710 = vshrl.u32 %v2709, 7
    %v2711 = vsub.s32 %v2708, %v2710
    %v2712 = vrot.slane %v2704, %v2711
    %v2714 = vunpack.c.l.s4 1983009808
    %v2715 = vunpack.c.0.s8 %v2714
    %v2716 = vlaneseq
    %v2717 = vshrl.u32 %v2716, 7
    %v2718 = vsub.s32 %v2715, %v2717
    %v2719 = vrot.slane %v2705, %v2718
    %v2720 = vcombine.low %v1890, %v1756
    %v2721 = vcombine.high %v1890, %v1756
    %v2723 = vunpack.c.l.s4 1983009808
    %v2724 = vunpack.c.0.s8 %v2723
    %v2725 = vlaneseq
    %v2726 = vshrl.u32 %v2725, 7
    %v2727 = vsub.s32 %v2724, %v2726
    %v2728 = vrot.slane %v2720, %v2727
    %v2730 = vunpack.c.l.s4 1983009808
    %v2731 = vunpack.c.0.s8 %v2730
    %v2732 = vlaneseq
    %v2733 = vshrl.u32 %v2732, 7
    %v2734 = vsub.s32 %v2731, %v2733
    %v2735 = vrot.slane %v2721, %v2734
    %v2736 = vcombine.low %v1026, %v994
    %v2737 = vcombine.high %v1026, %v994
    %v2739 = vunpack.c.l.s4 1983009808
    %v2740 = vunpack.c.0.s8 %v2739
    %v2741 = vlaneseq
    %v2742 = vshrl.u32 %v2741, 7
    %v2743 = vsub.s32 %v2740, %v2742
    %v2744 = vrot.slane %v2736, %v2743
    %v2746 = vunpack.c.l.s4 1983009808
    %v2747 = vunpack.c.0.s8 %v2746
    %v2748 = vlaneseq
    %v2749 = vshrl.u32 %v2748, 7
    %v2750 = vsub.s32 %v2747, %v2749
    %v2751 = vrot.slane %v2737, %v2750
    %v2752 = vcombine.low %v1010, %v876
    %v2753 = vcombine.high %v1010, %v876
    %v2755 = vunpack.c.l.s4 1983009808
    %v2756 = vunpack.c.0.s8 %v2755
    %v2757 = vlaneseq
    %v2758 = vshrl.u32 %v2757, 7
    %v2759 = vsub.s32 %v2756, %v2758
    %v2760 = vrot.slane %v2752, %v2759
    %v2762 = vunpack.c.l.s4 1983009808
    %v2763 = vunpack.c.0.s8 %v2762
    %v2764 = vlaneseq
    %v2765 = vshrl.u32 %v2764, 7
    %v2766 = vsub.s32 %v2763, %v2765
    %v2767 = vrot.slane %v2753, %v2766
    %v2768 = vcombine.low %v2712, %v2728
    %v2769 = vcombine.high %v2712, %v2728
    %v2771 = vunpack.c.l.s4 1934713408
    %v2772 = vunpack.c.0.s8 %v2771
    %v2773 = vlaneseq
    %v2774 = vshrl.u32 %v2773, 7
    %v2775 = vsub.s32 %v2772, %v2774
    %v2776 = vrot.slane %v2768, %v2775
    %v2778 = vunpack.c.l.s4 1934713408
    %v2779 = vunpack.c.0.s8 %v2778
    %v2780 = vlaneseq
    %v2781 = vshrl.u32 %v2780, 7
    %v2782 = vsub.s32 %v2779, %v2781
    %v2783 = vrot.slane %v2769, %v2782
    %v2784 = vcombine.low %v2719, %v2735
    %v2785 = vcombine.high %v2719, %v2735
    %v2787 = vunpack.c.l.s4 1934713408
    %v2788 = vunpack.c.0.s8 %v2787
    %v2789 = vlaneseq
    %v2790 = vshrl.u32 %v2789, 7
    %v2791 = vsub.s32 %v2788, %v2790
    %v2792 = vrot.slane %v2784, %v2791
    %v2794 = vunpack.c.l.s4 1934713408
    %v2795 = vunpack.c.0.s8 %v2794
    %v2796 = vlaneseq
    %v2797 = vshrl.u32 %v2796, 7
    %v2798 = vsub.s32 %v2795, %v2797
    %v2799 = vrot.slane %v2785, %v2798
    %v2800 = vcombine.low %v2744, %v2760
    %v2801 = vcombine.high %v2744, %v2760
    %v2803 = vunpack.c.l.s4 1934713408
    %v2804 = vunpack.c.0.s8 %v2803
    %v2805 = vlaneseq
    %v2806 = vshrl.u32 %v2805, 7
    %v2807 = vsub.s32 %v2804, %v2806
    %v2808 = vrot.slane %v2800, %v2807
    %v2810 = vunpack.c.l.s4 1934713408
    %v2811 = vunpack.c.0.s8 %v2810
    %v2812 = vlaneseq
    %v2813 = vshrl.u32 %v2812, 7
    %v2814 = vsub.s32 %v2811, %v2813
    %v2815 = vrot.slane %v2801, %v2814
    %v2816 = vcombine.low %v2751, %v2767
    %v2817 = vcombine.high %v2751, %v2767
    %v2819 = vunpack.c.l.s4 1934713408
    %v2820 = vunpack.c.0.s8 %v2819
    %v2821 = vlaneseq
    %v2822 = vshrl.u32 %v2821, 7
    %v2823 = vsub.s32 %v2820, %v2822
    %v2824 = vrot.slane %v2816, %v2823
    %v2826 = vunpack.c.l.s4 1934713408
    %v2827 = vunpack.c.0.s8 %v2826
    %v2828 = vlaneseq
    %v2829 = vshrl.u32 %v2828, 7
    %v2830 = vsub.s32 %v2827, %v2829
    %v2831 = vrot.slane %v2817, %v2830
    %v2832 = vcombine.low %v2776, %v2808
    %v2833 = vcombine.high %v2776, %v2808
    %v2834 = vcombine.low %v2783, %v2815
    %v2835 = vcombine.high %v2783, %v2815
    %v2836 = vcombine.low %v2792, %v2824
    %v2837 = vcombine.high %v2792, %v2824
    %v2838 = vcombine.low %v2799, %v2831
    %v2839 = vcombine.high %v2799, %v2831
    %v2840 = vcombine.high %v140, 0.0
    %v2842 = vunpack.c.l.s4 1983009808
    %v2843 = vunpack.c.0.s8 %v2842
    %v2844 = vlaneseq
    %v2845 = vshrl.u32 %v2844, 7
    %v2846 = vsub.s32 %v2843, %v2845
    %v2847 = vrot.slane %v140, %v2846
    %v2849 = vunpack.c.l.s4 1983009808
    %v2850 = vunpack.c.0.s8 %v2849
    %v2851 = vlaneseq
    %v2852 = vshrl.u32 %v2851, 7
    %v2853 = vsub.s32 %v2850, %v2852
    %v2854 = vrot.slane %v2840, %v2853
    %v2855 = vcombine.low %v2847, 1.0
    %v2856 = vcombine.high %v2847, 1.0
    %v2858 = vunpack.c.l.s4 1934713408
    %v2859 = vunpack.c.0.s8 %v2858
    %v2860 = vlaneseq
    %v2861 = vshrl.u32 %v2860, 7
    %v2862 = vsub.s32 %v2859, %v2861
    %v2863 = vrot.slane %v2855, %v2862
    %v2865 = vunpack.c.l.s4 1934713408
    %v2866 = vunpack.c.0.s8 %v2865
    %v2867 = vlaneseq
    %v2868 = vshrl.u32 %v2867, 7
    %v2869 = vsub.s32 %v2866, %v2868
    %v2870 = vrot.slane %v2856, %v2869
    %v2871 = vcombine.low %v2854, %v2208
    %v2872 = vcombine.high %v2854, %v2208
    %v2874 = vunpack.c.l.s4 1934713408
    %v2875 = vunpack.c.0.s8 %v2874
    %v2876 = vlaneseq
    %v2877 = vshrl.u32 %v2876, 7
    %v2878 = vsub.s32 %v2875, %v2877
    %v2879 = vrot.slane %v2871, %v2878
    %v2881 = vunpack.c.l.s4 1934713408
    %v2882 = vunpack.c.0.s8 %v2881
    %v2883 = vlaneseq
    %v2884 = vshrl.u32 %v2883, 7
    %v2885 = vsub.s32 %v2882, %v2884
    %v2886 = vrot.slane %v2872, %v2885
    %v2887 = vcombine.high %v2863, 0.0
    %v2888 = vcombine.high %v2870, 0.0
    %v2889 = vcombine.high %v2879, 0.0
    %v2890 = vcombine.high %v2886, 0.0
    %v2891 = vcombine.low %v1899, %v1867
    %v2892 = vcombine.high %v1899, %v1867
    %v2894 = vunpack.c.l.s4 1983009808
    %v2895 = vunpack.c.0.s8 %v2894
    %v2896 = vlaneseq
    %v2897 = vshrl.u32 %v2896, 7
    %v2898 = vsub.s32 %v2895, %v2897
    %v2899 = vrot.slane %v2891, %v2898
    %v2901 = vunpack.c.l.s4 1983009808
    %v2902 = vunpack.c.0.s8 %v2901
    %v2903 = vlaneseq
    %v2904 = vshrl.u32 %v2903, 7
    %v2905 = vsub.s32 %v2902, %v2904
    %v2906 = vrot.slane %v2892, %v2905
    %v2907 = vcombine.low %v1883, %v1447
    %v2908 = vcombine.high %v1883, %v1447
    %v2910 = vunpack.c.l.s4 1983009808
    %v2911 = vunpack.c.0.s8 %v2910
    %v2912 = vlaneseq
    %v2913 = vshrl.u32 %v2912, 7
    %v2914 = vsub.s32 %v2911, %v2913
    %v2915 = vrot.slane %v2907, %v2914
    %v2917 = vunpack.c.l.s4 1983009808
    %v2918 = vunpack.c.0.s8 %v2917
    %v2919 = vlaneseq
    %v2920 = vshrl.u32 %v2919, 7
    %v2921 = vsub.s32 %v2918, %v2920
    %v2922 = vrot.slane %v2908, %v2921
    %v2923 = vcombine.low %v1019, %v987
    %v2924 = vcombine.high %v1019, %v987
    %v2926 = vunpack.c.l.s4 1983009808
    %v2927 = vunpack.c.0.s8 %v2926
    %v2928 = vlaneseq
    %v2929 = vshrl.u32 %v2928, 7
    %v2930 = vsub.s32 %v2927, %v2929
    %v2931 = vrot.slane %v2923, %v2930
    %v2933 = vunpack.c.l.s4 1983009808
    %v2934 = vunpack.c.0.s8 %v2933
    %v2935 = vlaneseq
    %v2936 = vshrl.u32 %v2935, 7
    %v2937 = vsub.s32 %v2934, %v2936
    %v2938 = vrot.slane %v2924, %v2937
    %v2939 = vcombine.low %v1003, %v567
    %v2940 = vcombine.high %v1003, %v567
    %v2942 = vunpack.c.l.s4 1983009808
    %v2943 = vunpack.c.0.s8 %v2942
    %v2944 = vlaneseq
    %v2945 = vshrl.u32 %v2944, 7
    %v2946 = vsub.s32 %v2943, %v2945
    %v2947 = vrot.slane %v2939, %v2946
    %v2949 = vunpack.c.l.s4 1983009808
    %v2950 = vunpack.c.0.s8 %v2949
    %v2951 = vlaneseq
    %v2952 = vshrl.u32 %v2951, 7
    %v2953 = vsub.s32 %v2950, %v2952
    %v2954 = vrot.slane %v2940, %v2953
    %v2955 = vcombine.low %v2899, %v2915
    %v2956 = vcombine.high %v2899, %v2915
    %v2958 = vunpack.c.l.s4 1934713408
    %v2959 = vunpack.c.0.s8 %v2958
    %v2960 = vlaneseq
    %v2961 = vshrl.u32 %v2960, 7
    %v2962 = vsub.s32 %v2959, %v2961
    %v2963 = vrot.slane %v2955, %v2962
    %v2965 = vunpack.c.l.s4 1934713408
    %v2966 = vunpack.c.0.s8 %v2965
    %v2967 = vlaneseq
    %v2968 = vshrl.u32 %v2967, 7
    %v2969 = vsub.s32 %v2966, %v2968
    %v2970 = vrot.slane %v2956, %v2969
    %v2971 = vcombine.low %v2906, %v2922
    %v2972 = vcombine.high %v2906, %v2922
    %v2974 = vunpack.c.l.s4 1934713408
    %v2975 = vunpack.c.0.s8 %v2974
    %v2976 = vlaneseq
    %v2977 = vshrl.u32 %v2976, 7
    %v2978 = vsub.s32 %v2975, %v2977
    %v2979 = vrot.slane %v2971, %v2978
    %v2981 = vunpack.c.l.s4 1934713408
    %v2982 = vunpack.c.0.s8 %v2981
    %v2983 = vlaneseq
    %v2984 = vshrl.u32 %v2983, 7
    %v2985 = vsub.s32 %v2982, %v2984
    %v2986 = vrot.slane %v2972, %v2985
    %v2987 = vcombine.low %v2931, %v2947
    %v2988 = vcombine.high %v2931, %v2947
    %v2990 = vunpack.c.l.s4 1934713408
    %v2991 = vunpack.c.0.s8 %v2990
    %v2992 = vlaneseq
    %v2993 = vshrl.u32 %v2992, 7
    %v2994 = vsub.s32 %v2991, %v2993
    %v2995 = vrot.slane %v2987, %v2994
    %v2997 = vunpack.c.l.s4 1934713408
    %v2998 = vunpack.c.0.s8 %v2997
    %v2999 = vlaneseq
    %v3000 = vshrl.u32 %v2999, 7
    %v3001 = vsub.s32 %v2998, %v3000
    %v3002 = vrot.slane %v2988, %v3001
    %v3003 = vcombine.low %v2938, %v2954
    %v3004 = vcombine.high %v2938, %v2954
    %v3006 = vunpack.c.l.s4 1934713408
    %v3007 = vunpack.c.0.s8 %v3006
    %v3008 = vlaneseq
    %v3009 = vshrl.u32 %v3008, 7
    %v3010 = vsub.s32 %v3007, %v3009
    %v3011 = vrot.slane %v3003, %v3010
    %v3013 = vunpack.c.l.s4 1934713408
    %v3014 = vunpack.c.0.s8 %v3013
    %v3015 = vlaneseq
    %v3016 = vshrl.u32 %v3015, 7
    %v3017 = vsub.s32 %v3014, %v3016
    %v3018 = vrot.slane %v3004, %v3017
    %v3019 = vcombine.low %v2963, %v2995
    %v3020 = vcombine.high %v2963, %v2995
    %v3021 = vcombine.low %v2970, %v3002
    %v3022 = vcombine.high %v2970, %v3002
    %v3023 = vcombine.low %v2979, %v3011
    %v3024 = vcombine.high %v2979, %v3011
    %v3025 = vcombine.low %v2986, %v3018
    %v3026 = vcombine.high %v2986, %v3018
    %v3027 = vcombine.low %v1907, %v1875
    %v3028 = vcombine.high %v1907, %v1875
    %v3030 = vunpack.c.l.s4 1983009808
    %v3031 = vunpack.c.0.s8 %v3030
    %v3032 = vlaneseq
    %v3033 = vshrl.u32 %v3032, 7
    %v3034 = vsub.s32 %v3031, %v3033
    %v3035 = vrot.slane %v3027, %v3034
    %v3037 = vunpack.c.l.s4 1983009808
    %v3038 = vunpack.c.0.s8 %v3037
    %v3039 = vlaneseq
    %v3040 = vshrl.u32 %v3039, 7
    %v3041 = vsub.s32 %v3038, %v3040
    %v3042 = vrot.slane %v3028, %v3041
    %v3043 = vcombine.low %v1891, %v1859
    %v3044 = vcombine.high %v1891, %v1859
    %v3046 = vunpack.c.l.s4 1983009808
    %v3047 = vunpack.c.0.s8 %v3046
    %v3048 = vlaneseq
    %v3049 = vshrl.u32 %v3048, 7
    %v3050 = vsub.s32 %v3047, %v3049
    %v3051 = vrot.slane %v3043, %v3050
    %v3053 = vunpack.c.l.s4 1983009808
    %v3054 = vunpack.c.0.s8 %v3053
    %v3055 = vlaneseq
    %v3056 = vshrl.u32 %v3055, 7
    %v3057 = vsub.s32 %v3054, %v3056
    %v3058 = vrot.slane %v3044, %v3057
    %v3059 = vcombine.low %v1027, %v995
    %v3060 = vcombine.high %v1027, %v995
    %v3062 = vunpack.c.l.s4 1983009808
    %v3063 = vunpack.c.0.s8 %v3062
    %v3064 = vlaneseq
    %v3065 = vshrl.u32 %v3064, 7
    %v3066 = vsub.s32 %v3063, %v3065
    %v3067 = vrot.slane %v3059, %v3066
    %v3069 = vunpack.c.l.s4 1983009808
    %v3070 = vunpack.c.0.s8 %v3069
    %v3071 = vlaneseq
    %v3072 = vshrl.u32 %v3071, 7
    %v3073 = vsub.s32 %v3070, %v3072
    %v3074 = vrot.slane %v3060, %v3073
    %v3075 = vcombine.low %v1011, %v979
    %v3076 = vcombine.high %v1011, %v979
    %v3078 = vunpack.c.l.s4 1983009808
    %v3079 = vunpack.c.0.s8 %v3078
    %v3080 = vlaneseq
    %v3081 = vshrl.u32 %v3080, 7
    %v3082 = vsub.s32 %v3079, %v3081
    %v3083 = vrot.slane %v3075, %v3082
    %v3085 = vunpack.c.l.s4 1983009808
    %v3086 = vunpack.c.0.s8 %v3085
    %v3087 = vlaneseq
    %v3088 = vshrl.u32 %v3087, 7
    %v3089 = vsub.s32 %v3086, %v3088
    %v3090 = vrot.slane %v3076, %v3089
    %v3091 = vcombine.low %v3035, %v3051
    %v3092 = vcombine.high %v3035, %v3051
    %v3094 = vunpack.c.l.s4 1934713408
    %v3095 = vunpack.c.0.s8 %v3094
    %v3096 = vlaneseq
    %v3097 = vshrl.u32 %v3096, 7
    %v3098 = vsub.s32 %v3095, %v3097
    %v3099 = vrot.slane %v3091, %v3098
    %v3101 = vunpack.c.l.s4 1934713408
    %v3102 = vunpack.c.0.s8 %v3101
    %v3103 = vlaneseq
    %v3104 = vshrl.u32 %v3103, 7
    %v3105 = vsub.s32 %v3102, %v3104
    %v3106 = vrot.slane %v3092, %v3105
    %v3107 = vcombine.low %v3042, %v3058
    %v3108 = vcombine.high %v3042, %v3058
    %v3110 = vunpack.c.l.s4 1934713408
    %v3111 = vunpack.c.0.s8 %v3110
    %v3112 = vlaneseq
    %v3113 = vshrl.u32 %v3112, 7
    %v3114 = vsub.s32 %v3111, %v3113
    %v3115 = vrot.slane %v3107, %v3114
    %v3117 = vunpack.c.l.s4 1934713408
    %v3118 = vunpack.c.0.s8 %v3117
    %v3119 = vlaneseq
    %v3120 = vshrl.u32 %v3119, 7
    %v3121 = vsub.s32 %v3118, %v3120
    %v3122 = vrot.slane %v3108, %v3121
    %v3123 = vcombine.low %v3067, %v3083
    %v3124 = vcombine.high %v3067, %v3083
    %v3126 = vunpack.c.l.s4 1934713408
    %v3127 = vunpack.c.0.s8 %v3126
    %v3128 = vlaneseq
    %v3129 = vshrl.u32 %v3128, 7
    %v3130 = vsub.s32 %v3127, %v3129
    %v3131 = vrot.slane %v3123, %v3130
    %v3133 = vunpack.c.l.s4 1934713408
    %v3134 = vunpack.c.0.s8 %v3133
    %v3135 = vlaneseq
    %v3136 = vshrl.u32 %v3135, 7
    %v3137 = vsub.s32 %v3134, %v3136
    %v3138 = vrot.slane %v3124, %v3137
    %v3139 = vcombine.low %v3074, %v3090
    %v3140 = vcombine.high %v3074, %v3090
    %v3142 = vunpack.c.l.s4 1934713408
    %v3143 = vunpack.c.0.s8 %v3142
    %v3144 = vlaneseq
    %v3145 = vshrl.u32 %v3144, 7
    %v3146 = vsub.s32 %v3143, %v3145
    %v3147 = vrot.slane %v3139, %v3146
    %v3149 = vunpack.c.l.s4 1934713408
    %v3150 = vunpack.c.0.s8 %v3149
    %v3151 = vlaneseq
    %v3152 = vshrl.u32 %v3151, 7
    %v3153 = vsub.s32 %v3150, %v3152
    %v3154 = vrot.slane %v3140, %v3153
    %v3155 = vcombine.low %v3099, %v3131
    %v3156 = vcombine.high %v3099, %v3131
    %v3157 = vcombine.low %v3106, %v3138
    %v3158 = vcombine.high %v3106, %v3138
    %v3159 = vcombine.low %v3115, %v3147
    %v3160 = vcombine.high %v3115, %v3147
    %v3161 = vcombine.low %v3122, %v3154
    %v3162 = vcombine.high %v3122, %v3154
    %v3163 = vcombine.high %v147, 0.0
    %v3165 = vunpack.c.l.s4 1983009808
    %v3166 = vunpack.c.0.s8 %v3165
    %v3167 = vlaneseq
    %v3168 = vshrl.u32 %v3167, 7
    %v3169 = vsub.s32 %v3166, %v3168
    %v3170 = vrot.slane %v147, %v3169
    %v3172 = vunpack.c.l.s4 1983009808
    %v3173 = vunpack.c.0.s8 %v3172
    %v3174 = vlaneseq
    %v3175 = vshrl.u32 %v3174, 7
    %v3176 = vsub.s32 %v3173, %v3175
    %v3177 = vrot.slane %v3163, %v3176
    %v3178 = vcombine.low %v3170, 1.0
    %v3179 = vcombine.high %v3170, 1.0
    %v3181 = vunpack.c.l.s4 1934713408
    %v3182 = vunpack.c.0.s8 %v3181
    %v3183 = vlaneseq
    %v3184 = vshrl.u32 %v3183, 7
    %v3185 = vsub.s32 %v3182, %v3184
    %v3186 = vrot.slane %v3178, %v3185
    %v3188 = vunpack.c.l.s4 1934713408
    %v3189 = vunpack.c.0.s8 %v3188
    %v3190 = vlaneseq
    %v3191 = vshrl.u32 %v3190, 7
    %v3192 = vsub.s32 %v3189, %v3191
    %v3193 = vrot.slane %v3179, %v3192
    %v3194 = vcombine.low %v3177, %v2208
    %v3195 = vcombine.high %v3177, %v2208
    %v3197 = vunpack.c.l.s4 1934713408
    %v3198 = vunpack.c.0.s8 %v3197
    %v3199 = vlaneseq
    %v3200 = vshrl.u32 %v3199, 7
    %v3201 = vsub.s32 %v3198, %v3200
    %v3202 = vrot.slane %v3194, %v3201
    %v3204 = vunpack.c.l.s4 1934713408
    %v3205 = vunpack.c.0.s8 %v3204
    %v3206 = vlaneseq
    %v3207 = vshrl.u32 %v3206, 7
    %v3208 = vsub.s32 %v3205, %v3207
    %v3209 = vrot.slane %v3195, %v3208
    %v3210 = vcombine.high %v3186, 0.0
    %v3211 = vcombine.high %v3193, 0.0
    %v3212 = vcombine.high %v3202, 0.0
    %v3213 = vcombine.high %v3209, 0.0
    %3217 = vrot.lane.b32.xlu0 %v2037, 32
    %v3218 = vpop.permute.xlu0 %3217
    %3219 = vrot.lane.b32.xlu0 %v2173, 32
    %v3220 = vpop.permute.xlu0 %3219
    %3221 = vrot.lane.b32.xlu0 %v2241, 32
    %v3222 = vpop.permute.xlu0 %3221
    %3229 = vrot.lane.b32.xlu0 %v2038, 64
    %v3230 = vpop.permute.xlu0 %3229
    %3231 = vrot.lane.b32.xlu0 %v2174, 64
    %v3232 = vpop.permute.xlu0 %3231
    %3233 = vrot.lane.b32.xlu0 %v2224, 64
    %v3234 = vpop.permute.xlu0 %3233
    %3241 = vrot.lane.b32.xlu0 %v2039, 96
    %v3242 = vpop.permute.xlu0 %3241
    %3243 = vrot.lane.b32.xlu0 %v2175, 96
    %v3244 = vpop.permute.xlu0 %3243
    %3245 = vrot.lane.b32.xlu0 %v2242, 96
    %v3246 = vpop.permute.xlu0 %3245
    %3253 = vrot.lane.b32.xlu0 %v2041, 32
    %v3254 = vpop.permute.xlu0 %3253
    %3255 = vrot.lane.b32.xlu0 %v2177, 32
    %v3256 = vpop.permute.xlu0 %3255
    %3257 = vrot.lane.b32.xlu0 %v2243, 32
    %v3258 = vpop.permute.xlu0 %3257
    %3265 = vrot.lane.b32.xlu0 %v2042, 64
    %v3266 = vpop.permute.xlu0 %3265
    %3267 = vrot.lane.b32.xlu0 %v2178, 64
    %v3268 = vpop.permute.xlu0 %3267
    %3269 = vrot.lane.b32.xlu0 %v2240, 64
    %v3270 = vpop.permute.xlu0 %3269
    %3277 = vrot.lane.b32.xlu0 %v2043, 96
    %v3278 = vpop.permute.xlu0 %3277
    %3279 = vrot.lane.b32.xlu0 %v2179, 96
    %v3280 = vpop.permute.xlu0 %3279
    %3281 = vrot.lane.b32.xlu0 %v2244, 96
    %v3282 = vpop.permute.xlu0 %3281
    %3289 = vrot.lane.b32.xlu0 %v2374, 32
    %v3290 = vpop.permute.xlu0 %3289
    %3291 = vrot.lane.b32.xlu0 %v2510, 32
    %v3292 = vpop.permute.xlu0 %3291
    %3293 = vrot.lane.b32.xlu0 %v2564, 32
    %v3294 = vpop.permute.xlu0 %3293
    %3301 = vrot.lane.b32.xlu0 %v2375, 64
    %v3302 = vpop.permute.xlu0 %3301
    %3303 = vrot.lane.b32.xlu0 %v2511, 64
    %v3304 = vpop.permute.xlu0 %3303
    %3305 = vrot.lane.b32.xlu0 %v2547, 64
    %v3306 = vpop.permute.xlu0 %3305
    %3313 = vrot.lane.b32.xlu0 %v2376, 96
    %v3314 = vpop.permute.xlu0 %3313
    %3315 = vrot.lane.b32.xlu0 %v2512, 96
    %v3316 = vpop.permute.xlu0 %3315
    %3317 = vrot.lane.b32.xlu0 %v2565, 96
    %v3318 = vpop.permute.xlu0 %3317
    %3325 = vrot.lane.b32.xlu0 %v2378, 32
    %v3326 = vpop.permute.xlu0 %3325
    %3327 = vrot.lane.b32.xlu0 %v2514, 32
    %v3328 = vpop.permute.xlu0 %3327
    %3329 = vrot.lane.b32.xlu0 %v2566, 32
    %v3330 = vpop.permute.xlu0 %3329
    %3337 = vrot.lane.b32.xlu0 %v2379, 64
    %v3338 = vpop.permute.xlu0 %3337
    %3339 = vrot.lane.b32.xlu0 %v2515, 64
    %v3340 = vpop.permute.xlu0 %3339
    %3341 = vrot.lane.b32.xlu0 %v2563, 64
    %v3342 = vpop.permute.xlu0 %3341
    %3349 = vrot.lane.b32.xlu0 %v2380, 96
    %v3350 = vpop.permute.xlu0 %3349
    %3351 = vrot.lane.b32.xlu0 %v2516, 96
    %v3352 = vpop.permute.xlu0 %3351
    %3353 = vrot.lane.b32.xlu0 %v2567, 96
    %v3354 = vpop.permute.xlu0 %3353
    %3361 = vrot.lane.b32.xlu0 %v2697, 32
    %v3362 = vpop.permute.xlu0 %3361
    %3363 = vrot.lane.b32.xlu0 %v2833, 32
    %v3364 = vpop.permute.xlu0 %3363
    %3365 = vrot.lane.b32.xlu0 %v2887, 32
    %v3366 = vpop.permute.xlu0 %3365
    %3373 = vrot.lane.b32.xlu0 %v2698, 64
    %v3374 = vpop.permute.xlu0 %3373
    %3375 = vrot.lane.b32.xlu0 %v2834, 64
    %v3376 = vpop.permute.xlu0 %3375
    %3377 = vrot.lane.b32.xlu0 %v2870, 64
    %v3378 = vpop.permute.xlu0 %3377
    %3385 = vrot.lane.b32.xlu0 %v2699, 96
    %v3386 = vpop.permute.xlu0 %3385
    %3387 = vrot.lane.b32.xlu0 %v2835, 96
    %v3388 = vpop.permute.xlu0 %3387
    %3389 = vrot.lane.b32.xlu0 %v2888, 96
    %v3390 = vpop.permute.xlu0 %3389
    %3397 = vrot.lane.b32.xlu0 %v2701, 32
    %v3398 = vpop.permute.xlu0 %3397
    %3399 = vrot.lane.b32.xlu0 %v2837, 32
    %v3400 = vpop.permute.xlu0 %3399
    %3401 = vrot.lane.b32.xlu0 %v2889, 32
    %v3402 = vpop.permute.xlu0 %3401
    %3409 = vrot.lane.b32.xlu0 %v2702, 64
    %v3410 = vpop.permute.xlu0 %3409
    %3411 = vrot.lane.b32.xlu0 %v2838, 64
    %v3412 = vpop.permute.xlu0 %3411
    %3413 = vrot.lane.b32.xlu0 %v2886, 64
    %v3414 = vpop.permute.xlu0 %3413
    %3421 = vrot.lane.b32.xlu0 %v2703, 96
    %v3422 = vpop.permute.xlu0 %3421
    %3423 = vrot.lane.b32.xlu0 %v2839, 96
    %v3424 = vpop.permute.xlu0 %3423
    %3425 = vrot.lane.b32.xlu0 %v2890, 96
    %v3426 = vpop.permute.xlu0 %3425
    %3433 = vrot.lane.b32.xlu0 %v3020, 32
    %v3434 = vpop.permute.xlu0 %3433
    %3435 = vrot.lane.b32.xlu0 %v3156, 32
    %v3436 = vpop.permute.xlu0 %3435
    %3437 = vrot.lane.b32.xlu0 %v3210, 32
    %v3438 = vpop.permute.xlu0 %3437
    %3445 = vrot.lane.b32.xlu0 %v3021, 64
    %v3446 = vpop.permute.xlu0 %3445
    %3447 = vrot.lane.b32.xlu0 %v3157, 64
    %v3448 = vpop.permute.xlu0 %3447
    %3449 = vrot.lane.b32.xlu0 %v3193, 64
    %v3450 = vpop.permute.xlu0 %3449
    %3457 = vrot.lane.b32.xlu0 %v3022, 96
    %v3458 = vpop.permute.xlu0 %3457
    %3459 = vrot.lane.b32.xlu0 %v3158, 96
    %v3460 = vpop.permute.xlu0 %3459
    %3461 = vrot.lane.b32.xlu0 %v3211, 96
    %v3462 = vpop.permute.xlu0 %3461
    %3469 = vrot.lane.b32.xlu0 %v3024, 32
    %v3470 = vpop.permute.xlu0 %3469
    %3471 = vrot.lane.b32.xlu0 %v3160, 32
    %v3472 = vpop.permute.xlu0 %3471
    %3473 = vrot.lane.b32.xlu0 %v3212, 32
    %v3474 = vpop.permute.xlu0 %3473
    %3481 = vrot.lane.b32.xlu0 %v3025, 64
    %v3482 = vpop.permute.xlu0 %3481
    %3483 = vrot.lane.b32.xlu0 %v3161, 64
    %v3484 = vpop.permute.xlu0 %3483
    %3485 = vrot.lane.b32.xlu0 %v3209, 64
    %v3486 = vpop.permute.xlu0 %3485
    %3493 = vrot.lane.b32.xlu0 %v3026, 96
    %v3494 = vpop.permute.xlu0 %3493
    %3495 = vrot.lane.b32.xlu0 %v3162, 96
    %v3496 = vpop.permute.xlu0 %3495
    %3497 = vrot.lane.b32.xlu0 %v3213, 96
    %v3498 = vpop.permute.xlu0 %3497
    %vm3502 = vcmask 261120
    %v3503 = vsel %vm3502, %v2036, %v3218
    %v3504 = vsel %vm3502, %v2172, %v3220
    %v3505 = vsel %vm3502, %v2217, %v3222
    %vm3506 = vcmask 523264
    %v3507 = vsel %vm3506, %v3503, %v3230
    %v3508 = vsel %vm3506, %v3504, %v3232
    %v3509 = vsel %vm3506, %v3505, %v3234
    %vm3510 = vcmask 785408
    %v3511 = vsel %vm3510, %v3507, %v3242
    %v3512 = vsel %vm3510, %v3508, %v3244
    %v3513 = vsel %vm3510, %v3509, %v3246
    %v3514 = vsel %vm3502, %v2040, %v3254
    %v3515 = vsel %vm3502, %v2176, %v3256
    %v3516 = vsel %vm3502, %v2233, %v3258
    %v3517 = vsel %vm3506, %v3514, %v3266
    %v3518 = vsel %vm3506, %v3515, %v3268
    %v3519 = vsel %vm3506, %v3516, %v3270
    %v3520 = vsel %vm3510, %v3517, %v3278
    %v3521 = vsel %vm3510, %v3518, %v3280
    %v3522 = vsel %vm3510, %v3519, %v3282
    %v3523 = vsel %vm3502, %v2373, %v3290
    %v3524 = vsel %vm3502, %v2509, %v3292
    %v3525 = vsel %vm3502, %v2540, %v3294
    %v3526 = vsel %vm3506, %v3523, %v3302
    %v3527 = vsel %vm3506, %v3524, %v3304
    %v3528 = vsel %vm3506, %v3525, %v3306
    %v3529 = vsel %vm3510, %v3526, %v3314
    %v3530 = vsel %vm3510, %v3527, %v3316
    %v3531 = vsel %vm3510, %v3528, %v3318
    %v3532 = vsel %vm3502, %v2377, %v3326
    %v3533 = vsel %vm3502, %v2513, %v3328
    %v3534 = vsel %vm3502, %v2556, %v3330
    %v3535 = vsel %vm3506, %v3532, %v3338
    %v3536 = vsel %vm3506, %v3533, %v3340
    %v3537 = vsel %vm3506, %v3534, %v3342
    %v3538 = vsel %vm3510, %v3535, %v3350
    %v3539 = vsel %vm3510, %v3536, %v3352
    %v3540 = vsel %vm3510, %v3537, %v3354
    %v3541 = vsel %vm3502, %v2696, %v3362
    %v3542 = vsel %vm3502, %v2832, %v3364
    %v3543 = vsel %vm3502, %v2863, %v3366
    %v3544 = vsel %vm3506, %v3541, %v3374
    %v3545 = vsel %vm3506, %v3542, %v3376
    %v3546 = vsel %vm3506, %v3543, %v3378
    %v3547 = vsel %vm3510, %v3544, %v3386
    %v3548 = vsel %vm3510, %v3545, %v3388
    %v3549 = vsel %vm3510, %v3546, %v3390
    %v3550 = vsel %vm3502, %v2700, %v3398
    %v3551 = vsel %vm3502, %v2836, %v3400
    %v3552 = vsel %vm3502, %v2879, %v3402
    %v3553 = vsel %vm3506, %v3550, %v3410
    %v3554 = vsel %vm3506, %v3551, %v3412
    %v3555 = vsel %vm3506, %v3552, %v3414
    %v3556 = vsel %vm3510, %v3553, %v3422
    %v3557 = vsel %vm3510, %v3554, %v3424
    %v3558 = vsel %vm3510, %v3555, %v3426
    %v3559 = vsel %vm3502, %v3019, %v3434
    %v3560 = vsel %vm3502, %v3155, %v3436
    %v3561 = vsel %vm3502, %v3186, %v3438
    %v3562 = vsel %vm3506, %v3559, %v3446
    %v3563 = vsel %vm3506, %v3560, %v3448
    %v3564 = vsel %vm3506, %v3561, %v3450
    %v3565 = vsel %vm3510, %v3562, %v3458
    %v3566 = vsel %vm3510, %v3563, %v3460
    %v3567 = vsel %vm3510, %v3564, %v3462
    %v3568 = vsel %vm3502, %v3023, %v3470
    %v3569 = vsel %vm3502, %v3159, %v3472
    %v3570 = vsel %vm3502, %v3202, %v3474
    %v3571 = vsel %vm3506, %v3568, %v3482
    %v3572 = vsel %vm3506, %v3569, %v3484
    %v3573 = vsel %vm3506, %v3570, %v3486
    %v3574 = vsel %vm3510, %v3571, %v3494
    %v3575 = vsel %vm3510, %v3572, %v3496
    %v3576 = vsel %vm3510, %v3573, %v3498
    %v3577 = vld [vmem:[%s2] sm:$0xff]
    %v3578 = vld [vmem:[%s2 + $0x8] sm:$0xff]
    %v3579 = vld [vmem:[%s2 + $0x10] sm:$0x3]
    %3580 = vxpose.xlu0.b32.start [1/16] %v3511, 128
    %3581 = vxpose.xlu0.b32.cont [2/16] %v3512, 128
    %3582 = vxpose.xlu0.b32.cont [3/16] %v3513, 128
    %3583 = vxpose.xlu0.b32.cont [4/16] 0.0, 128
    %3584 = vxpose.xlu0.b32.cont [5/16] 0.0, 128
    %3585 = vxpose.xlu0.b32.cont [6/16] 0.0, 128
    %3586 = vxpose.xlu0.b32.cont [7/16] 0.0, 128
    %3587 = vxpose.xlu0.b32.cont [8/16] 0.0, 128
    %3588 = vxpose.xlu0.b32.cont [9/16] 0.0, 128
    %3589 = vxpose.xlu0.b32.cont [10/16] 0.0, 128
    %3590 = vxpose.xlu0.b32.cont [11/16] 0.0, 128
    %3591 = vxpose.xlu0.b32.cont [12/16] 0.0, 128
    %3592 = vxpose.xlu0.b32.cont [13/16] 0.0, 128
    %3593 = vxpose.xlu0.b32.cont [14/16] 0.0, 128
    %3594 = vxpose.xlu0.b32.cont [15/16] 0.0, 128
    %3595 = vxpose.xlu0.b32.end [16/16] 0.0, 128
    %v3596 = vpop.trf.xlu0
    %v3597 = vpop.trf.xlu0
    %v3598 = vpop.trf.xlu0
    %v3599 = vpop.trf.xlu0
    %v3600 = vpop.trf.xlu0
    %v3601 = vpop.trf.xlu0
    %v3602 = vpop.trf.xlu0
    %v3603 = vpop.trf.xlu0
    %v3604 = vpop.trf.xlu0
    %v3605 = vpop.trf.xlu0
    %v3606 = vpop.trf.xlu0
    %v3607 = vpop.trf.xlu0
    %v3608 = vpop.trf.xlu0
    %v3609 = vpop.trf.xlu0
    %v3610 = vpop.trf.xlu0
    %v3611 = vpop.trf.xlu0
    %3612 = vxpose.xlu0.b32.start [1/16] %v3520, 128
    %3613 = vxpose.xlu0.b32.cont [2/16] %v3521, 128
    %3614 = vxpose.xlu0.b32.cont [3/16] %v3522, 128
    %3615 = vxpose.xlu0.b32.cont [4/16] 0.0, 128
    %3616 = vxpose.xlu0.b32.cont [5/16] 0.0, 128
    %3617 = vxpose.xlu0.b32.cont [6/16] 0.0, 128
    %3618 = vxpose.xlu0.b32.cont [7/16] 0.0, 128
    %3619 = vxpose.xlu0.b32.cont [8/16] 0.0, 128
    %3620 = vxpose.xlu0.b32.cont [9/16] 0.0, 128
    %3621 = vxpose.xlu0.b32.cont [10/16] 0.0, 128
    %3622 = vxpose.xlu0.b32.cont [11/16] 0.0, 128
    %3623 = vxpose.xlu0.b32.cont [12/16] 0.0, 128
    %3624 = vxpose.xlu0.b32.cont [13/16] 0.0, 128
    %3625 = vxpose.xlu0.b32.cont [14/16] 0.0, 128
    %3626 = vxpose.xlu0.b32.cont [15/16] 0.0, 128
    %3627 = vxpose.xlu0.b32.end [16/16] 0.0, 128
    %v3628 = vpop.trf.xlu0
    %v3629 = vpop.trf.xlu0
    %v3630 = vpop.trf.xlu0
    %v3631 = vpop.trf.xlu0
    %v3632 = vpop.trf.xlu0
    %v3633 = vpop.trf.xlu0
    %v3634 = vpop.trf.xlu0
    %v3635 = vpop.trf.xlu0
    %v3636 = vpop.trf.xlu0
    %v3637 = vpop.trf.xlu0
    %v3638 = vpop.trf.xlu0
    %v3639 = vpop.trf.xlu0
    %v3640 = vpop.trf.xlu0
    %v3641 = vpop.trf.xlu0
    %v3642 = vpop.trf.xlu0
    %v3643 = vpop.trf.xlu0
    %3644 = vxpose.xlu0.b32.start [1/16] %v3529, 128
    %3645 = vxpose.xlu0.b32.cont [2/16] %v3530, 128
    %3646 = vxpose.xlu0.b32.cont [3/16] %v3531, 128
    %3647 = vxpose.xlu0.b32.cont [4/16] 0.0, 128
    %3648 = vxpose.xlu0.b32.cont [5/16] 0.0, 128
    %3649 = vxpose.xlu0.b32.cont [6/16] 0.0, 128
    %3650 = vxpose.xlu0.b32.cont [7/16] 0.0, 128
    %3651 = vxpose.xlu0.b32.cont [8/16] 0.0, 128
    %3652 = vxpose.xlu0.b32.cont [9/16] 0.0, 128
    %3653 = vxpose.xlu0.b32.cont [10/16] 0.0, 128
    %3654 = vxpose.xlu0.b32.cont [11/16] 0.0, 128
    %3655 = vxpose.xlu0.b32.cont [12/16] 0.0, 128
    %3656 = vxpose.xlu0.b32.cont [13/16] 0.0, 128
    %3657 = vxpose.xlu0.b32.cont [14/16] 0.0, 128
    %3658 = vxpose.xlu0.b32.cont [15/16] 0.0, 128
    %3659 = vxpose.xlu0.b32.end [16/16] 0.0, 128
    %v3660 = vpop.trf.xlu0
    %v3661 = vpop.trf.xlu0
    %v3662 = vpop.trf.xlu0
    %v3663 = vpop.trf.xlu0
    %v3664 = vpop.trf.xlu0
    %v3665 = vpop.trf.xlu0
    %v3666 = vpop.trf.xlu0
    %v3667 = vpop.trf.xlu0
    %v3668 = vpop.trf.xlu0
    %v3669 = vpop.trf.xlu0
    %v3670 = vpop.trf.xlu0
    %v3671 = vpop.trf.xlu0
    %v3672 = vpop.trf.xlu0
    %v3673 = vpop.trf.xlu0
    %v3674 = vpop.trf.xlu0
    %v3675 = vpop.trf.xlu0
    %3676 = vxpose.xlu0.b32.start [1/16] %v3538, 128
    %3677 = vxpose.xlu0.b32.cont [2/16] %v3539, 128
    %3678 = vxpose.xlu0.b32.cont [3/16] %v3540, 128
    %3679 = vxpose.xlu0.b32.cont [4/16] 0.0, 128
    %3680 = vxpose.xlu0.b32.cont [5/16] 0.0, 128
    %3681 = vxpose.xlu0.b32.cont [6/16] 0.0, 128
    %3682 = vxpose.xlu0.b32.cont [7/16] 0.0, 128
    %3683 = vxpose.xlu0.b32.cont [8/16] 0.0, 128
    %3684 = vxpose.xlu0.b32.cont [9/16] 0.0, 128
    %3685 = vxpose.xlu0.b32.cont [10/16] 0.0, 128
    %3686 = vxpose.xlu0.b32.cont [11/16] 0.0, 128
    %3687 = vxpose.xlu0.b32.cont [12/16] 0.0, 128
    %3688 = vxpose.xlu0.b32.cont [13/16] 0.0, 128
    %3689 = vxpose.xlu0.b32.cont [14/16] 0.0, 128
    %3690 = vxpose.xlu0.b32.cont [15/16] 0.0, 128
    %3691 = vxpose.xlu0.b32.end [16/16] 0.0, 128
    %v3692 = vpop.trf.xlu0
    %v3693 = vpop.trf.xlu0
    %v3694 = vpop.trf.xlu0
    %v3695 = vpop.trf.xlu0
    %v3696 = vpop.trf.xlu0
    %v3697 = vpop.trf.xlu0
    %v3698 = vpop.trf.xlu0
    %v3699 = vpop.trf.xlu0
    %v3700 = vpop.trf.xlu0
    %v3701 = vpop.trf.xlu0
    %v3702 = vpop.trf.xlu0
    %v3703 = vpop.trf.xlu0
    %v3704 = vpop.trf.xlu0
    %v3705 = vpop.trf.xlu0
    %v3706 = vpop.trf.xlu0
    %v3707 = vpop.trf.xlu0
    %3708 = vxpose.xlu0.b32.start [1/16] %v3547, 128
    %3709 = vxpose.xlu0.b32.cont [2/16] %v3548, 128
    %3710 = vxpose.xlu0.b32.cont [3/16] %v3549, 128
    %3711 = vxpose.xlu0.b32.cont [4/16] 0.0, 128
    %3712 = vxpose.xlu0.b32.cont [5/16] 0.0, 128
    %3713 = vxpose.xlu0.b32.cont [6/16] 0.0, 128
    %3714 = vxpose.xlu0.b32.cont [7/16] 0.0, 128
    %3715 = vxpose.xlu0.b32.cont [8/16] 0.0, 128
    %3716 = vxpose.xlu0.b32.cont [9/16] 0.0, 128
    %3717 = vxpose.xlu0.b32.cont [10/16] 0.0, 128
    %3718 = vxpose.xlu0.b32.cont [11/16] 0.0, 128
    %3719 = vxpose.xlu0.b32.cont [12/16] 0.0, 128
    %3720 = vxpose.xlu0.b32.cont [13/16] 0.0, 128
    %3721 = vxpose.xlu0.b32.cont [14/16] 0.0, 128
    %3722 = vxpose.xlu0.b32.cont [15/16] 0.0, 128
    %3723 = vxpose.xlu0.b32.end [16/16] 0.0, 128
    %v3724 = vpop.trf.xlu0
    %v3725 = vpop.trf.xlu0
    %v3726 = vpop.trf.xlu0
    %v3727 = vpop.trf.xlu0
    %v3728 = vpop.trf.xlu0
    %v3729 = vpop.trf.xlu0
    %v3730 = vpop.trf.xlu0
    %v3731 = vpop.trf.xlu0
    %v3732 = vpop.trf.xlu0
    %v3733 = vpop.trf.xlu0
    %v3734 = vpop.trf.xlu0
    %v3735 = vpop.trf.xlu0
    %v3736 = vpop.trf.xlu0
    %v3737 = vpop.trf.xlu0
    %v3738 = vpop.trf.xlu0
    %v3739 = vpop.trf.xlu0
    %3740 = vxpose.xlu0.b32.start [1/16] %v3556, 128
    %3741 = vxpose.xlu0.b32.cont [2/16] %v3557, 128
    %3742 = vxpose.xlu0.b32.cont [3/16] %v3558, 128
    %3743 = vxpose.xlu0.b32.cont [4/16] 0.0, 128
    %3744 = vxpose.xlu0.b32.cont [5/16] 0.0, 128
    %3745 = vxpose.xlu0.b32.cont [6/16] 0.0, 128
    %3746 = vxpose.xlu0.b32.cont [7/16] 0.0, 128
    %3747 = vxpose.xlu0.b32.cont [8/16] 0.0, 128
    %3748 = vxpose.xlu0.b32.cont [9/16] 0.0, 128
    %3749 = vxpose.xlu0.b32.cont [10/16] 0.0, 128
    %3750 = vxpose.xlu0.b32.cont [11/16] 0.0, 128
    %3751 = vxpose.xlu0.b32.cont [12/16] 0.0, 128
    %3752 = vxpose.xlu0.b32.cont [13/16] 0.0, 128
    %3753 = vxpose.xlu0.b32.cont [14/16] 0.0, 128
    %3754 = vxpose.xlu0.b32.cont [15/16] 0.0, 128
    %3755 = vxpose.xlu0.b32.end [16/16] 0.0, 128
    %v3756 = vpop.trf.xlu0
    %v3757 = vpop.trf.xlu0
    %v3758 = vpop.trf.xlu0
    %v3759 = vpop.trf.xlu0
    %v3760 = vpop.trf.xlu0
    %v3761 = vpop.trf.xlu0
    %v3762 = vpop.trf.xlu0
    %v3763 = vpop.trf.xlu0
    %v3764 = vpop.trf.xlu0
    %v3765 = vpop.trf.xlu0
    %v3766 = vpop.trf.xlu0
    %v3767 = vpop.trf.xlu0
    %v3768 = vpop.trf.xlu0
    %v3769 = vpop.trf.xlu0
    %v3770 = vpop.trf.xlu0
    %v3771 = vpop.trf.xlu0
    %3772 = vxpose.xlu0.b32.start [1/16] %v3565, 128
    %3773 = vxpose.xlu0.b32.cont [2/16] %v3566, 128
    %3774 = vxpose.xlu0.b32.cont [3/16] %v3567, 128
    %3775 = vxpose.xlu0.b32.cont [4/16] 0.0, 128
    %3776 = vxpose.xlu0.b32.cont [5/16] 0.0, 128
    %3777 = vxpose.xlu0.b32.cont [6/16] 0.0, 128
    %3778 = vxpose.xlu0.b32.cont [7/16] 0.0, 128
    %3779 = vxpose.xlu0.b32.cont [8/16] 0.0, 128
    %3780 = vxpose.xlu0.b32.cont [9/16] 0.0, 128
    %3781 = vxpose.xlu0.b32.cont [10/16] 0.0, 128
    %3782 = vxpose.xlu0.b32.cont [11/16] 0.0, 128
    %3783 = vxpose.xlu0.b32.cont [12/16] 0.0, 128
    %3784 = vxpose.xlu0.b32.cont [13/16] 0.0, 128
    %3785 = vxpose.xlu0.b32.cont [14/16] 0.0, 128
    %3786 = vxpose.xlu0.b32.cont [15/16] 0.0, 128
    %3787 = vxpose.xlu0.b32.end [16/16] 0.0, 128
    %v3788 = vpop.trf.xlu0
    %v3789 = vpop.trf.xlu0
    %v3790 = vpop.trf.xlu0
    %v3791 = vpop.trf.xlu0
    %v3792 = vpop.trf.xlu0
    %v3793 = vpop.trf.xlu0
    %v3794 = vpop.trf.xlu0
    %v3795 = vpop.trf.xlu0
    %v3796 = vpop.trf.xlu0
    %v3797 = vpop.trf.xlu0
    %v3798 = vpop.trf.xlu0
    %v3799 = vpop.trf.xlu0
    %v3800 = vpop.trf.xlu0
    %v3801 = vpop.trf.xlu0
    %v3802 = vpop.trf.xlu0
    %v3803 = vpop.trf.xlu0
    %3804 = vxpose.xlu0.b32.start [1/16] %v3574, 128
    %3805 = vxpose.xlu0.b32.cont [2/16] %v3575, 128
    %3806 = vxpose.xlu0.b32.cont [3/16] %v3576, 128
    %3807 = vxpose.xlu0.b32.cont [4/16] 0.0, 128
    %3808 = vxpose.xlu0.b32.cont [5/16] 0.0, 128
    %3809 = vxpose.xlu0.b32.cont [6/16] 0.0, 128
    %3810 = vxpose.xlu0.b32.cont [7/16] 0.0, 128
    %3811 = vxpose.xlu0.b32.cont [8/16] 0.0, 128
    %3812 = vxpose.xlu0.b32.cont [9/16] 0.0, 128
    %3813 = vxpose.xlu0.b32.cont [10/16] 0.0, 128
    %3814 = vxpose.xlu0.b32.cont [11/16] 0.0, 128
    %3815 = vxpose.xlu0.b32.cont [12/16] 0.0, 128
    %3816 = vxpose.xlu0.b32.cont [13/16] 0.0, 128
    %3817 = vxpose.xlu0.b32.cont [14/16] 0.0, 128
    %3818 = vxpose.xlu0.b32.cont [15/16] 0.0, 128
    %3819 = vxpose.xlu0.b32.end [16/16] 0.0, 128
    %v3820 = vpop.trf.xlu0
    %v3821 = vpop.trf.xlu0
    %v3822 = vpop.trf.xlu0
    %v3823 = vpop.trf.xlu0
    %v3824 = vpop.trf.xlu0
    %v3825 = vpop.trf.xlu0
    %v3826 = vpop.trf.xlu0
    %v3827 = vpop.trf.xlu0
    %v3828 = vpop.trf.xlu0
    %v3829 = vpop.trf.xlu0
    %v3830 = vpop.trf.xlu0
    %v3831 = vpop.trf.xlu0
    %v3832 = vpop.trf.xlu0
    %v3833 = vpop.trf.xlu0
    %v3834 = vpop.trf.xlu0
    %v3835 = vpop.trf.xlu0
    %vm3836 = vcmask 146432
    %v3838 = vsel %vm3836, %v3596, 0
    %v3841 = vsel %vm3836, %v3597, 0
    %v3844 = vsel %vm3836, %v3598, 0
    %v3847 = vsel %vm3836, %v3599, 0
    %v3850 = vsel %vm3836, %v3600, 0
    %v3853 = vsel %vm3836, %v3601, 0
    %v3856 = vsel %vm3836, %v3602, 0
    %v3859 = vsel %vm3836, %v3603, 0
    %v3862 = vsel %vm3836, %v3604, 0
    %v3865 = vsel %vm3836, %v3605, 0
    %v3868 = vsel %vm3836, %v3606, 0
    %v3871 = vsel %vm3836, %v3607, 0
    %v3874 = vsel %vm3836, %v3608, 0
    %v3877 = vsel %vm3836, %v3609, 0
    %v3880 = vsel %vm3836, %v3610, 0
    %v3883 = vsel %vm3836, %v3611, 0
    %v3886 = vsel %vm3836, %v3628, 0
    %v3889 = vsel %vm3836, %v3629, 0
    %v3892 = vsel %vm3836, %v3630, 0
    %v3895 = vsel %vm3836, %v3631, 0
    %v3898 = vsel %vm3836, %v3632, 0
    %v3901 = vsel %vm3836, %v3633, 0
    %v3904 = vsel %vm3836, %v3634, 0
    %v3907 = vsel %vm3836, %v3635, 0
    %v3910 = vsel %vm3836, %v3636, 0
    %v3913 = vsel %vm3836, %v3637, 0
    %v3916 = vsel %vm3836, %v3638, 0
    %v3919 = vsel %vm3836, %v3639, 0
    %v3922 = vsel %vm3836, %v3640, 0
    %v3925 = vsel %vm3836, %v3641, 0
    %v3928 = vsel %vm3836, %v3642, 0
    %v3931 = vsel %vm3836, %v3643, 0
    %v3934 = vsel %vm3836, %v3660, 0
    %v3937 = vsel %vm3836, %v3661, 0
    %v3940 = vsel %vm3836, %v3662, 0
    %v3943 = vsel %vm3836, %v3663, 0
    %v3946 = vsel %vm3836, %v3664, 0
    %v3949 = vsel %vm3836, %v3665, 0
    %v3952 = vsel %vm3836, %v3666, 0
    %v3955 = vsel %vm3836, %v3667, 0
    %v3958 = vsel %vm3836, %v3668, 0
    %v3961 = vsel %vm3836, %v3669, 0
    %v3964 = vsel %vm3836, %v3670, 0
    %v3967 = vsel %vm3836, %v3671, 0
    %v3970 = vsel %vm3836, %v3672, 0
    %v3973 = vsel %vm3836, %v3673, 0
    %v3976 = vsel %vm3836, %v3674, 0
    %v3979 = vsel %vm3836, %v3675, 0
    %v3982 = vsel %vm3836, %v3692, 0
    %v3985 = vsel %vm3836, %v3693, 0
    %v3988 = vsel %vm3836, %v3694, 0
    %v3991 = vsel %vm3836, %v3695, 0
    %v3994 = vsel %vm3836, %v3696, 0
    %v3997 = vsel %vm3836, %v3697, 0
    %v4000 = vsel %vm3836, %v3698, 0
    %v4003 = vsel %vm3836, %v3699, 0
    %v4006 = vsel %vm3836, %v3700, 0
    %v4009 = vsel %vm3836, %v3701, 0
    %v4012 = vsel %vm3836, %v3702, 0
    %v4015 = vsel %vm3836, %v3703, 0
    %v4018 = vsel %vm3836, %v3704, 0
    %v4021 = vsel %vm3836, %v3705, 0
    %v4024 = vsel %vm3836, %v3706, 0
    %v4027 = vsel %vm3836, %v3707, 0
    %v4030 = vsel %vm3836, %v3724, 0
    %v4033 = vsel %vm3836, %v3725, 0
    %v4036 = vsel %vm3836, %v3726, 0
    %v4039 = vsel %vm3836, %v3727, 0
    %v4042 = vsel %vm3836, %v3728, 0
    %v4045 = vsel %vm3836, %v3729, 0
    %v4048 = vsel %vm3836, %v3730, 0
    %v4051 = vsel %vm3836, %v3731, 0
    %v4054 = vsel %vm3836, %v3732, 0
    %v4057 = vsel %vm3836, %v3733, 0
    %v4060 = vsel %vm3836, %v3734, 0
    %v4063 = vsel %vm3836, %v3735, 0
    %v4066 = vsel %vm3836, %v3736, 0
    %v4069 = vsel %vm3836, %v3737, 0
    %v4072 = vsel %vm3836, %v3738, 0
    %v4075 = vsel %vm3836, %v3739, 0
    %v4078 = vsel %vm3836, %v3756, 0
    %v4081 = vsel %vm3836, %v3757, 0
    %v4084 = vsel %vm3836, %v3758, 0
    %v4087 = vsel %vm3836, %v3759, 0
    %v4090 = vsel %vm3836, %v3760, 0
    %v4093 = vsel %vm3836, %v3761, 0
    %v4096 = vsel %vm3836, %v3762, 0
    %v4099 = vsel %vm3836, %v3763, 0
    %v4102 = vsel %vm3836, %v3764, 0
    %v4105 = vsel %vm3836, %v3765, 0
    %v4108 = vsel %vm3836, %v3766, 0
    %v4111 = vsel %vm3836, %v3767, 0
    %v4114 = vsel %vm3836, %v3768, 0
    %v4117 = vsel %vm3836, %v3769, 0
    %v4120 = vsel %vm3836, %v3770, 0
    %v4123 = vsel %vm3836, %v3771, 0
    %v4126 = vsel %vm3836, %v3788, 0
    %v4129 = vsel %vm3836, %v3789, 0
    %v4132 = vsel %vm3836, %v3790, 0
    %v4135 = vsel %vm3836, %v3791, 0
    %v4138 = vsel %vm3836, %v3792, 0
    %v4141 = vsel %vm3836, %v3793, 0
    %v4144 = vsel %vm3836, %v3794, 0
    %v4147 = vsel %vm3836, %v3795, 0
    %v4150 = vsel %vm3836, %v3796, 0
    %v4153 = vsel %vm3836, %v3797, 0
    %v4156 = vsel %vm3836, %v3798, 0
    %v4159 = vsel %vm3836, %v3799, 0
    %v4162 = vsel %vm3836, %v3800, 0
    %v4165 = vsel %vm3836, %v3801, 0
    %v4168 = vsel %vm3836, %v3802, 0
    %v4171 = vsel %vm3836, %v3803, 0
    %v4174 = vsel %vm3836, %v3820, 0
    %v4177 = vsel %vm3836, %v3821, 0
    %v4180 = vsel %vm3836, %v3822, 0
    %v4183 = vsel %vm3836, %v3823, 0
    %v4186 = vsel %vm3836, %v3824, 0
    %v4189 = vsel %vm3836, %v3825, 0
    %v4192 = vsel %vm3836, %v3826, 0
    %v4195 = vsel %vm3836, %v3827, 0
    %v4198 = vsel %vm3836, %v3828, 0
    %v4201 = vsel %vm3836, %v3829, 0
    %v4204 = vsel %vm3836, %v3830, 0
    %v4207 = vsel %vm3836, %v3831, 0
    %v4210 = vsel %vm3836, %v3832, 0
    %v4213 = vsel %vm3836, %v3833, 0
    %v4216 = vsel %vm3836, %v3834, 0
    %v4219 = vsel %vm3836, %v3835, 0
    %vm4221 = vcmask 1041408
    %v4223 = vsel %vm4221, %v3579, 0
    %4225 = vmatprep.subr.mxu0 0.0
    %4226 = vmatpush1.msra.mxu0 0.0
    %4227 = vmatprep.subr.mxu0 0.0
    %4228 = vmatpush1.msra.mxu0 0.0
    %4229 = vmatprep.subr.mxu0 0.0
    %4230 = vmatpush1.msra.mxu0 0.0
    %4231 = vmatprep.subr.mxu0 0.0
    %4232 = vmatpush1.msra.mxu0 0.0
    %4233 = vmatprep.subr.mxu0 0.0
    %4234 = vmatpush1.msra.mxu0 0.0
    %4235 = vmatprep.subr.mxu0 0.0
    %4236 = vmatpush1.msra.mxu0 0.0
    %4237 = vmatprep.subr.mxu0 0.0
    %4238 = vmatpush1.msra.mxu0 0.0
    %4239 = vmatprep.subr.mxu0 0.0
    %4240 = vmatpush1.msra.mxu0 0.0
    %4241 = vmatprep.subr.mxu0 0.0
    %4242 = vmatpush1.msra.mxu0 0.0
    %4243 = vmatprep.subr.mxu0 0.0
    %4244 = vmatpush1.msra.mxu0 0.0
    %4245 = vmatprep.subr.mxu0 0.0
    %4246 = vmatpush1.msra.mxu0 0.0
    %4247 = vmatprep.subr.mxu0 0.0
    %4248 = vmatpush1.msra.mxu0 0.0
    %4249 = vmatprep.subr.mxu0 0.0
    %4250 = vmatpush1.msra.mxu0 0.0
    %4251 = vmatprep.subr.mxu0 0.0
    %4252 = vmatpush1.msra.mxu0 %v4223
    %4253 = vmatprep.subr.mxu0 0.0
    %4254 = vmatpush1.msra.mxu0 %v3578
    %4255 = vmatprep.subr.mxu0 0.0
    %4256 = vmatpush1.msra.mxu0 %v3577
    %4257 = vmatprep.subr.mxu0 0.0
    %4258 = vmatpush2.msra.mxu0 0.0
    %4259 = vmatprep.subr.mxu0 0.0
    %4260 = vmatpush2.msra.mxu0 0.0
    %4261 = vmatprep.subr.mxu0 0.0
    %4262 = vmatpush2.msra.mxu0 0.0
    %4263 = vmatprep.subr.mxu0 0.0
    %4264 = vmatpush2.msra.mxu0 0.0
    %4265 = vmatprep.subr.mxu0 0.0
    %4266 = vmatpush2.msra.mxu0 0.0
    %4267 = vmatprep.subr.mxu0 0.0
    %4268 = vmatpush2.msra.mxu0 0.0
    %4269 = vmatprep.subr.mxu0 0.0
    %4270 = vmatpush2.msra.mxu0 0.0
    %4271 = vmatprep.subr.mxu0 0.0
    %4272 = vmatpush2.msra.mxu0 0.0
    %4273 = vmatprep.subr.mxu0 0.0
    %4274 = vmatpush2.msra.mxu0 0.0
    %4275 = vmatprep.subr.mxu0 0.0
    %4276 = vmatpush2.msra.mxu0 0.0
    %4277 = vmatprep.subr.mxu0 0.0
    %4278 = vmatpush2.msra.mxu0 0.0
    %4279 = vmatprep.subr.mxu0 0.0
    %4280 = vmatpush2.msra.mxu0 0.0
    %4281 = vmatprep.subr.mxu0 0.0
    %4282 = vmatpush2.msra.mxu0 0.0
    %4283 = vmatprep.subr.mxu0 0.0
    %4284 = vmatpush2.msra.mxu0 0.0
    %4285 = vmatprep.subr.mxu0 0.0
    %4286 = vmatpush2.msra.mxu0 0.0
    %4287 = vmatprep.subr.mxu0 0.0
    %4288 = vmatpush2.msra.mxu0 0.0
    %4289 = vmatprep.mubr.f32.mxu0 0.0
    %4290 = vmatmul.mubr.f32.gmra.mxu0 %v3838
    %v4291 = vpop.f32.mrf.mxu0
    %v4292 = vadd.f32 0.0, %v4291
    %v4293 = vpop.f32.mrf.mxu0
    %4294 = vmatprep.mubr.f32.mxu0 0.0
    %4295 = vmatmul.mubr.f32.gmra.mxu0 %v3841
    %v4296 = vpop.f32.mrf.mxu0
    %v4297 = vadd.f32 0.0, %v4296
    %v4298 = vpop.f32.mrf.mxu0
    %4299 = vmatprep.mubr.f32.mxu0 0.0
    %4300 = vmatmul.mubr.f32.gmra.mxu0 %v3844
    %v4301 = vpop.f32.mrf.mxu0
    %v4302 = vadd.f32 0.0, %v4301
    %v4303 = vpop.f32.mrf.mxu0
    %4304 = vmatprep.mubr.f32.mxu0 0.0
    %4305 = vmatmul.mubr.f32.gmra.mxu0 %v3847
    %v4306 = vpop.f32.mrf.mxu0
    %v4307 = vadd.f32 0.0, %v4306
    %v4308 = vpop.f32.mrf.mxu0
    %4309 = vmatprep.mubr.f32.mxu0 0.0
    %4310 = vmatmul.mubr.f32.gmra.mxu0 %v3850
    %v4311 = vpop.f32.mrf.mxu0
    %v4312 = vadd.f32 0.0, %v4311
    %v4313 = vpop.f32.mrf.mxu0
    %4314 = vmatprep.mubr.f32.mxu0 0.0
    %4315 = vmatmul.mubr.f32.gmra.mxu0 %v3853
    %v4316 = vpop.f32.mrf.mxu0
    %v4317 = vadd.f32 0.0, %v4316
    %v4318 = vpop.f32.mrf.mxu0
    %4319 = vmatprep.mubr.f32.mxu0 0.0
    %4320 = vmatmul.mubr.f32.gmra.mxu0 %v3856
    %v4321 = vpop.f32.mrf.mxu0
    %v4322 = vadd.f32 0.0, %v4321
    %v4323 = vpop.f32.mrf.mxu0
    %4324 = vmatprep.mubr.f32.mxu0 0.0
    %4325 = vmatmul.mubr.f32.gmra.mxu0 %v3859
    %v4326 = vpop.f32.mrf.mxu0
    %v4327 = vadd.f32 0.0, %v4326
    %v4328 = vpop.f32.mrf.mxu0
    %4329 = vmatprep.mubr.f32.mxu0 0.0
    %4330 = vmatmul.mubr.f32.gmra.mxu0 %v3862
    %v4331 = vpop.f32.mrf.mxu0
    %v4332 = vadd.f32 0.0, %v4331
    %v4333 = vpop.f32.mrf.mxu0
    %4334 = vmatprep.mubr.f32.mxu0 0.0
    %4335 = vmatmul.mubr.f32.gmra.mxu0 %v3865
    %v4336 = vpop.f32.mrf.mxu0
    %v4337 = vadd.f32 0.0, %v4336
    %v4338 = vpop.f32.mrf.mxu0
    %4339 = vmatprep.mubr.f32.mxu0 0.0
    %4340 = vmatmul.mubr.f32.gmra.mxu0 %v3868
    %v4341 = vpop.f32.mrf.mxu0
    %v4342 = vadd.f32 0.0, %v4341
    %v4343 = vpop.f32.mrf.mxu0
    %4344 = vmatprep.mubr.f32.mxu0 0.0
    %4345 = vmatmul.mubr.f32.gmra.mxu0 %v3871
    %v4346 = vpop.f32.mrf.mxu0
    %v4347 = vadd.f32 0.0, %v4346
    %v4348 = vpop.f32.mrf.mxu0
    %4349 = vmatprep.mubr.f32.mxu0 0.0
    %4350 = vmatmul.mubr.f32.gmra.mxu0 %v3874
    %v4351 = vpop.f32.mrf.mxu0
    %v4352 = vadd.f32 0.0, %v4351
    %v4353 = vpop.f32.mrf.mxu0
    %4354 = vmatprep.mubr.f32.mxu0 0.0
    %4355 = vmatmul.mubr.f32.gmra.mxu0 %v3877
    %v4356 = vpop.f32.mrf.mxu0
    %v4357 = vadd.f32 0.0, %v4356
    %v4358 = vpop.f32.mrf.mxu0
    %4359 = vmatprep.mubr.f32.mxu0 0.0
    %4360 = vmatmul.mubr.f32.gmra.mxu0 %v3880
    %v4361 = vpop.f32.mrf.mxu0
    %v4362 = vadd.f32 0.0, %v4361
    %v4363 = vpop.f32.mrf.mxu0
    %4364 = vmatprep.mubr.f32.mxu0 0.0
    %4365 = vmatmul.mubr.f32.gmra.mxu0 %v3883
    %v4366 = vpop.f32.mrf.mxu0
    %v4367 = vadd.f32 0.0, %v4366
    %v4368 = vpop.f32.mrf.mxu0
    %4369 = vmatprep.mubr.f32.mxu0 0.0
    %4370 = vmatmul.mubr.f32.gmra.mxu0 %v3886
    %v4371 = vpop.f32.mrf.mxu0
    %v4372 = vadd.f32 0.0, %v4371
    %v4373 = vpop.f32.mrf.mxu0
    %4374 = vmatprep.mubr.f32.mxu0 0.0
    %4375 = vmatmul.mubr.f32.gmra.mxu0 %v3889
    %v4376 = vpop.f32.mrf.mxu0
    %v4377 = vadd.f32 0.0, %v4376
    %v4378 = vpop.f32.mrf.mxu0
    %4379 = vmatprep.mubr.f32.mxu0 0.0
    %4380 = vmatmul.mubr.f32.gmra.mxu0 %v3892
    %v4381 = vpop.f32.mrf.mxu0
    %v4382 = vadd.f32 0.0, %v4381
    %v4383 = vpop.f32.mrf.mxu0
    %4384 = vmatprep.mubr.f32.mxu0 0.0
    %4385 = vmatmul.mubr.f32.gmra.mxu0 %v3895
    %v4386 = vpop.f32.mrf.mxu0
    %v4387 = vadd.f32 0.0, %v4386
    %v4388 = vpop.f32.mrf.mxu0
    %4389 = vmatprep.mubr.f32.mxu0 0.0
    %4390 = vmatmul.mubr.f32.gmra.mxu0 %v3898
    %v4391 = vpop.f32.mrf.mxu0
    %v4392 = vadd.f32 0.0, %v4391
    %v4393 = vpop.f32.mrf.mxu0
    %4394 = vmatprep.mubr.f32.mxu0 0.0
    %4395 = vmatmul.mubr.f32.gmra.mxu0 %v3901
    %v4396 = vpop.f32.mrf.mxu0
    %v4397 = vadd.f32 0.0, %v4396
    %v4398 = vpop.f32.mrf.mxu0
    %4399 = vmatprep.mubr.f32.mxu0 0.0
    %4400 = vmatmul.mubr.f32.gmra.mxu0 %v3904
    %v4401 = vpop.f32.mrf.mxu0
    %v4402 = vadd.f32 0.0, %v4401
    %v4403 = vpop.f32.mrf.mxu0
    %4404 = vmatprep.mubr.f32.mxu0 0.0
    %4405 = vmatmul.mubr.f32.gmra.mxu0 %v3907
    %v4406 = vpop.f32.mrf.mxu0
    %v4407 = vadd.f32 0.0, %v4406
    %v4408 = vpop.f32.mrf.mxu0
    %4409 = vmatprep.mubr.f32.mxu0 0.0
    %4410 = vmatmul.mubr.f32.gmra.mxu0 %v3910
    %v4411 = vpop.f32.mrf.mxu0
    %v4412 = vadd.f32 0.0, %v4411
    %v4413 = vpop.f32.mrf.mxu0
    %4414 = vmatprep.mubr.f32.mxu0 0.0
    %4415 = vmatmul.mubr.f32.gmra.mxu0 %v3913
    %v4416 = vpop.f32.mrf.mxu0
    %v4417 = vadd.f32 0.0, %v4416
    %v4418 = vpop.f32.mrf.mxu0
    %4419 = vmatprep.mubr.f32.mxu0 0.0
    %4420 = vmatmul.mubr.f32.gmra.mxu0 %v3916
    %v4421 = vpop.f32.mrf.mxu0
    %v4422 = vadd.f32 0.0, %v4421
    %v4423 = vpop.f32.mrf.mxu0
    %4424 = vmatprep.mubr.f32.mxu0 0.0
    %4425 = vmatmul.mubr.f32.gmra.mxu0 %v3919
    %v4426 = vpop.f32.mrf.mxu0
    %v4427 = vadd.f32 0.0, %v4426
    %v4428 = vpop.f32.mrf.mxu0
    %4429 = vmatprep.mubr.f32.mxu0 0.0
    %4430 = vmatmul.mubr.f32.gmra.mxu0 %v3922
    %v4431 = vpop.f32.mrf.mxu0
    %v4432 = vadd.f32 0.0, %v4431
    %v4433 = vpop.f32.mrf.mxu0
    %4434 = vmatprep.mubr.f32.mxu0 0.0
    %4435 = vmatmul.mubr.f32.gmra.mxu0 %v3925
    %v4436 = vpop.f32.mrf.mxu0
    %v4437 = vadd.f32 0.0, %v4436
    %v4438 = vpop.f32.mrf.mxu0
    %4439 = vmatprep.mubr.f32.mxu0 0.0
    %4440 = vmatmul.mubr.f32.gmra.mxu0 %v3928
    %v4441 = vpop.f32.mrf.mxu0
    %v4442 = vadd.f32 0.0, %v4441
    %v4443 = vpop.f32.mrf.mxu0
    %4444 = vmatprep.mubr.f32.mxu0 0.0
    %4445 = vmatmul.mubr.f32.gmra.mxu0 %v3931
    %v4446 = vpop.f32.mrf.mxu0
    %v4447 = vadd.f32 0.0, %v4446
    %v4448 = vpop.f32.mrf.mxu0
    %4449 = vmatprep.mubr.f32.mxu0 0.0
    %4450 = vmatmul.mubr.f32.gmra.mxu0 %v3934
    %v4451 = vpop.f32.mrf.mxu0
    %v4452 = vadd.f32 0.0, %v4451
    %v4453 = vpop.f32.mrf.mxu0
    %4454 = vmatprep.mubr.f32.mxu0 0.0
    %4455 = vmatmul.mubr.f32.gmra.mxu0 %v3937
    %v4456 = vpop.f32.mrf.mxu0
    %v4457 = vadd.f32 0.0, %v4456
    %v4458 = vpop.f32.mrf.mxu0
    %4459 = vmatprep.mubr.f32.mxu0 0.0
    %4460 = vmatmul.mubr.f32.gmra.mxu0 %v3940
    %v4461 = vpop.f32.mrf.mxu0
    %v4462 = vadd.f32 0.0, %v4461
    %v4463 = vpop.f32.mrf.mxu0
    %4464 = vmatprep.mubr.f32.mxu0 0.0
    %4465 = vmatmul.mubr.f32.gmra.mxu0 %v3943
    %v4466 = vpop.f32.mrf.mxu0
    %v4467 = vadd.f32 0.0, %v4466
    %v4468 = vpop.f32.mrf.mxu0
    %4469 = vmatprep.mubr.f32.mxu0 0.0
    %4470 = vmatmul.mubr.f32.gmra.mxu0 %v3946
    %v4471 = vpop.f32.mrf.mxu0
    %v4472 = vadd.f32 0.0, %v4471
    %v4473 = vpop.f32.mrf.mxu0
    %4474 = vmatprep.mubr.f32.mxu0 0.0
    %4475 = vmatmul.mubr.f32.gmra.mxu0 %v3949
    %v4476 = vpop.f32.mrf.mxu0
    %v4477 = vadd.f32 0.0, %v4476
    %v4478 = vpop.f32.mrf.mxu0
    %4479 = vmatprep.mubr.f32.mxu0 0.0
    %4480 = vmatmul.mubr.f32.gmra.mxu0 %v3952
    %v4481 = vpop.f32.mrf.mxu0
    %v4482 = vadd.f32 0.0, %v4481
    %v4483 = vpop.f32.mrf.mxu0
    %4484 = vmatprep.mubr.f32.mxu0 0.0
    %4485 = vmatmul.mubr.f32.gmra.mxu0 %v3955
    %v4486 = vpop.f32.mrf.mxu0
    %v4487 = vadd.f32 0.0, %v4486
    %v4488 = vpop.f32.mrf.mxu0
    %4489 = vmatprep.mubr.f32.mxu0 0.0
    %4490 = vmatmul.mubr.f32.gmra.mxu0 %v3958
    %v4491 = vpop.f32.mrf.mxu0
    %v4492 = vadd.f32 0.0, %v4491
    %v4493 = vpop.f32.mrf.mxu0
    %4494 = vmatprep.mubr.f32.mxu0 0.0
    %4495 = vmatmul.mubr.f32.gmra.mxu0 %v3961
    %v4496 = vpop.f32.mrf.mxu0
    %v4497 = vadd.f32 0.0, %v4496
    %v4498 = vpop.f32.mrf.mxu0
    %4499 = vmatprep.mubr.f32.mxu0 0.0
    %4500 = vmatmul.mubr.f32.gmra.mxu0 %v3964
    %v4501 = vpop.f32.mrf.mxu0
    %v4502 = vadd.f32 0.0, %v4501
    %v4503 = vpop.f32.mrf.mxu0
    %4504 = vmatprep.mubr.f32.mxu0 0.0
    %4505 = vmatmul.mubr.f32.gmra.mxu0 %v3967
    %v4506 = vpop.f32.mrf.mxu0
    %v4507 = vadd.f32 0.0, %v4506
    %v4508 = vpop.f32.mrf.mxu0
    %4509 = vmatprep.mubr.f32.mxu0 0.0
    %4510 = vmatmul.mubr.f32.gmra.mxu0 %v3970
    %v4511 = vpop.f32.mrf.mxu0
    %v4512 = vadd.f32 0.0, %v4511
    %v4513 = vpop.f32.mrf.mxu0
    %4514 = vmatprep.mubr.f32.mxu0 0.0
    %4515 = vmatmul.mubr.f32.gmra.mxu0 %v3973
    %v4516 = vpop.f32.mrf.mxu0
    %v4517 = vadd.f32 0.0, %v4516
    %v4518 = vpop.f32.mrf.mxu0
    %4519 = vmatprep.mubr.f32.mxu0 0.0
    %4520 = vmatmul.mubr.f32.gmra.mxu0 %v3976
    %v4521 = vpop.f32.mrf.mxu0
    %v4522 = vadd.f32 0.0, %v4521
    %v4523 = vpop.f32.mrf.mxu0
    %4524 = vmatprep.mubr.f32.mxu0 0.0
    %4525 = vmatmul.mubr.f32.gmra.mxu0 %v3979
    %v4526 = vpop.f32.mrf.mxu0
    %v4527 = vadd.f32 0.0, %v4526
    %v4528 = vpop.f32.mrf.mxu0
    %4529 = vmatprep.mubr.f32.mxu0 0.0
    %4530 = vmatmul.mubr.f32.gmra.mxu0 %v3982
    %v4531 = vpop.f32.mrf.mxu0
    %v4532 = vadd.f32 0.0, %v4531
    %v4533 = vpop.f32.mrf.mxu0
    %4534 = vmatprep.mubr.f32.mxu0 0.0
    %4535 = vmatmul.mubr.f32.gmra.mxu0 %v3985
    %v4536 = vpop.f32.mrf.mxu0
    %v4537 = vadd.f32 0.0, %v4536
    %v4538 = vpop.f32.mrf.mxu0
    %4539 = vmatprep.mubr.f32.mxu0 0.0
    %4540 = vmatmul.mubr.f32.gmra.mxu0 %v3988
    %v4541 = vpop.f32.mrf.mxu0
    %v4542 = vadd.f32 0.0, %v4541
    %v4543 = vpop.f32.mrf.mxu0
    %4544 = vmatprep.mubr.f32.mxu0 0.0
    %4545 = vmatmul.mubr.f32.gmra.mxu0 %v3991
    %v4546 = vpop.f32.mrf.mxu0
    %v4547 = vadd.f32 0.0, %v4546
    %v4548 = vpop.f32.mrf.mxu0
    %4549 = vmatprep.mubr.f32.mxu0 0.0
    %4550 = vmatmul.mubr.f32.gmra.mxu0 %v3994
    %v4551 = vpop.f32.mrf.mxu0
    %v4552 = vadd.f32 0.0, %v4551
    %v4553 = vpop.f32.mrf.mxu0
    %4554 = vmatprep.mubr.f32.mxu0 0.0
    %4555 = vmatmul.mubr.f32.gmra.mxu0 %v3997
    %v4556 = vpop.f32.mrf.mxu0
    %v4557 = vadd.f32 0.0, %v4556
    %v4558 = vpop.f32.mrf.mxu0
    %4559 = vmatprep.mubr.f32.mxu0 0.0
    %4560 = vmatmul.mubr.f32.gmra.mxu0 %v4000
    %v4561 = vpop.f32.mrf.mxu0
    %v4562 = vadd.f32 0.0, %v4561
    %v4563 = vpop.f32.mrf.mxu0
    %4564 = vmatprep.mubr.f32.mxu0 0.0
    %4565 = vmatmul.mubr.f32.gmra.mxu0 %v4003
    %v4566 = vpop.f32.mrf.mxu0
    %v4567 = vadd.f32 0.0, %v4566
    %v4568 = vpop.f32.mrf.mxu0
    %4569 = vmatprep.mubr.f32.mxu0 0.0
    %4570 = vmatmul.mubr.f32.gmra.mxu0 %v4006
    %v4571 = vpop.f32.mrf.mxu0
    %v4572 = vadd.f32 0.0, %v4571
    %v4573 = vpop.f32.mrf.mxu0
    %4574 = vmatprep.mubr.f32.mxu0 0.0
    %4575 = vmatmul.mubr.f32.gmra.mxu0 %v4009
    %v4576 = vpop.f32.mrf.mxu0
    %v4577 = vadd.f32 0.0, %v4576
    %v4578 = vpop.f32.mrf.mxu0
    %4579 = vmatprep.mubr.f32.mxu0 0.0
    %4580 = vmatmul.mubr.f32.gmra.mxu0 %v4012
    %v4581 = vpop.f32.mrf.mxu0
    %v4582 = vadd.f32 0.0, %v4581
    %v4583 = vpop.f32.mrf.mxu0
    %4584 = vmatprep.mubr.f32.mxu0 0.0
    %4585 = vmatmul.mubr.f32.gmra.mxu0 %v4015
    %v4586 = vpop.f32.mrf.mxu0
    %v4587 = vadd.f32 0.0, %v4586
    %v4588 = vpop.f32.mrf.mxu0
    %4589 = vmatprep.mubr.f32.mxu0 0.0
    %4590 = vmatmul.mubr.f32.gmra.mxu0 %v4018
    %v4591 = vpop.f32.mrf.mxu0
    %v4592 = vadd.f32 0.0, %v4591
    %v4593 = vpop.f32.mrf.mxu0
    %4594 = vmatprep.mubr.f32.mxu0 0.0
    %4595 = vmatmul.mubr.f32.gmra.mxu0 %v4021
    %v4596 = vpop.f32.mrf.mxu0
    %v4597 = vadd.f32 0.0, %v4596
    %v4598 = vpop.f32.mrf.mxu0
    %4599 = vmatprep.mubr.f32.mxu0 0.0
    %4600 = vmatmul.mubr.f32.gmra.mxu0 %v4024
    %v4601 = vpop.f32.mrf.mxu0
    %v4602 = vadd.f32 0.0, %v4601
    %v4603 = vpop.f32.mrf.mxu0
    %4604 = vmatprep.mubr.f32.mxu0 0.0
    %4605 = vmatmul.mubr.f32.gmra.mxu0 %v4027
    %v4606 = vpop.f32.mrf.mxu0
    %v4607 = vadd.f32 0.0, %v4606
    %v4608 = vpop.f32.mrf.mxu0
    %4609 = vmatprep.mubr.f32.mxu0 0.0
    %4610 = vmatmul.mubr.f32.gmra.mxu0 %v4030
    %v4611 = vpop.f32.mrf.mxu0
    %v4612 = vadd.f32 0.0, %v4611
    %v4613 = vpop.f32.mrf.mxu0
    %4614 = vmatprep.mubr.f32.mxu0 0.0
    %4615 = vmatmul.mubr.f32.gmra.mxu0 %v4033
    %v4616 = vpop.f32.mrf.mxu0
    %v4617 = vadd.f32 0.0, %v4616
    %v4618 = vpop.f32.mrf.mxu0
    %4619 = vmatprep.mubr.f32.mxu0 0.0
    %4620 = vmatmul.mubr.f32.gmra.mxu0 %v4036
    %v4621 = vpop.f32.mrf.mxu0
    %v4622 = vadd.f32 0.0, %v4621
    %v4623 = vpop.f32.mrf.mxu0
    %4624 = vmatprep.mubr.f32.mxu0 0.0
    %4625 = vmatmul.mubr.f32.gmra.mxu0 %v4039
    %v4626 = vpop.f32.mrf.mxu0
    %v4627 = vadd.f32 0.0, %v4626
    %v4628 = vpop.f32.mrf.mxu0
    %4629 = vmatprep.mubr.f32.mxu0 0.0
    %4630 = vmatmul.mubr.f32.gmra.mxu0 %v4042
    %v4631 = vpop.f32.mrf.mxu0
    %v4632 = vadd.f32 0.0, %v4631
    %v4633 = vpop.f32.mrf.mxu0
    %4634 = vmatprep.mubr.f32.mxu0 0.0
    %4635 = vmatmul.mubr.f32.gmra.mxu0 %v4045
    %v4636 = vpop.f32.mrf.mxu0
    %v4637 = vadd.f32 0.0, %v4636
    %v4638 = vpop.f32.mrf.mxu0
    %4639 = vmatprep.mubr.f32.mxu0 0.0
    %4640 = vmatmul.mubr.f32.gmra.mxu0 %v4048
    %v4641 = vpop.f32.mrf.mxu0
    %v4642 = vadd.f32 0.0, %v4641
    %v4643 = vpop.f32.mrf.mxu0
    %4644 = vmatprep.mubr.f32.mxu0 0.0
    %4645 = vmatmul.mubr.f32.gmra.mxu0 %v4051
    %v4646 = vpop.f32.mrf.mxu0
    %v4647 = vadd.f32 0.0, %v4646
    %v4648 = vpop.f32.mrf.mxu0
    %4649 = vmatprep.mubr.f32.mxu0 0.0
    %4650 = vmatmul.mubr.f32.gmra.mxu0 %v4054
    %v4651 = vpop.f32.mrf.mxu0
    %v4652 = vadd.f32 0.0, %v4651
    %v4653 = vpop.f32.mrf.mxu0
    %4654 = vmatprep.mubr.f32.mxu0 0.0
    %4655 = vmatmul.mubr.f32.gmra.mxu0 %v4057
    %v4656 = vpop.f32.mrf.mxu0
    %v4657 = vadd.f32 0.0, %v4656
    %v4658 = vpop.f32.mrf.mxu0
    %4659 = vmatprep.mubr.f32.mxu0 0.0
    %4660 = vmatmul.mubr.f32.gmra.mxu0 %v4060
    %v4661 = vpop.f32.mrf.mxu0
    %v4662 = vadd.f32 0.0, %v4661
    %v4663 = vpop.f32.mrf.mxu0
    %4664 = vmatprep.mubr.f32.mxu0 0.0
    %4665 = vmatmul.mubr.f32.gmra.mxu0 %v4063
    %v4666 = vpop.f32.mrf.mxu0
    %v4667 = vadd.f32 0.0, %v4666
    %v4668 = vpop.f32.mrf.mxu0
    %4669 = vmatprep.mubr.f32.mxu0 0.0
    %4670 = vmatmul.mubr.f32.gmra.mxu0 %v4066
    %v4671 = vpop.f32.mrf.mxu0
    %v4672 = vadd.f32 0.0, %v4671
    %v4673 = vpop.f32.mrf.mxu0
    %4674 = vmatprep.mubr.f32.mxu0 0.0
    %4675 = vmatmul.mubr.f32.gmra.mxu0 %v4069
    %v4676 = vpop.f32.mrf.mxu0
    %v4677 = vadd.f32 0.0, %v4676
    %v4678 = vpop.f32.mrf.mxu0
    %4679 = vmatprep.mubr.f32.mxu0 0.0
    %4680 = vmatmul.mubr.f32.gmra.mxu0 %v4072
    %v4681 = vpop.f32.mrf.mxu0
    %v4682 = vadd.f32 0.0, %v4681
    %v4683 = vpop.f32.mrf.mxu0
    %4684 = vmatprep.mubr.f32.mxu0 0.0
    %4685 = vmatmul.mubr.f32.gmra.mxu0 %v4075
    %v4686 = vpop.f32.mrf.mxu0
    %v4687 = vadd.f32 0.0, %v4686
    %v4688 = vpop.f32.mrf.mxu0
    %4689 = vmatprep.mubr.f32.mxu0 0.0
    %4690 = vmatmul.mubr.f32.gmra.mxu0 %v4078
    %v4691 = vpop.f32.mrf.mxu0
    %v4692 = vadd.f32 0.0, %v4691
    %v4693 = vpop.f32.mrf.mxu0
    %4694 = vmatprep.mubr.f32.mxu0 0.0
    %4695 = vmatmul.mubr.f32.gmra.mxu0 %v4081
    %v4696 = vpop.f32.mrf.mxu0
    %v4697 = vadd.f32 0.0, %v4696
    %v4698 = vpop.f32.mrf.mxu0
    %4699 = vmatprep.mubr.f32.mxu0 0.0
    %4700 = vmatmul.mubr.f32.gmra.mxu0 %v4084
    %v4701 = vpop.f32.mrf.mxu0
    %v4702 = vadd.f32 0.0, %v4701
    %v4703 = vpop.f32.mrf.mxu0
    %4704 = vmatprep.mubr.f32.mxu0 0.0
    %4705 = vmatmul.mubr.f32.gmra.mxu0 %v4087
    %v4706 = vpop.f32.mrf.mxu0
    %v4707 = vadd.f32 0.0, %v4706
    %v4708 = vpop.f32.mrf.mxu0
    %4709 = vmatprep.mubr.f32.mxu0 0.0
    %4710 = vmatmul.mubr.f32.gmra.mxu0 %v4090
    %v4711 = vpop.f32.mrf.mxu0
    %v4712 = vadd.f32 0.0, %v4711
    %v4713 = vpop.f32.mrf.mxu0
    %4714 = vmatprep.mubr.f32.mxu0 0.0
    %4715 = vmatmul.mubr.f32.gmra.mxu0 %v4093
    %v4716 = vpop.f32.mrf.mxu0
    %v4717 = vadd.f32 0.0, %v4716
    %v4718 = vpop.f32.mrf.mxu0
    %4719 = vmatprep.mubr.f32.mxu0 0.0
    %4720 = vmatmul.mubr.f32.gmra.mxu0 %v4096
    %v4721 = vpop.f32.mrf.mxu0
    %v4722 = vadd.f32 0.0, %v4721
    %v4723 = vpop.f32.mrf.mxu0
    %4724 = vmatprep.mubr.f32.mxu0 0.0
    %4725 = vmatmul.mubr.f32.gmra.mxu0 %v4099
    %v4726 = vpop.f32.mrf.mxu0
    %v4727 = vadd.f32 0.0, %v4726
    %v4728 = vpop.f32.mrf.mxu0
    %4729 = vmatprep.mubr.f32.mxu0 0.0
    %4730 = vmatmul.mubr.f32.gmra.mxu0 %v4102
    %v4731 = vpop.f32.mrf.mxu0
    %v4732 = vadd.f32 0.0, %v4731
    %v4733 = vpop.f32.mrf.mxu0
    %4734 = vmatprep.mubr.f32.mxu0 0.0
    %4735 = vmatmul.mubr.f32.gmra.mxu0 %v4105
    %v4736 = vpop.f32.mrf.mxu0
    %v4737 = vadd.f32 0.0, %v4736
    %v4738 = vpop.f32.mrf.mxu0
    %4739 = vmatprep.mubr.f32.mxu0 0.0
    %4740 = vmatmul.mubr.f32.gmra.mxu0 %v4108
    %v4741 = vpop.f32.mrf.mxu0
    %v4742 = vadd.f32 0.0, %v4741
    %v4743 = vpop.f32.mrf.mxu0
    %4744 = vmatprep.mubr.f32.mxu0 0.0
    %4745 = vmatmul.mubr.f32.gmra.mxu0 %v4111
    %v4746 = vpop.f32.mrf.mxu0
    %v4747 = vadd.f32 0.0, %v4746
    %v4748 = vpop.f32.mrf.mxu0
    %4749 = vmatprep.mubr.f32.mxu0 0.0
    %4750 = vmatmul.mubr.f32.gmra.mxu0 %v4114
    %v4751 = vpop.f32.mrf.mxu0
    %v4752 = vadd.f32 0.0, %v4751
    %v4753 = vpop.f32.mrf.mxu0
    %4754 = vmatprep.mubr.f32.mxu0 0.0
    %4755 = vmatmul.mubr.f32.gmra.mxu0 %v4117
    %v4756 = vpop.f32.mrf.mxu0
    %v4757 = vadd.f32 0.0, %v4756
    %v4758 = vpop.f32.mrf.mxu0
    %4759 = vmatprep.mubr.f32.mxu0 0.0
    %4760 = vmatmul.mubr.f32.gmra.mxu0 %v4120
    %v4761 = vpop.f32.mrf.mxu0
    %v4762 = vadd.f32 0.0, %v4761
    %v4763 = vpop.f32.mrf.mxu0
    %4764 = vmatprep.mubr.f32.mxu0 0.0
    %4765 = vmatmul.mubr.f32.gmra.mxu0 %v4123
    %v4766 = vpop.f32.mrf.mxu0
    %v4767 = vadd.f32 0.0, %v4766
    %v4768 = vpop.f32.mrf.mxu0
    %4769 = vmatprep.mubr.f32.mxu0 0.0
    %4770 = vmatmul.mubr.f32.gmra.mxu0 %v4126
    %v4771 = vpop.f32.mrf.mxu0
    %v4772 = vadd.f32 0.0, %v4771
    %v4773 = vpop.f32.mrf.mxu0
    %4774 = vmatprep.mubr.f32.mxu0 0.0
    %4775 = vmatmul.mubr.f32.gmra.mxu0 %v4129
    %v4776 = vpop.f32.mrf.mxu0
    %v4777 = vadd.f32 0.0, %v4776
    %v4778 = vpop.f32.mrf.mxu0
    %4779 = vmatprep.mubr.f32.mxu0 0.0
    %4780 = vmatmul.mubr.f32.gmra.mxu0 %v4132
    %v4781 = vpop.f32.mrf.mxu0
    %v4782 = vadd.f32 0.0, %v4781
    %v4783 = vpop.f32.mrf.mxu0
    %4784 = vmatprep.mubr.f32.mxu0 0.0
    %4785 = vmatmul.mubr.f32.gmra.mxu0 %v4135
    %v4786 = vpop.f32.mrf.mxu0
    %v4787 = vadd.f32 0.0, %v4786
    %v4788 = vpop.f32.mrf.mxu0
    %4789 = vmatprep.mubr.f32.mxu0 0.0
    %4790 = vmatmul.mubr.f32.gmra.mxu0 %v4138
    %v4791 = vpop.f32.mrf.mxu0
    %v4792 = vadd.f32 0.0, %v4791
    %v4793 = vpop.f32.mrf.mxu0
    %4794 = vmatprep.mubr.f32.mxu0 0.0
    %4795 = vmatmul.mubr.f32.gmra.mxu0 %v4141
    %v4796 = vpop.f32.mrf.mxu0
    %v4797 = vadd.f32 0.0, %v4796
    %v4798 = vpop.f32.mrf.mxu0
    %4799 = vmatprep.mubr.f32.mxu0 0.0
    %4800 = vmatmul.mubr.f32.gmra.mxu0 %v4144
    %v4801 = vpop.f32.mrf.mxu0
    %v4802 = vadd.f32 0.0, %v4801
    %v4803 = vpop.f32.mrf.mxu0
    %4804 = vmatprep.mubr.f32.mxu0 0.0
    %4805 = vmatmul.mubr.f32.gmra.mxu0 %v4147
    %v4806 = vpop.f32.mrf.mxu0
    %v4807 = vadd.f32 0.0, %v4806
    %v4808 = vpop.f32.mrf.mxu0
    %4809 = vmatprep.mubr.f32.mxu0 0.0
    %4810 = vmatmul.mubr.f32.gmra.mxu0 %v4150
    %v4811 = vpop.f32.mrf.mxu0
    %v4812 = vadd.f32 0.0, %v4811
    %v4813 = vpop.f32.mrf.mxu0
    %4814 = vmatprep.mubr.f32.mxu0 0.0
    %4815 = vmatmul.mubr.f32.gmra.mxu0 %v4153
    %v4816 = vpop.f32.mrf.mxu0
    %v4817 = vadd.f32 0.0, %v4816
    %v4818 = vpop.f32.mrf.mxu0
    %4819 = vmatprep.mubr.f32.mxu0 0.0
    %4820 = vmatmul.mubr.f32.gmra.mxu0 %v4156
    %v4821 = vpop.f32.mrf.mxu0
    %v4822 = vadd.f32 0.0, %v4821
    %v4823 = vpop.f32.mrf.mxu0
    %4824 = vmatprep.mubr.f32.mxu0 0.0
    %4825 = vmatmul.mubr.f32.gmra.mxu0 %v4159
    %v4826 = vpop.f32.mrf.mxu0
    %v4827 = vadd.f32 0.0, %v4826
    %v4828 = vpop.f32.mrf.mxu0
    %4829 = vmatprep.mubr.f32.mxu0 0.0
    %4830 = vmatmul.mubr.f32.gmra.mxu0 %v4162
    %v4831 = vpop.f32.mrf.mxu0
    %v4832 = vadd.f32 0.0, %v4831
    %v4833 = vpop.f32.mrf.mxu0
    %4834 = vmatprep.mubr.f32.mxu0 0.0
    %4835 = vmatmul.mubr.f32.gmra.mxu0 %v4165
    %v4836 = vpop.f32.mrf.mxu0
    %v4837 = vadd.f32 0.0, %v4836
    %v4838 = vpop.f32.mrf.mxu0
    %4839 = vmatprep.mubr.f32.mxu0 0.0
    %4840 = vmatmul.mubr.f32.gmra.mxu0 %v4168
    %v4841 = vpop.f32.mrf.mxu0
    %v4842 = vadd.f32 0.0, %v4841
    %v4843 = vpop.f32.mrf.mxu0
    %4844 = vmatprep.mubr.f32.mxu0 0.0
    %4845 = vmatmul.mubr.f32.gmra.mxu0 %v4171
    %v4846 = vpop.f32.mrf.mxu0
    %v4847 = vadd.f32 0.0, %v4846
    %v4848 = vpop.f32.mrf.mxu0
    %4849 = vmatprep.mubr.f32.mxu0 0.0
    %4850 = vmatmul.mubr.f32.gmra.mxu0 %v4174
    %v4851 = vpop.f32.mrf.mxu0
    %v4852 = vadd.f32 0.0, %v4851
    %v4853 = vpop.f32.mrf.mxu0
    %4854 = vmatprep.mubr.f32.mxu0 0.0
    %4855 = vmatmul.mubr.f32.gmra.mxu0 %v4177
    %v4856 = vpop.f32.mrf.mxu0
    %v4857 = vadd.f32 0.0, %v4856
    %v4858 = vpop.f32.mrf.mxu0
    %4859 = vmatprep.mubr.f32.mxu0 0.0
    %4860 = vmatmul.mubr.f32.gmra.mxu0 %v4180
    %v4861 = vpop.f32.mrf.mxu0
    %v4862 = vadd.f32 0.0, %v4861
    %v4863 = vpop.f32.mrf.mxu0
    %4864 = vmatprep.mubr.f32.mxu0 0.0
    %4865 = vmatmul.mubr.f32.gmra.mxu0 %v4183
    %v4866 = vpop.f32.mrf.mxu0
    %v4867 = vadd.f32 0.0, %v4866
    %v4868 = vpop.f32.mrf.mxu0
    %4869 = vmatprep.mubr.f32.mxu0 0.0
    %4870 = vmatmul.mubr.f32.gmra.mxu0 %v4186
    %v4871 = vpop.f32.mrf.mxu0
    %v4872 = vadd.f32 0.0, %v4871
    %v4873 = vpop.f32.mrf.mxu0
    %4874 = vmatprep.mubr.f32.mxu0 0.0
    %4875 = vmatmul.mubr.f32.gmra.mxu0 %v4189
    %v4876 = vpop.f32.mrf.mxu0
    %v4877 = vadd.f32 0.0, %v4876
    %v4878 = vpop.f32.mrf.mxu0
    %4879 = vmatprep.mubr.f32.mxu0 0.0
    %4880 = vmatmul.mubr.f32.gmra.mxu0 %v4192
    %v4881 = vpop.f32.mrf.mxu0
    %v4882 = vadd.f32 0.0, %v4881
    %v4883 = vpop.f32.mrf.mxu0
    %4884 = vmatprep.mubr.f32.mxu0 0.0
    %4885 = vmatmul.mubr.f32.gmra.mxu0 %v4195
    %v4886 = vpop.f32.mrf.mxu0
    %v4887 = vadd.f32 0.0, %v4886
    %v4888 = vpop.f32.mrf.mxu0
    %4889 = vmatprep.mubr.f32.mxu0 0.0
    %4890 = vmatmul.mubr.f32.gmra.mxu0 %v4198
    %v4891 = vpop.f32.mrf.mxu0
    %v4892 = vadd.f32 0.0, %v4891
    %v4893 = vpop.f32.mrf.mxu0
    %4894 = vmatprep.mubr.f32.mxu0 0.0
    %4895 = vmatmul.mubr.f32.gmra.mxu0 %v4201
    %v4896 = vpop.f32.mrf.mxu0
    %v4897 = vadd.f32 0.0, %v4896
    %v4898 = vpop.f32.mrf.mxu0
    %4899 = vmatprep.mubr.f32.mxu0 0.0
    %4900 = vmatmul.mubr.f32.gmra.mxu0 %v4204
    %v4901 = vpop.f32.mrf.mxu0
    %v4902 = vadd.f32 0.0, %v4901
    %v4903 = vpop.f32.mrf.mxu0
    %4904 = vmatprep.mubr.f32.mxu0 0.0
    %4905 = vmatmul.mubr.f32.gmra.mxu0 %v4207
    %v4906 = vpop.f32.mrf.mxu0
    %v4907 = vadd.f32 0.0, %v4906
    %v4908 = vpop.f32.mrf.mxu0
    %4909 = vmatprep.mubr.f32.mxu0 0.0
    %4910 = vmatmul.mubr.f32.gmra.mxu0 %v4210
    %v4911 = vpop.f32.mrf.mxu0
    %v4912 = vadd.f32 0.0, %v4911
    %v4913 = vpop.f32.mrf.mxu0
    %4914 = vmatprep.mubr.f32.mxu0 0.0
    %4915 = vmatmul.mubr.f32.gmra.mxu0 %v4213
    %v4916 = vpop.f32.mrf.mxu0
    %v4917 = vadd.f32 0.0, %v4916
    %v4918 = vpop.f32.mrf.mxu0
    %4919 = vmatprep.mubr.f32.mxu0 0.0
    %4920 = vmatmul.mubr.f32.gmra.mxu0 %v4216
    %v4921 = vpop.f32.mrf.mxu0
    %v4922 = vadd.f32 0.0, %v4921
    %v4923 = vpop.f32.mrf.mxu0
    %4924 = vmatprep.mubr.f32.mxu0 0.0
    %4925 = vmatmul.mubr.f32.gmra.mxu0 %v4219
    %v4926 = vpop.f32.mrf.mxu0
    %v4927 = vadd.f32 0.0, %v4926
    %v4928 = vpop.f32.mrf.mxu0
    %4929 = vdwg.mxu0
    %4930 = vst [vmem:[#allocation2] sm:$0xff] %v4292
    %4931 = vst [vmem:[#allocation2 + $0x8] sm:$0xff] %v4297
    %4932 = vst [vmem:[#allocation2 + $0x10] sm:$0xff] %v4302
    %4933 = vst [vmem:[#allocation2 + $0x18] sm:$0xff] %v4307
    %4934 = vst [vmem:[#allocation2 + $0x20] sm:$0xff] %v4312
    %4935 = vst [vmem:[#allocation2 + $0x28] sm:$0xff] %v4317
    %4936 = vst [vmem:[#allocation2 + $0x30] sm:$0xff] %v4322
    %4937 = vst [vmem:[#allocation2 + $0x38] sm:$0xff] %v4327
    %4938 = vst [vmem:[#allocation2 + $0x40] sm:$0xff] %v4332
    %4939 = vst [vmem:[#allocation2 + $0x48] sm:$0xff] %v4337
    %4940 = vst [vmem:[#allocation2 + $0x50] sm:$0xff] %v4342
    %4941 = vst [vmem:[#allocation2 + $0x58] sm:$0xff] %v4347
    %4942 = vst [vmem:[#allocation2 + $0x60] sm:$0xff] %v4352
    %4943 = vst [vmem:[#allocation2 + $0x68] sm:$0xff] %v4357
    %4944 = vst [vmem:[#allocation2 + $0x70] sm:$0xff] %v4362
    %4945 = vst [vmem:[#allocation2 + $0x78] sm:$0xff] %v4367
    %4946 = vst [vmem:[#allocation2 + $0x80] sm:$0xff] %v4372
    %4947 = vst [vmem:[#allocation2 + $0x88] sm:$0xff] %v4377
    %4948 = vst [vmem:[#allocation2 + $0x90] sm:$0xff] %v4382
    %4949 = vst [vmem:[#allocation2 + $0x98] sm:$0xff] %v4387
    %4950 = vst [vmem:[#allocation2 + $0xa0] sm:$0xff] %v4392
    %4951 = vst [vmem:[#allocation2 + $0xa8] sm:$0xff] %v4397
    %4952 = vst [vmem:[#allocation2 + $0xb0] sm:$0xff] %v4402
    %4953 = vst [vmem:[#allocation2 + $0xb8] sm:$0xff] %v4407
    %4954 = vst [vmem:[#allocation2 + $0xc0] sm:$0xff] %v4412
    %4955 = vst [vmem:[#allocation2 + $0xc8] sm:$0xff] %v4417
    %4956 = vst [vmem:[#allocation2 + $0xd0] sm:$0xff] %v4422
    %4957 = vst [vmem:[#allocation2 + $0xd8] sm:$0xff] %v4427
    %4958 = vst [vmem:[#allocation2 + $0xe0] sm:$0xff] %v4432
    %4959 = vst [vmem:[#allocation2 + $0xe8] sm:$0xff] %v4437
    %4960 = vst [vmem:[#allocation2 + $0xf0] sm:$0xff] %v4442
    %4961 = vst [vmem:[#allocation2 + $0xf8] sm:$0xff] %v4447
    %4962 = vst [vmem:[#allocation2 + $0x100] sm:$0xff] %v4452
    %4963 = vst [vmem:[#allocation2 + $0x108] sm:$0xff] %v4457
    %4964 = vst [vmem:[#allocation2 + $0x110] sm:$0xff] %v4462
    %4965 = vst [vmem:[#allocation2 + $0x118] sm:$0xff] %v4467
    %4966 = vst [vmem:[#allocation2 + $0x120] sm:$0xff] %v4472
    %4967 = vst [vmem:[#allocation2 + $0x128] sm:$0xff] %v4477
    %4968 = vst [vmem:[#allocation2 + $0x130] sm:$0xff] %v4482
    %4969 = vst [vmem:[#allocation2 + $0x138] sm:$0xff] %v4487
    %4970 = vst [vmem:[#allocation2 + $0x140] sm:$0xff] %v4492
    %4971 = vst [vmem:[#allocation2 + $0x148] sm:$0xff] %v4497
    %4972 = vst [vmem:[#allocation2 + $0x150] sm:$0xff] %v4502
    %4973 = vst [vmem:[#allocation2 + $0x158] sm:$0xff] %v4507
    %4974 = vst [vmem:[#allocation2 + $0x160] sm:$0xff] %v4512
    %4975 = vst [vmem:[#allocation2 + $0x168] sm:$0xff] %v4517
    %4976 = vst [vmem:[#allocation2 + $0x170] sm:$0xff] %v4522
    %4977 = vst [vmem:[#allocation2 + $0x178] sm:$0xff] %v4527
    %4978 = vst [vmem:[#allocation2 + $0x180] sm:$0xff] %v4532
    %4979 = vst [vmem:[#allocation2 + $0x188] sm:$0xff] %v4537
    %4980 = vst [vmem:[#allocation2 + $0x190] sm:$0xff] %v4542
    %4981 = vst [vmem:[#allocation2 + $0x198] sm:$0xff] %v4547
    %4982 = vst [vmem:[#allocation2 + $0x1a0] sm:$0xff] %v4552
    %4983 = vst [vmem:[#allocation2 + $0x1a8] sm:$0xff] %v4557
    %4984 = vst [vmem:[#allocation2 + $0x1b0] sm:$0xff] %v4562
    %4985 = vst [vmem:[#allocation2 + $0x1b8] sm:$0xff] %v4567
    %4986 = vst [vmem:[#allocation2 + $0x1c0] sm:$0xff] %v4572
    %4987 = vst [vmem:[#allocation2 + $0x1c8] sm:$0xff] %v4577
    %4988 = vst [vmem:[#allocation2 + $0x1d0] sm:$0xff] %v4582
    %4989 = vst [vmem:[#allocation2 + $0x1d8] sm:$0xff] %v4587
    %4990 = vst [vmem:[#allocation2 + $0x1e0] sm:$0xff] %v4592
    %4991 = vst [vmem:[#allocation2 + $0x1e8] sm:$0xff] %v4597
    %4992 = vst [vmem:[#allocation2 + $0x1f0] sm:$0xff] %v4602
    %4993 = vst [vmem:[#allocation2 + $0x1f8] sm:$0xff] %v4607
    %4994 = vst [vmem:[#allocation2 + $0x200] sm:$0xff] %v4612
    %4995 = vst [vmem:[#allocation2 + $0x208] sm:$0xff] %v4617
    %4996 = vst [vmem:[#allocation2 + $0x210] sm:$0xff] %v4622
    %4997 = vst [vmem:[#allocation2 + $0x218] sm:$0xff] %v4627
    %4998 = vst [vmem:[#allocation2 + $0x220] sm:$0xff] %v4632
    %4999 = vst [vmem:[#allocation2 + $0x228] sm:$0xff] %v4637
    %5000 = vst [vmem:[#allocation2 + $0x230] sm:$0xff] %v4642
    %5001 = vst [vmem:[#allocation2 + $0x238] sm:$0xff] %v4647
    %5002 = vst [vmem:[#allocation2 + $0x240] sm:$0xff] %v4652
    %5003 = vst [vmem:[#allocation2 + $0x248] sm:$0xff] %v4657
    %5004 = vst [vmem:[#allocation2 + $0x250] sm:$0xff] %v4662
    %5005 = vst [vmem:[#allocation2 + $0x258] sm:$0xff] %v4667
    %5006 = vst [vmem:[#allocation2 + $0x260] sm:$0xff] %v4672
    %5007 = vst [vmem:[#allocation2 + $0x268] sm:$0xff] %v4677
    %5008 = vst [vmem:[#allocation2 + $0x270] sm:$0xff] %v4682
    %5009 = vst [vmem:[#allocation2 + $0x278] sm:$0xff] %v4687
    %5010 = vst [vmem:[#allocation2 + $0x280] sm:$0xff] %v4692
    %5011 = vst [vmem:[#allocation2 + $0x288] sm:$0xff] %v4697
    %5012 = vst [vmem:[#allocation2 + $0x290] sm:$0xff] %v4702
    %5013 = vst [vmem:[#allocation2 + $0x298] sm:$0xff] %v4707
    %5014 = vst [vmem:[#allocation2 + $0x2a0] sm:$0xff] %v4712
    %5015 = vst [vmem:[#allocation2 + $0x2a8] sm:$0xff] %v4717
    %5016 = vst [vmem:[#allocation2 + $0x2b0] sm:$0xff] %v4722
    %5017 = vst [vmem:[#allocation2 + $0x2b8] sm:$0xff] %v4727
    %5018 = vst [vmem:[#allocation2 + $0x2c0] sm:$0xff] %v4732
    %5019 = vst [vmem:[#allocation2 + $0x2c8] sm:$0xff] %v4737
    %5020 = vst [vmem:[#allocation2 + $0x2d0] sm:$0xff] %v4742
    %5021 = vst [vmem:[#allocation2 + $0x2d8] sm:$0xff] %v4747
    %5022 = vst [vmem:[#allocation2 + $0x2e0] sm:$0xff] %v4752
    %5023 = vst [vmem:[#allocation2 + $0x2e8] sm:$0xff] %v4757
    %5024 = vst [vmem:[#allocation2 + $0x2f0] sm:$0xff] %v4762
    %5025 = vst [vmem:[#allocation2 + $0x2f8] sm:$0xff] %v4767
    %5026 = vst [vmem:[#allocation2 + $0x300] sm:$0xff] %v4772
    %5027 = vst [vmem:[#allocation2 + $0x308] sm:$0xff] %v4777
    %5028 = vst [vmem:[#allocation2 + $0x310] sm:$0xff] %v4782
    %5029 = vst [vmem:[#allocation2 + $0x318] sm:$0xff] %v4787
    %5030 = vst [vmem:[#allocation2 + $0x320] sm:$0xff] %v4792
    %5031 = vst [vmem:[#allocation2 + $0x328] sm:$0xff] %v4797
    %5032 = vst [vmem:[#allocation2 + $0x330] sm:$0xff] %v4802
    %5033 = vst [vmem:[#allocation2 + $0x338] sm:$0xff] %v4807
    %5034 = vst [vmem:[#allocation2 + $0x340] sm:$0xff] %v4812
    %5035 = vst [vmem:[#allocation2 + $0x348] sm:$0xff] %v4817
    %5036 = vst [vmem:[#allocation2 + $0x350] sm:$0xff] %v4822
    %5037 = vst [vmem:[#allocation2 + $0x358] sm:$0xff] %v4827
    %5038 = vst [vmem:[#allocation2 + $0x360] sm:$0xff] %v4832
    %5039 = vst [vmem:[#allocation2 + $0x368] sm:$0xff] %v4837
    %5040 = vst [vmem:[#allocation2 + $0x370] sm:$0xff] %v4842
    %5041 = vst [vmem:[#allocation2 + $0x378] sm:$0xff] %v4847
    %5042 = vst [vmem:[#allocation2 + $0x380] sm:$0xff] %v4852
    %5043 = vst [vmem:[#allocation2 + $0x388] sm:$0xff] %v4857
    %5044 = vst [vmem:[#allocation2 + $0x390] sm:$0xff] %v4862
    %5045 = vst [vmem:[#allocation2 + $0x398] sm:$0xff] %v4867
    %5046 = vst [vmem:[#allocation2 + $0x3a0] sm:$0xff] %v4872
    %5047 = vst [vmem:[#allocation2 + $0x3a8] sm:$0xff] %v4877
    %5048 = vst [vmem:[#allocation2 + $0x3b0] sm:$0xff] %v4882
    %5049 = vst [vmem:[#allocation2 + $0x3b8] sm:$0xff] %v4887
    %5050 = vst [vmem:[#allocation2 + $0x3c0] sm:$0xff] %v4892
    %5051 = vst [vmem:[#allocation2 + $0x3c8] sm:$0xff] %v4897
    %5052 = vst [vmem:[#allocation2 + $0x3d0] sm:$0xff] %v4902
    %5053 = vst [vmem:[#allocation2 + $0x3d8] sm:$0xff] %v4907
    %5054 = vst [vmem:[#allocation2 + $0x3e0] sm:$0xff] %v4912
    %5055 = vst [vmem:[#allocation2 + $0x3e8] sm:$0xff] %v4917
    %5056 = vst [vmem:[#allocation2 + $0x3f0] sm:$0xff] %v4922
    %5057 = vst [vmem:[#allocation2 + $0x3f8] sm:$0xff] %v4927
    // Predicated region
    $region14: #{tpu_custom_call.1} parent=1 // pred_check
      _
    $region15: #{tpu_custom_call.1} parent=1 // pred_check_branch
      %5059 = sbr.rel (0) target = $region17
    $region16: #{tpu_custom_call.1} parent=1 // pred_region
      %s5061 = ssub.s32 16384, 16384
      %5062 = vsyncadd [#allocation3], %s5061
      %s5063 = sshll.u32 [#allocation2], 4
      %s5064 = int_to_ptr.vmem [resolvable:$true] %s5063
      %5069 = dma.vmem_to_hbm [thread:$0]  %s5064, 16384, %s3, [#allocation3], 128, 128, 8
    $region17: #{tpu_custom_call.1} parent=1 // pred_fallthru
      _
    // Predicated region
    $region18: #{tpu_custom_call.1} parent=1 // pred_check
      _
    $region19: #{tpu_custom_call.1} parent=1 // pred_check_branch
      %5071 = sbr.rel (0) target = $region21
    $region20: #{tpu_custom_call.1} parent=1 // pred_region
      %5072 = dma.done [#allocation3], 16384
    $region21: #{tpu_custom_call.1} parent=1 // pred_fallthru
      _
    %5073 = vsyncpa [#allocation3], 1

</llo_original>
